<compile_context>
chip_gen: v5e
topology: v5e:2x2
jax: 0.10.0
libtpu: 0.0.40
codegen_flags: <defaults>
</compile_context>

<pallas_src>
import jax
import jax.numpy as jnp
from jax.experimental import pallas as pl
from jax.experimental.pallas import tpu as pltpu


_REP = 6                      # stack x3 then cat x2 -> 6 identical copies
_OUT_F = 2                    # features per copy
_OUT_LANES = _REP * _OUT_F    # 12 lanes written per row by the kernel


def _fused_kernel(x_ref, wb_ref, o_ref):
    # x_ref:  (TB, 2)  VMEM input rows
    # wb_ref: (6,)     SMEM scalars  [W00, W01, W10, W11, b0, b1]  (y = x @ W + b)
    # o_ref:  (TB, 12) VMEM output:  o[:, 2*i + j] = y[:, j]  (6x replication fused)
    x = x_ref[...]
    x0 = x[:, 0:1]                                     # (TB, 1)
    x1 = x[:, 1:2]                                     # (TB, 1)

    # Build (1, 12) lane-constant weight/bias rows from SMEM scalars.
    # Scalar -> vreg broadcast is free; done once per grid step.
    lane = jax.lax.broadcasted_iota(jnp.int32, (1, _OUT_LANES), 1)
    even = (lane % 2) == 0
    w0_row = jnp.where(even, wb_ref[0], wb_ref[1])     # W[0, j] pattern
    w1_row = jnp.where(even, wb_ref[2], wb_ref[3])     # W[1, j] pattern
    b_row = jnp.where(even, wb_ref[4], wb_ref[5])      # b[j]    pattern

    # Pure-VPU broadcast multiply-add; replication is part of the single store.
    o_ref[...] = (x0 * w0_row + x1 * w1_row + b_row).astype(o_ref.dtype)


def _round_up(n, m):
    return ((n + m - 1) // m) * m


def model_forward(x, w_f, b_f, w_j, b_j, *, min_pallas_batch=1024):
    """x: (B, 2) f32.  w_*: (out, in) torch-Linear layout.  Returns (B, 6, 2)."""
    B = x.shape[0]

    # Fold the two serial Linears (exact):
    #   y = (x @ w_f.T + b_f) @ w_j.T + b_j = x @ (w_f.T @ w_j.T) + (b_f @ w_j.T + b_j)
    w_comb = (w_f.T @ w_j.T).astype(jnp.float32)       # (2, 2)
    b_comb = (b_f @ w_j.T + b_j).astype(jnp.float32)   # (2,)

    # Fast path: below a custom-call-worthwhile batch size, plain XLA is faster
    # (8 FLOPs/row; the pallas_call boundary would dominate).
    if B < min_pallas_batch:
        y = x.astype(jnp.float32) @ w_comb + b_comb
        return jnp.broadcast_to(y[:, None, :], (B, _REP, _OUT_F)).astype(x.dtype)

    # 6 folded scalars, row-major: [W00, W01, W10, W11, b0, b1] -> SMEM.
    wb = jnp.concatenate([w_comb.reshape(-1), b_comb.reshape(-1)]).astype(jnp.float32)

    # Batch tile: multiple of 8 sublanes, capped so (a) double-buffered lane-padded
    # tiles stay ~8 MiB (fits every generation's scoped-VMEM default) and
    # (b) the grid has >= 2 steps so the parallel axis can use both v7x cores.
    max_tb = 4096
    TB = max(8, min(max_tb, _round_up(-(-B // 2), 8)))
    grid = (pl.cdiv(B, TB),)

    out_flat = pl.pallas_call(
        _fused_kernel,
        out_shape=jax.ShapeDtypeStruct((B, _OUT_LANES), jnp.float32),
        grid=grid,
        in_specs=[
            pl.BlockSpec((TB, 2), lambda i: (i, 0)),                 # x rows (VMEM)
            pl.BlockSpec(memory_space=pltpu.MemorySpace.SMEM),       # folded scalars
        ],
        out_specs=pl.BlockSpec((TB, _OUT_LANES), lambda i: (i, 0)),
        compiler_params=pltpu.CompilerParams(
            dimension_semantics=("parallel",),
        ),
        cost_estimate=pl.CostEstimate(
            flops=4 * _OUT_LANES * B,                  # 12 outputs * (2 mul + 2 add)
            transcendentals=0,
            bytes_accessed=(2 + _OUT_LANES) * 4 * B + 32,   # ~56 B/row in+out
        ),
    )(x.astype(jnp.float32), wb)

    # (B, 12) -> (B, 6, 2): free contiguous reshape (no data movement).
    return out_flat.reshape(B, _REP, _OUT_F).astype(x.dtype)


if __name__ == "__main__":
    key = jax.random.PRNGKey(0)
    kx1, kx2, kwf, kbf, kwj, kbj = jax.random.split(key, 6)

    # Deterministic parameter init mirroring nn.Linear(2, 2) shapes.
    bound = 1.0 / (2.0 ** 0.5)
    w_f = jax.random.uniform(kwf, (2, 2), jnp.float32, -bound, bound)
    b_f = jax.random.uniform(kbf, (2,), jnp.float32, -bound, bound)
    w_j = jax.random.uniform(kwj, (2, 2), jnp.float32, -bound, bound)
    b_j = jax.random.uniform(kbj, (2,), jnp.float32, -bound, bound)

    def reference(xin):
        y = (xin @ w_f.T + b_f) @ w_j.T + b_j
        return jnp.concatenate([jnp.stack((y, y, y), axis=1)] * 2, axis=1)

    # Small batch (matches the tiny module usage) -> XLA fast path.
    x_small = jax.random.normal(kx1, (4, 2), jnp.float32)
    out_small = jax.block_until_ready(model_forward(x_small, w_f, b_f, w_j, b_j))
    assert out_small.shape == (4, 6, 2), out_small.shape
    assert jnp.allclose(out_small, reference(x_small), atol=1e-5), "small-batch mismatch"

    # Larger batch -> Pallas path (grid of 2 parallel tiles of 2048 rows each).
    B = 4096
    x_big = jax.random.normal(kx2, (B, 2), jnp.float32)
    out_big = jax.block_until_ready(model_forward(x_big, w_f, b_f, w_j, b_j))
    assert out_big.shape == (B, 6, 2), out_big.shape
    assert jnp.allclose(out_big, reference(x_big), atol=1e-5), "pallas-path mismatch"

    print("KERNEL_OK")
</pallas_src>

<mosaic_0001>
module attributes {stable_mosaic.version = 11 : i64} {
  func.func @_fused_kernel(%arg0: i32, %arg1: memref<2048x2xf32, #tpu.memory_space<vmem>>, %arg2: memref<6xf32, #tpu.memory_space<smem>>, %arg3: memref<2048x12xf32, #tpu.memory_space<vmem>>) attributes {dimension_semantics = [#tpu.dimension_semantics<parallel>], iteration_bounds = array<i64: 2>, scalar_prefetch = 0 : i64, scratch_operands = 0 : i64, tpu.core_type = #tpu.core_type<tc>, window_params = [{transform_indices = @transform_0, window_bounds = array<i64: 2048, 2>}, {transform_indices = @transform_1, window_bounds = array<i64: 6>}, {transform_indices = @transform_2, window_bounds = array<i64: 2048, 12>}]} {
    %c0 = arith.constant 0 : index
    %c0_0 = arith.constant 0 : index
    %0 = vector.load %arg1[%c0, %c0_0] : memref<2048x2xf32, #tpu.memory_space<vmem>>, vector<2048x2xf32>
    %1 = vector.extract_strided_slice %0 {offsets = [0, 0], sizes = [2048, 1], strides = [1, 1]} : vector<2048x2xf32> to vector<2048x1xf32>
    %2 = vector.extract_strided_slice %0 {offsets = [0, 1], sizes = [2048, 1], strides = [1, 1]} : vector<2048x2xf32> to vector<2048x1xf32>
    %3 = tpu.iota {dimensions = array<i32: 1>} : vector<1x12xi32>
    %c2_i32 = arith.constant 2 : i32
    %c0_i32 = arith.constant 0 : i32
    %4 = arith.cmpi eq, %c2_i32, %c0_i32 : i32
    %c1_i32 = arith.constant 1 : i32
    %5 = arith.select %4, %c1_i32, %c2_i32 : i32
    %6 = vector.broadcast %5 : i32 to vector<1x12xi32>
    %7 = arith.remsi %3, %6 : vector<1x12xi32>
    %c0_i32_1 = arith.constant 0 : i32
    %8 = vector.broadcast %c0_i32_1 : i32 to vector<1x12xi32>
    %9 = arith.cmpi ne, %7, %8 : vector<1x12xi32>
    %c0_i32_2 = arith.constant 0 : i32
    %10 = vector.broadcast %c0_i32_2 : i32 to vector<1x12xi32>
    %11 = arith.cmpi slt, %7, %10 : vector<1x12xi32>
    %c0_i32_3 = arith.constant 0 : i32
    %12 = arith.cmpi slt, %5, %c0_i32_3 : i32
    %13 = vector.broadcast %12 : i1 to vector<1x12xi1>
    %14 = vector.broadcast %13 : vector<1x12xi1> to vector<1x12xi1>
    %15 = arith.xori %11, %14 : vector<1x12xi1>
    %16 = arith.andi %15, %9 : vector<1x12xi1>
    %17 = vector.broadcast %5 : i32 to vector<1x12xi32>
    %18 = arith.addi %7, %17 : vector<1x12xi32>
    %19 = arith.select %16, %18, %7 : vector<1x12xi1>, vector<1x12xi32>
    %c0_i32_4 = arith.constant 0 : i32
    %20 = vector.broadcast %c0_i32_4 : i32 to vector<1x12xi32>
    %21 = arith.cmpi eq, %19, %20 : vector<1x12xi32>
    %c0_5 = arith.constant 0 : index
    %22 = memref.load %arg2[%c0_5] : memref<6xf32, #tpu.memory_space<smem>>
    %c1 = arith.constant 1 : index
    %23 = memref.load %arg2[%c1] : memref<6xf32, #tpu.memory_space<smem>>
    %24 = vector.broadcast %22 : f32 to vector<1x12xf32>
    %25 = vector.broadcast %23 : f32 to vector<1x12xf32>
    %26 = arith.select %21, %24, %25 : vector<1x12xi1>, vector<1x12xf32>
    %c2 = arith.constant 2 : index
    %27 = memref.load %arg2[%c2] : memref<6xf32, #tpu.memory_space<smem>>
    %c3 = arith.constant 3 : index
    %28 = memref.load %arg2[%c3] : memref<6xf32, #tpu.memory_space<smem>>
    %29 = vector.broadcast %27 : f32 to vector<1x12xf32>
    %30 = vector.broadcast %28 : f32 to vector<1x12xf32>
    %31 = arith.select %21, %29, %30 : vector<1x12xi1>, vector<1x12xf32>
    %c4 = arith.constant 4 : index
    %32 = memref.load %arg2[%c4] : memref<6xf32, #tpu.memory_space<smem>>
    %c5 = arith.constant 5 : index
    %33 = memref.load %arg2[%c5] : memref<6xf32, #tpu.memory_space<smem>>
    %34 = vector.broadcast %32 : f32 to vector<1x12xf32>
    %35 = vector.broadcast %33 : f32 to vector<1x12xf32>
    %36 = arith.select %21, %34, %35 : vector<1x12xi1>, vector<1x12xf32>
    %37 = vector.broadcast %1 : vector<2048x1xf32> to vector<2048x12xf32>
    %38 = vector.broadcast %26 : vector<1x12xf32> to vector<2048x12xf32>
    %39 = arith.mulf %37, %38 : vector<2048x12xf32>
    %40 = vector.broadcast %2 : vector<2048x1xf32> to vector<2048x12xf32>
    %41 = vector.broadcast %31 : vector<1x12xf32> to vector<2048x12xf32>
    %42 = arith.mulf %40, %41 : vector<2048x12xf32>
    %43 = arith.addf %39, %42 : vector<2048x12xf32>
    %44 = vector.broadcast %36 : vector<1x12xf32> to vector<2048x12xf32>
    %45 = arith.addf %43, %44 : vector<2048x12xf32>
    %c0_6 = arith.constant 0 : index
    %c0_7 = arith.constant 0 : index
    %46 = vector.load %arg3[%c0_6, %c0_7] : memref<2048x12xf32, #tpu.memory_space<vmem>>, vector<2048x12xf32>
    tpu.vector_store %arg3[%c0_6, %c0_7], %45 {strides = array<i32>} : memref<2048x12xf32, #tpu.memory_space<vmem>>, vector<2048x12xf32>,
    return
  }
  func.func @transform_0(%arg0: i32) -> (i32, i32) {
    %c0_i32 = arith.constant 0 : i32
    %c0_i32_0 = arith.constant 0 : i32
    return %arg0, %c0_i32 : i32, i32
  }
  func.func @transform_1(%arg0: i32) -> i32 {
    %c0_i32 = arith.constant 0 : i32
    %c0_i32_0 = arith.constant 0 : i32
    return %c0_i32 : i32
  }
  func.func @transform_2(%arg0: i32) -> (i32, i32) {
    %c0_i32 = arith.constant 0 : i32
    %c0_i32_0 = arith.constant 0 : i32
    return %arg0, %c0_i32 : i32, i32
  }
}

</mosaic_0001>

<llo_original>
// kernel: tpu_custom_call.1
$region0: #{tpu_custom_call.1}
  #allocation0 [shape = 'u32[]', space=smem, size = 0x4, offset = 0x4, fixed_abs, tag = 'smem constant byte address 0x4 - core index']
  #allocation1 [shape = 'u32[72,128]{1,0:T(1,128)}', space=vmem, size = 0x9000, scoped, tag = 'internal scratch']
  %s0 = inlined_call_operand.vmem [shape: f32[4096,2], index: 0, kind: input, shape index: {}]
  %s1 = inlined_call_operand.vmem [shape: f32[6], index: 1, kind: input, shape index: {}]
  %s2 = inlined_call_operand.vmem [shape: f32[4096,12], index: 2, kind: output, shape index: {}]
  %s3 = sld [smem:[#allocation0]]
  $region45: #{tpu_custom_call.1} parent=0
    _
  %s5 = ssub.s32 1, %s3
  %s6 = scalar_select 0, %s5, %s3
  $region1: #{tpu_custom_call.1} parent=0
    #allocation2 [shape = 'u8[512]{0}', space=smem, size = 0x200, scoped, tag = 'input window, operand 1, single buffered']
    #allocation3 [shape = 's32[2]{0}', space=sflag, size = 0x8, scoped, tag = 'scoped memory for tpu_custom_call.1']
    %7 = vsyncpa [#allocation3], 0
    loop: start=0, step=1, limit=4
    $region2: #{tpu_custom_call.1} parent=1 // loop_pre_header
      _
    $region3: #{tpu_custom_call.1} parent=1 // loop_header
      %s9 = sphi 0, %s13
      %p10 = scmp.ge.s32.totalorder %s9, 4
      %s19 = sphi 0, %s21
      %s22 = sphi 0, %s19
      %s23 = sphi 0, %s22
      %s39 = sphi 0, %s23
      %s43 = sphi 0, %s43
      %s45 = sphi 0, %s43
      %s46 = sphi 0, %s45
      %s60 = sphi 0, %s46
      %s66 = sphi 0, %s68
      %s69 = sphi 0, %s66
      %s70 = sphi 0, %s69
      %s86 = sphi 0, %s70
    $region4: #{tpu_custom_call.1} parent=1 // loop_header_branch
      %12 = sbr.rel (%p10) target = $region8
    $region5: #{tpu_custom_call.1} parent=1 // loop_body
      %s14 = ssub.s32 %s9, 1
      %s15 = ssub.s32 %s9, 2
      %s16 = sadd.s32 %s9, 1
      %s17 = ssub.s32 %s9, %s16
      %p18 = scmp.eq.s32.totalorder %s17, 0
      %s20 = sadd.s32 %s19, 1
      %s21 = scalar_select %p18, %s19, %s20
      %p24 = pneg %p18
      %p25 = scmp.eq.s32.totalorder %s9, 1
      %p26 = por %p24, %p25
      %p27 = scmp.ne.s32.totalorder %s19, %s22
      %p28 = scmp.eq.s32.totalorder %s9, 0
      %p29 = por %p27, %p28
      %p30 = scmp.ne.s32.totalorder %s19, %s22
      %p31 = scmp.eq.s32.totalorder %s14, 1
      %p32 = por %p30, %p31
      %p33 = scmp.ne.s32.totalorder %s22, %s23
      %p34 = scmp.eq.s32.totalorder %s14, 0
      %p35 = por %p33, %p34
      %p36 = scmp.ne.s32.totalorder %s22, %s23
      %p37 = scmp.eq.s32.totalorder %s15, 1
      %p38 = por %p36, %p37
      %p40 = scmp.ne.s32.totalorder %s23, %s39
      %p41 = scmp.eq.s32.totalorder %s15, 0
      %p42 = por %p40, %p41
      %s44 = sadd.s32 %s43, 1
      %p47 = scmp.eq.s32.totalorder %s9, 1
      %p48 = scmp.ne.s32.totalorder %s43, %s45
      %p49 = scmp.eq.s32.totalorder %s9, 0
      %p50 = por %p48, %p49
      %p51 = scmp.ne.s32.totalorder %s43, %s45
      %p52 = scmp.eq.s32.totalorder %s14, 1
      %p53 = por %p51, %p52
      %p54 = scmp.ne.s32.totalorder %s45, %s46
      %p55 = scmp.eq.s32.totalorder %s14, 0
      %p56 = por %p54, %p55
      %p57 = scmp.ne.s32.totalorder %s45, %s46
      %p58 = scmp.eq.s32.totalorder %s15, 1
      %p59 = por %p57, %p58
      %p61 = scmp.ne.s32.totalorder %s46, %s60
      %p62 = scmp.eq.s32.totalorder %s15, 0
      %p63 = por %p61, %p62
      %s64 = ssub.s32 %s9, %s16
      %p65 = scmp.eq.s32.totalorder %s64, 0
      %s67 = sadd.s32 %s66, 1
      %s68 = scalar_select %p65, %s66, %s67
      %p71 = pneg %p65
      %p72 = scmp.eq.s32.totalorder %s9, 1
      %p73 = por %p71, %p72
      %p74 = scmp.ne.s32.totalorder %s66, %s69
      %p75 = scmp.eq.s32.totalorder %s9, 0
      %p76 = por %p74, %p75
      %p77 = scmp.ne.s32.totalorder %s66, %s69
      %p78 = scmp.eq.s32.totalorder %s14, 1
      %p79 = por %p77, %p78
      %p80 = scmp.ne.s32.totalorder %s69, %s70
      %p81 = scmp.eq.s32.totalorder %s14, 0
      %p82 = por %p80, %p81
      %p83 = scmp.ne.s32.totalorder %s69, %s70
      %p84 = scmp.eq.s32.totalorder %s15, 1
      %p85 = por %p83, %p84
      %p87 = scmp.ne.s32.totalorder %s70, %s86
      %p88 = scmp.eq.s32.totalorder %s15, 0
      %p89 = por %p87, %p88
      %p90 = scmp.le.s32.totalorder 1, %s9
      %p91 = scmp.lt.s32.totalorder %s9, 3
      %p92 = pnand %p90, %p91
      %p93 = pneg %p92
      // Predicated region
      $region9: #{tpu_custom_call.1} parent=5 // pred_check
        _
      $region10: #{tpu_custom_call.1} parent=5 // pred_check_branch
        %95 = sbr.rel (%p92) target = $region12
      $region11: #{tpu_custom_call.1} parent=5 // pred_region
        %s96 = ssub.s32 %s9, 1
        // Predicated region
        $region13: #{tpu_custom_call.1} parent=11 // pred_check
          %p97 = pneg %p56
        $region14: #{tpu_custom_call.1} parent=11 // pred_check_branch
          %99 = sbr.rel (%p97) target = $region16
        $region15: #{tpu_custom_call.1} parent=11 // pred_region
          %101 = vsyncadd [#allocation3], 0
          %s103 = sshll.u32 %s1, 4
          %s104 = int_to_ptr.vmem [resolvable:$true] %s103
          %106 = dma.vmem_to_smem %s104, 16, [#allocation2], [#allocation3]
        $region16: #{tpu_custom_call.1} parent=11 // pred_fallthru
          _
      $region12: #{tpu_custom_call.1} parent=5 // pred_fallthru
        _
      %p107 = scmp.lt.s32.totalorder %s9, 2
      // Predicated region
      $region17: #{tpu_custom_call.1} parent=5 // pred_check
        %p108 = pneg %p107
      $region18: #{tpu_custom_call.1} parent=5 // pred_check_branch
        %110 = sbr.rel (%p108) target = $region20
      $region19: #{tpu_custom_call.1} parent=5 // pred_region
        // Predicated region
        $region21: #{tpu_custom_call.1} parent=19 // pred_check
          %p111 = pneg %p29
        $region22: #{tpu_custom_call.1} parent=19 // pred_check_branch
          %113 = sbr.rel (%p111) target = $region24
        $region23: #{tpu_custom_call.1} parent=19 // pred_region
          %s114 = smul.u32 256, %s9
          %p115 = scmp.lt.s32.totalorder %s114, 511
          %s116 = scalar_select %p115, %s114, 511
          %s117 = smul.addr %s116, 8
          %s118 = scalar_lea.vmem %s0, %s117
          %s119 = smul.u32 256, %s9
        $region24: #{tpu_custom_call.1} parent=19 // pred_fallthru
          _
      $region20: #{tpu_custom_call.1} parent=5 // pred_fallthru
        _
      %p120 = scmp.le.s32.totalorder 1, %s9
      %p121 = scmp.lt.s32.totalorder %s9, 3
      %p122 = pnand %p120, %p121
      %p123 = pneg %p122
      // Predicated region
      $region25: #{tpu_custom_call.1} parent=5 // pred_check
        _
      $region26: #{tpu_custom_call.1} parent=5 // pred_check_branch
        %125 = sbr.rel (%p122) target = $region28
      $region27: #{tpu_custom_call.1} parent=5 // pred_region
        %s126 = ssub.s32 %s9, 1
        // Predicated region
        $region29: #{tpu_custom_call.1} parent=27 // pred_check
          %p127 = pneg %p56
        $region30: #{tpu_custom_call.1} parent=27 // pred_check_branch
          %129 = sbr.rel (%p127) target = $region32
        $region31: #{tpu_custom_call.1} parent=27 // pred_region
          %131 = dma.done [#allocation3], 16
        $region32: #{tpu_custom_call.1} parent=27 // pred_fallthru
          _
        %132 = sfence
        %s133 = smul.u32 256, %s14
        %p134 = scmp.lt.s32.totalorder %s133, 511
        %s135 = scalar_select %p134, %s133, 511
        %s136 = smul.addr %s135, 8
        %s137 = scalar_lea.vmem %s0, %s136
        %p138 = pneg %p35
        %p139 = pneg %p32
        %p140 = pneg %p56
        %p141 = pneg %p53
        %p142 = pneg %p82
        %p143 = pneg %p79
        %s144 = smul.u32 256, %s14
        %p145 = scmp.lt.s32.totalorder %s144, 511
        %s146 = scalar_select %p145, %s144, 511
        %s147 = smul.addr %s146, 8
        %s148 = scalar_lea.vmem %s2, %s147
        %s149 = smul.u32 256, %s14
        %p150 = scmp.lt.s32.totalorder %s149, 511
        %s151 = scalar_select %p150, %s149, 511
        %s152 = smul.addr %s151, 8
        %s153 = scalar_lea.vmem %s0, %s152
        %s154 = smul.u32 256, %s14
        %s155 = smul.u32 256, %s14
        %p156 = scmp.lt.s32.totalorder %s155, 511
        %s157 = scalar_select %p156, %s155, 511
        %s158 = smul.addr %s157, 8
        %s159 = scalar_lea.vmem %s2, %s158
        %s160 = smul.u32 256, %s14
        %v161 = vld [vmem:[%s153] sm:$0xff]
        %v162 = vld [vmem:[%s153 + $0x8] sm:$0xff]
        %v163 = vld [vmem:[%s153 + $0x10] sm:$0xff]
        %v164 = vld [vmem:[%s153 + $0x18] sm:$0xff]
        %v165 = vld [vmem:[%s153 + $0x20] sm:$0xff]
        %v166 = vld [vmem:[%s153 + $0x28] sm:$0xff]
        %v167 = vld [vmem:[%s153 + $0x30] sm:$0xff]
        %v168 = vld [vmem:[%s153 + $0x38] sm:$0xff]
        %v169 = vld [vmem:[%s153 + $0x40] sm:$0xff]
        %v170 = vld [vmem:[%s153 + $0x48] sm:$0xff]
        %v171 = vld [vmem:[%s153 + $0x50] sm:$0xff]
        %v172 = vld [vmem:[%s153 + $0x58] sm:$0xff]
        %v173 = vld [vmem:[%s153 + $0x60] sm:$0xff]
        %v174 = vld [vmem:[%s153 + $0x68] sm:$0xff]
        %v175 = vld [vmem:[%s153 + $0x70] sm:$0xff]
        %v176 = vld [vmem:[%s153 + $0x78] sm:$0xff]
        %v177 = vld [vmem:[%s153 + $0x80] sm:$0xff]
        %v178 = vld [vmem:[%s153 + $0x88] sm:$0xff]
        %v179 = vld [vmem:[%s153 + $0x90] sm:$0xff]
        %v180 = vld [vmem:[%s153 + $0x98] sm:$0xff]
        %v181 = vld [vmem:[%s153 + $0xa0] sm:$0xff]
        %v182 = vld [vmem:[%s153 + $0xa8] sm:$0xff]
        %v183 = vld [vmem:[%s153 + $0xb0] sm:$0xff]
        %v184 = vld [vmem:[%s153 + $0xb8] sm:$0xff]
        %v185 = vld [vmem:[%s153 + $0xc0] sm:$0xff]
        %v186 = vld [vmem:[%s153 + $0xc8] sm:$0xff]
        %v187 = vld [vmem:[%s153 + $0xd0] sm:$0xff]
        %v188 = vld [vmem:[%s153 + $0xd8] sm:$0xff]
        %v189 = vld [vmem:[%s153 + $0xe0] sm:$0xff]
        %v190 = vld [vmem:[%s153 + $0xe8] sm:$0xff]
        %v191 = vld [vmem:[%s153 + $0xf0] sm:$0xff]
        %v192 = vld [vmem:[%s153 + $0xf8] sm:$0xff]
        %v193 = vld [vmem:[%s153 + $0x100] sm:$0xff]
        %v194 = vld [vmem:[%s153 + $0x108] sm:$0xff]
        %v195 = vld [vmem:[%s153 + $0x110] sm:$0xff]
        %v196 = vld [vmem:[%s153 + $0x118] sm:$0xff]
        %v197 = vld [vmem:[%s153 + $0x120] sm:$0xff]
        %v198 = vld [vmem:[%s153 + $0x128] sm:$0xff]
        %v199 = vld [vmem:[%s153 + $0x130] sm:$0xff]
        %v200 = vld [vmem:[%s153 + $0x138] sm:$0xff]
        %v201 = vld [vmem:[%s153 + $0x140] sm:$0xff]
        %v202 = vld [vmem:[%s153 + $0x148] sm:$0xff]
        %v203 = vld [vmem:[%s153 + $0x150] sm:$0xff]
        %v204 = vld [vmem:[%s153 + $0x158] sm:$0xff]
        %v205 = vld [vmem:[%s153 + $0x160] sm:$0xff]
        %v206 = vld [vmem:[%s153 + $0x168] sm:$0xff]
        %v207 = vld [vmem:[%s153 + $0x170] sm:$0xff]
        %v208 = vld [vmem:[%s153 + $0x178] sm:$0xff]
        %v209 = vld [vmem:[%s153 + $0x180] sm:$0xff]
        %v210 = vld [vmem:[%s153 + $0x188] sm:$0xff]
        %v211 = vld [vmem:[%s153 + $0x190] sm:$0xff]
        %v212 = vld [vmem:[%s153 + $0x198] sm:$0xff]
        %v213 = vld [vmem:[%s153 + $0x1a0] sm:$0xff]
        %v214 = vld [vmem:[%s153 + $0x1a8] sm:$0xff]
        %v215 = vld [vmem:[%s153 + $0x1b0] sm:$0xff]
        %v216 = vld [vmem:[%s153 + $0x1b8] sm:$0xff]
        %v217 = vld [vmem:[%s153 + $0x1c0] sm:$0xff]
        %v218 = vld [vmem:[%s153 + $0x1c8] sm:$0xff]
        %v219 = vld [vmem:[%s153 + $0x1d0] sm:$0xff]
        %v220 = vld [vmem:[%s153 + $0x1d8] sm:$0xff]
        %v221 = vld [vmem:[%s153 + $0x1e0] sm:$0xff]
        %v222 = vld [vmem:[%s153 + $0x1e8] sm:$0xff]
        %v223 = vld [vmem:[%s153 + $0x1f0] sm:$0xff]
        %v224 = vld [vmem:[%s153 + $0x1f8] sm:$0xff]
        %v225 = vld [vmem:[%s153 + $0x200] sm:$0xff]
        %v226 = vld [vmem:[%s153 + $0x208] sm:$0xff]
        %v227 = vld [vmem:[%s153 + $0x210] sm:$0xff]
        %v228 = vld [vmem:[%s153 + $0x218] sm:$0xff]
        %v229 = vld [vmem:[%s153 + $0x220] sm:$0xff]
        %v230 = vld [vmem:[%s153 + $0x228] sm:$0xff]
        %v231 = vld [vmem:[%s153 + $0x230] sm:$0xff]
        %v232 = vld [vmem:[%s153 + $0x238] sm:$0xff]
        %v233 = vld [vmem:[%s153 + $0x240] sm:$0xff]
        %v234 = vld [vmem:[%s153 + $0x248] sm:$0xff]
        %v235 = vld [vmem:[%s153 + $0x250] sm:$0xff]
        %v236 = vld [vmem:[%s153 + $0x258] sm:$0xff]
        %v237 = vld [vmem:[%s153 + $0x260] sm:$0xff]
        %v238 = vld [vmem:[%s153 + $0x268] sm:$0xff]
        %v239 = vld [vmem:[%s153 + $0x270] sm:$0xff]
        %v240 = vld [vmem:[%s153 + $0x278] sm:$0xff]
        %v241 = vld [vmem:[%s153 + $0x280] sm:$0xff]
        %v242 = vld [vmem:[%s153 + $0x288] sm:$0xff]
        %v243 = vld [vmem:[%s153 + $0x290] sm:$0xff]
        %v244 = vld [vmem:[%s153 + $0x298] sm:$0xff]
        %v245 = vld [vmem:[%s153 + $0x2a0] sm:$0xff]
        %v246 = vld [vmem:[%s153 + $0x2a8] sm:$0xff]
        %v247 = vld [vmem:[%s153 + $0x2b0] sm:$0xff]
        %v248 = vld [vmem:[%s153 + $0x2b8] sm:$0xff]
        %v249 = vld [vmem:[%s153 + $0x2c0] sm:$0xff]
        %v250 = vld [vmem:[%s153 + $0x2c8] sm:$0xff]
        %v251 = vld [vmem:[%s153 + $0x2d0] sm:$0xff]
        %v252 = vld [vmem:[%s153 + $0x2d8] sm:$0xff]
        %v253 = vld [vmem:[%s153 + $0x2e0] sm:$0xff]
        %v254 = vld [vmem:[%s153 + $0x2e8] sm:$0xff]
        %v255 = vld [vmem:[%s153 + $0x2f0] sm:$0xff]
        %v256 = vld [vmem:[%s153 + $0x2f8] sm:$0xff]
        %v257 = vld [vmem:[%s153 + $0x300] sm:$0xff]
        %v258 = vld [vmem:[%s153 + $0x308] sm:$0xff]
        %v259 = vld [vmem:[%s153 + $0x310] sm:$0xff]
        %v260 = vld [vmem:[%s153 + $0x318] sm:$0xff]
        %v261 = vld [vmem:[%s153 + $0x320] sm:$0xff]
        %v262 = vld [vmem:[%s153 + $0x328] sm:$0xff]
        %v263 = vld [vmem:[%s153 + $0x330] sm:$0xff]
        %v264 = vld [vmem:[%s153 + $0x338] sm:$0xff]
        %v265 = vld [vmem:[%s153 + $0x340] sm:$0xff]
        %v266 = vld [vmem:[%s153 + $0x348] sm:$0xff]
        %v267 = vld [vmem:[%s153 + $0x350] sm:$0xff]
        %v268 = vld [vmem:[%s153 + $0x358] sm:$0xff]
        %v269 = vld [vmem:[%s153 + $0x360] sm:$0xff]
        %v270 = vld [vmem:[%s153 + $0x368] sm:$0xff]
        %v271 = vld [vmem:[%s153 + $0x370] sm:$0xff]
        %v272 = vld [vmem:[%s153 + $0x378] sm:$0xff]
        %v273 = vld [vmem:[%s153 + $0x380] sm:$0xff]
        %v274 = vld [vmem:[%s153 + $0x388] sm:$0xff]
        %v275 = vld [vmem:[%s153 + $0x390] sm:$0xff]
        %v276 = vld [vmem:[%s153 + $0x398] sm:$0xff]
        %v277 = vld [vmem:[%s153 + $0x3a0] sm:$0xff]
        %v278 = vld [vmem:[%s153 + $0x3a8] sm:$0xff]
        %v279 = vld [vmem:[%s153 + $0x3b0] sm:$0xff]
        %v280 = vld [vmem:[%s153 + $0x3b8] sm:$0xff]
        %v281 = vld [vmem:[%s153 + $0x3c0] sm:$0xff]
        %v282 = vld [vmem:[%s153 + $0x3c8] sm:$0xff]
        %v283 = vld [vmem:[%s153 + $0x3d0] sm:$0xff]
        %v284 = vld [vmem:[%s153 + $0x3d8] sm:$0xff]
        %v285 = vld [vmem:[%s153 + $0x3e0] sm:$0xff]
        %v286 = vld [vmem:[%s153 + $0x3e8] sm:$0xff]
        %v287 = vld [vmem:[%s153 + $0x3f0] sm:$0xff]
        %v288 = vld [vmem:[%s153 + $0x3f8] sm:$0xff]
        %v289 = vld [vmem:[%s153 + $0x400] sm:$0xff]
        %v290 = vld [vmem:[%s153 + $0x408] sm:$0xff]
        %v291 = vld [vmem:[%s153 + $0x410] sm:$0xff]
        %v292 = vld [vmem:[%s153 + $0x418] sm:$0xff]
        %v293 = vld [vmem:[%s153 + $0x420] sm:$0xff]
        %v294 = vld [vmem:[%s153 + $0x428] sm:$0xff]
        %v295 = vld [vmem:[%s153 + $0x430] sm:$0xff]
        %v296 = vld [vmem:[%s153 + $0x438] sm:$0xff]
        %v297 = vld [vmem:[%s153 + $0x440] sm:$0xff]
        %v298 = vld [vmem:[%s153 + $0x448] sm:$0xff]
        %v299 = vld [vmem:[%s153 + $0x450] sm:$0xff]
        %v300 = vld [vmem:[%s153 + $0x458] sm:$0xff]
        %v301 = vld [vmem:[%s153 + $0x460] sm:$0xff]
        %v302 = vld [vmem:[%s153 + $0x468] sm:$0xff]
        %v303 = vld [vmem:[%s153 + $0x470] sm:$0xff]
        %v304 = vld [vmem:[%s153 + $0x478] sm:$0xff]
        %v305 = vld [vmem:[%s153 + $0x480] sm:$0xff]
        %v306 = vld [vmem:[%s153 + $0x488] sm:$0xff]
        %v307 = vld [vmem:[%s153 + $0x490] sm:$0xff]
        %v308 = vld [vmem:[%s153 + $0x498] sm:$0xff]
        %v309 = vld [vmem:[%s153 + $0x4a0] sm:$0xff]
        %v310 = vld [vmem:[%s153 + $0x4a8] sm:$0xff]
        %v311 = vld [vmem:[%s153 + $0x4b0] sm:$0xff]
        %v312 = vld [vmem:[%s153 + $0x4b8] sm:$0xff]
        %v313 = vld [vmem:[%s153 + $0x4c0] sm:$0xff]
        %v314 = vld [vmem:[%s153 + $0x4c8] sm:$0xff]
        %v315 = vld [vmem:[%s153 + $0x4d0] sm:$0xff]
        %v316 = vld [vmem:[%s153 + $0x4d8] sm:$0xff]
        %v317 = vld [vmem:[%s153 + $0x4e0] sm:$0xff]
        %v318 = vld [vmem:[%s153 + $0x4e8] sm:$0xff]
        %v319 = vld [vmem:[%s153 + $0x4f0] sm:$0xff]
        %v320 = vld [vmem:[%s153 + $0x4f8] sm:$0xff]
        %v321 = vld [vmem:[%s153 + $0x500] sm:$0xff]
        %v322 = vld [vmem:[%s153 + $0x508] sm:$0xff]
        %v323 = vld [vmem:[%s153 + $0x510] sm:$0xff]
        %v324 = vld [vmem:[%s153 + $0x518] sm:$0xff]
        %v325 = vld [vmem:[%s153 + $0x520] sm:$0xff]
        %v326 = vld [vmem:[%s153 + $0x528] sm:$0xff]
        %v327 = vld [vmem:[%s153 + $0x530] sm:$0xff]
        %v328 = vld [vmem:[%s153 + $0x538] sm:$0xff]
        %v329 = vld [vmem:[%s153 + $0x540] sm:$0xff]
        %v330 = vld [vmem:[%s153 + $0x548] sm:$0xff]
        %v331 = vld [vmem:[%s153 + $0x550] sm:$0xff]
        %v332 = vld [vmem:[%s153 + $0x558] sm:$0xff]
        %v333 = vld [vmem:[%s153 + $0x560] sm:$0xff]
        %v334 = vld [vmem:[%s153 + $0x568] sm:$0xff]
        %v335 = vld [vmem:[%s153 + $0x570] sm:$0xff]
        %v336 = vld [vmem:[%s153 + $0x578] sm:$0xff]
        %v337 = vld [vmem:[%s153 + $0x580] sm:$0xff]
        %v338 = vld [vmem:[%s153 + $0x588] sm:$0xff]
        %v339 = vld [vmem:[%s153 + $0x590] sm:$0xff]
        %v340 = vld [vmem:[%s153 + $0x598] sm:$0xff]
        %v341 = vld [vmem:[%s153 + $0x5a0] sm:$0xff]
        %v342 = vld [vmem:[%s153 + $0x5a8] sm:$0xff]
        %v343 = vld [vmem:[%s153 + $0x5b0] sm:$0xff]
        %v344 = vld [vmem:[%s153 + $0x5b8] sm:$0xff]
        %v345 = vld [vmem:[%s153 + $0x5c0] sm:$0xff]
        %v346 = vld [vmem:[%s153 + $0x5c8] sm:$0xff]
        %v347 = vld [vmem:[%s153 + $0x5d0] sm:$0xff]
        %v348 = vld [vmem:[%s153 + $0x5d8] sm:$0xff]
        %v349 = vld [vmem:[%s153 + $0x5e0] sm:$0xff]
        %v350 = vld [vmem:[%s153 + $0x5e8] sm:$0xff]
        %v351 = vld [vmem:[%s153 + $0x5f0] sm:$0xff]
        %v352 = vld [vmem:[%s153 + $0x5f8] sm:$0xff]
        %v353 = vld [vmem:[%s153 + $0x600] sm:$0xff]
        %v354 = vld [vmem:[%s153 + $0x608] sm:$0xff]
        %v355 = vld [vmem:[%s153 + $0x610] sm:$0xff]
        %v356 = vld [vmem:[%s153 + $0x618] sm:$0xff]
        %v357 = vld [vmem:[%s153 + $0x620] sm:$0xff]
        %v358 = vld [vmem:[%s153 + $0x628] sm:$0xff]
        %v359 = vld [vmem:[%s153 + $0x630] sm:$0xff]
        %v360 = vld [vmem:[%s153 + $0x638] sm:$0xff]
        %v361 = vld [vmem:[%s153 + $0x640] sm:$0xff]
        %v362 = vld [vmem:[%s153 + $0x648] sm:$0xff]
        %v363 = vld [vmem:[%s153 + $0x650] sm:$0xff]
        %v364 = vld [vmem:[%s153 + $0x658] sm:$0xff]
        %v365 = vld [vmem:[%s153 + $0x660] sm:$0xff]
        %v366 = vld [vmem:[%s153 + $0x668] sm:$0xff]
        %v367 = vld [vmem:[%s153 + $0x670] sm:$0xff]
        %v368 = vld [vmem:[%s153 + $0x678] sm:$0xff]
        %v369 = vld [vmem:[%s153 + $0x680] sm:$0xff]
        %v370 = vld [vmem:[%s153 + $0x688] sm:$0xff]
        %v371 = vld [vmem:[%s153 + $0x690] sm:$0xff]
        %v372 = vld [vmem:[%s153 + $0x698] sm:$0xff]
        %v373 = vld [vmem:[%s153 + $0x6a0] sm:$0xff]
        %v374 = vld [vmem:[%s153 + $0x6a8] sm:$0xff]
        %v375 = vld [vmem:[%s153 + $0x6b0] sm:$0xff]
        %v376 = vld [vmem:[%s153 + $0x6b8] sm:$0xff]
        %v377 = vld [vmem:[%s153 + $0x6c0] sm:$0xff]
        %v378 = vld [vmem:[%s153 + $0x6c8] sm:$0xff]
        %v379 = vld [vmem:[%s153 + $0x6d0] sm:$0xff]
        %v380 = vld [vmem:[%s153 + $0x6d8] sm:$0xff]
        %v381 = vld [vmem:[%s153 + $0x6e0] sm:$0xff]
        %v382 = vld [vmem:[%s153 + $0x6e8] sm:$0xff]
        %v383 = vld [vmem:[%s153 + $0x6f0] sm:$0xff]
        %v384 = vld [vmem:[%s153 + $0x6f8] sm:$0xff]
        %v385 = vld [vmem:[%s153 + $0x700] sm:$0xff]
        %v386 = vld [vmem:[%s153 + $0x708] sm:$0xff]
        %v387 = vld [vmem:[%s153 + $0x710] sm:$0xff]
        %v388 = vld [vmem:[%s153 + $0x718] sm:$0xff]
        %v389 = vld [vmem:[%s153 + $0x720] sm:$0xff]
        %v390 = vld [vmem:[%s153 + $0x728] sm:$0xff]
        %v391 = vld [vmem:[%s153 + $0x730] sm:$0xff]
        %v392 = vld [vmem:[%s153 + $0x738] sm:$0xff]
        %v393 = vld [vmem:[%s153 + $0x740] sm:$0xff]
        %v394 = vld [vmem:[%s153 + $0x748] sm:$0xff]
        %v395 = vld [vmem:[%s153 + $0x750] sm:$0xff]
        %v396 = vld [vmem:[%s153 + $0x758] sm:$0xff]
        %v397 = vld [vmem:[%s153 + $0x760] sm:$0xff]
        %v398 = vld [vmem:[%s153 + $0x768] sm:$0xff]
        %v399 = vld [vmem:[%s153 + $0x770] sm:$0xff]
        %v400 = vld [vmem:[%s153 + $0x778] sm:$0xff]
        %v401 = vld [vmem:[%s153 + $0x780] sm:$0xff]
        %v402 = vld [vmem:[%s153 + $0x788] sm:$0xff]
        %v403 = vld [vmem:[%s153 + $0x790] sm:$0xff]
        %v404 = vld [vmem:[%s153 + $0x798] sm:$0xff]
        %v405 = vld [vmem:[%s153 + $0x7a0] sm:$0xff]
        %v406 = vld [vmem:[%s153 + $0x7a8] sm:$0xff]
        %v407 = vld [vmem:[%s153 + $0x7b0] sm:$0xff]
        %v408 = vld [vmem:[%s153 + $0x7b8] sm:$0xff]
        %v409 = vld [vmem:[%s153 + $0x7c0] sm:$0xff]
        %v410 = vld [vmem:[%s153 + $0x7c8] sm:$0xff]
        %v411 = vld [vmem:[%s153 + $0x7d0] sm:$0xff]
        %v412 = vld [vmem:[%s153 + $0x7d8] sm:$0xff]
        %v413 = vld [vmem:[%s153 + $0x7e0] sm:$0xff]
        %v414 = vld [vmem:[%s153 + $0x7e8] sm:$0xff]
        %v415 = vld [vmem:[%s153 + $0x7f0] sm:$0xff]
        %v416 = vld [vmem:[%s153 + $0x7f8] sm:$0xff]
        %v417 = vlaneseq
        %v418 = vand.u32 %v417, 127
        %vm419 = vcmp.lt.s32.totalorder %v418, 0
        %v420 = vsub.s32 0, %v418
        %v421 = vsel %vm419, %v420, %v418
        %v422 = vshrl.u32 %v421, 1
        %v423 = vand.u32 %v421, 1
        %v424 = vsub.s32 0, %v423
        %v425 = vsel %vm419, %v424, %v423
        %vm426 = vcmp.ne.s32.totalorder %v425, 0
        %vm427 = vcmp.lt.s32.totalorder %v425, 0
        %vm428 = vmand %vm427, %vm426
        %v429 = vadd.s32 %v425, 2
        %v430 = vsel %vm428, %v429, %v425
        %vm431 = vcmp.eq.s32.totalorder %v430, 0
        %s432 = sld [smem:[#allocation2]]
        %s433 = sld [smem:[#allocation2 + $0x1]]
        %v434 = vstv %s432
        %v435 = vstv %s433
        %v436 = vsel %vm431, %v434, %v435
        %s437 = sld [smem:[#allocation2 + $0x2]]
        %s438 = sld [smem:[#allocation2 + $0x3]]
        %v439 = vstv %s437
        %v440 = vstv %s438
        %v441 = vsel %vm431, %v439, %v440
        %s442 = sld [smem:[#allocation2 + $0x4]]
        %s443 = sld [smem:[#allocation2 + $0x5]]
        %v444 = vstv %s442
        %v445 = vstv %s443
        %v446 = vsel %vm431, %v444, %v445
        %448 = vset.pattern.permute.xlu0 0
        %449 = vperm.xlu0 %448, %v161
        %v450 = vpop.permute.xlu0 %449
        %453 = vset.pattern.permute.xlu0 0
        %454 = vperm.xlu0 %453, %v162
        %v455 = vpop.permute.xlu0 %454
        %458 = vset.pattern.permute.xlu0 0
        %459 = vperm.xlu0 %458, %v163
        %v460 = vpop.permute.xlu0 %459
        %463 = vset.pattern.permute.xlu0 0
        %464 = vperm.xlu0 %463, %v164
        %v465 = vpop.permute.xlu0 %464
        %468 = vset.pattern.permute.xlu0 0
        %469 = vperm.xlu0 %468, %v165
        %v470 = vpop.permute.xlu0 %469
        %473 = vset.pattern.permute.xlu0 0
        %474 = vperm.xlu0 %473, %v166
        %v475 = vpop.permute.xlu0 %474
        %478 = vset.pattern.permute.xlu0 0
        %479 = vperm.xlu0 %478, %v167
        %v480 = vpop.permute.xlu0 %479
        %483 = vset.pattern.permute.xlu0 0
        %484 = vperm.xlu0 %483, %v168
        %v485 = vpop.permute.xlu0 %484
        %488 = vset.pattern.permute.xlu0 0
        %489 = vperm.xlu0 %488, %v169
        %v490 = vpop.permute.xlu0 %489
        %493 = vset.pattern.permute.xlu0 0
        %494 = vperm.xlu0 %493, %v170
        %v495 = vpop.permute.xlu0 %494
        %498 = vset.pattern.permute.xlu0 0
        %499 = vperm.xlu0 %498, %v171
        %v500 = vpop.permute.xlu0 %499
        %503 = vset.pattern.permute.xlu0 0
        %504 = vperm.xlu0 %503, %v172
        %v505 = vpop.permute.xlu0 %504
        %508 = vset.pattern.permute.xlu0 0
        %509 = vperm.xlu0 %508, %v173
        %v510 = vpop.permute.xlu0 %509
        %513 = vset.pattern.permute.xlu0 0
        %514 = vperm.xlu0 %513, %v174
        %v515 = vpop.permute.xlu0 %514
        %518 = vset.pattern.permute.xlu0 0
        %519 = vperm.xlu0 %518, %v175
        %v520 = vpop.permute.xlu0 %519
        %523 = vset.pattern.permute.xlu0 0
        %524 = vperm.xlu0 %523, %v176
        %v525 = vpop.permute.xlu0 %524
        %528 = vset.pattern.permute.xlu0 0
        %529 = vperm.xlu0 %528, %v177
        %v530 = vpop.permute.xlu0 %529
        %533 = vset.pattern.permute.xlu0 0
        %534 = vperm.xlu0 %533, %v178
        %v535 = vpop.permute.xlu0 %534
        %538 = vset.pattern.permute.xlu0 0
        %539 = vperm.xlu0 %538, %v179
        %v540 = vpop.permute.xlu0 %539
        %543 = vset.pattern.permute.xlu0 0
        %544 = vperm.xlu0 %543, %v180
        %v545 = vpop.permute.xlu0 %544
        %548 = vset.pattern.permute.xlu0 0
        %549 = vperm.xlu0 %548, %v181
        %v550 = vpop.permute.xlu0 %549
        %553 = vset.pattern.permute.xlu0 0
        %554 = vperm.xlu0 %553, %v182
        %v555 = vpop.permute.xlu0 %554
        %558 = vset.pattern.permute.xlu0 0
        %559 = vperm.xlu0 %558, %v183
        %v560 = vpop.permute.xlu0 %559
        %563 = vset.pattern.permute.xlu0 0
        %564 = vperm.xlu0 %563, %v184
        %v565 = vpop.permute.xlu0 %564
        %568 = vset.pattern.permute.xlu0 0
        %569 = vperm.xlu0 %568, %v185
        %v570 = vpop.permute.xlu0 %569
        %573 = vset.pattern.permute.xlu0 0
        %574 = vperm.xlu0 %573, %v186
        %v575 = vpop.permute.xlu0 %574
        %578 = vset.pattern.permute.xlu0 0
        %579 = vperm.xlu0 %578, %v187
        %v580 = vpop.permute.xlu0 %579
        %583 = vset.pattern.permute.xlu0 0
        %584 = vperm.xlu0 %583, %v188
        %v585 = vpop.permute.xlu0 %584
        %588 = vset.pattern.permute.xlu0 0
        %589 = vperm.xlu0 %588, %v189
        %v590 = vpop.permute.xlu0 %589
        %593 = vset.pattern.permute.xlu0 0
        %594 = vperm.xlu0 %593, %v190
        %v595 = vpop.permute.xlu0 %594
        %598 = vset.pattern.permute.xlu0 0
        %599 = vperm.xlu0 %598, %v191
        %v600 = vpop.permute.xlu0 %599
        %603 = vset.pattern.permute.xlu0 0
        %604 = vperm.xlu0 %603, %v192
        %v605 = vpop.permute.xlu0 %604
        %608 = vset.pattern.permute.xlu0 0
        %609 = vperm.xlu0 %608, %v193
        %v610 = vpop.permute.xlu0 %609
        %613 = vset.pattern.permute.xlu0 0
        %614 = vperm.xlu0 %613, %v194
        %v615 = vpop.permute.xlu0 %614
        %618 = vset.pattern.permute.xlu0 0
        %619 = vperm.xlu0 %618, %v195
        %v620 = vpop.permute.xlu0 %619
        %623 = vset.pattern.permute.xlu0 0
        %624 = vperm.xlu0 %623, %v196
        %v625 = vpop.permute.xlu0 %624
        %628 = vset.pattern.permute.xlu0 0
        %629 = vperm.xlu0 %628, %v197
        %v630 = vpop.permute.xlu0 %629
        %633 = vset.pattern.permute.xlu0 0
        %634 = vperm.xlu0 %633, %v198
        %v635 = vpop.permute.xlu0 %634
        %638 = vset.pattern.permute.xlu0 0
        %639 = vperm.xlu0 %638, %v199
        %v640 = vpop.permute.xlu0 %639
        %643 = vset.pattern.permute.xlu0 0
        %644 = vperm.xlu0 %643, %v200
        %v645 = vpop.permute.xlu0 %644
        %648 = vset.pattern.permute.xlu0 0
        %649 = vperm.xlu0 %648, %v201
        %v650 = vpop.permute.xlu0 %649
        %653 = vset.pattern.permute.xlu0 0
        %654 = vperm.xlu0 %653, %v202
        %v655 = vpop.permute.xlu0 %654
        %658 = vset.pattern.permute.xlu0 0
        %659 = vperm.xlu0 %658, %v203
        %v660 = vpop.permute.xlu0 %659
        %663 = vset.pattern.permute.xlu0 0
        %664 = vperm.xlu0 %663, %v204
        %v665 = vpop.permute.xlu0 %664
        %668 = vset.pattern.permute.xlu0 0
        %669 = vperm.xlu0 %668, %v205
        %v670 = vpop.permute.xlu0 %669
        %673 = vset.pattern.permute.xlu0 0
        %674 = vperm.xlu0 %673, %v206
        %v675 = vpop.permute.xlu0 %674
        %678 = vset.pattern.permute.xlu0 0
        %679 = vperm.xlu0 %678, %v207
        %v680 = vpop.permute.xlu0 %679
        %683 = vset.pattern.permute.xlu0 0
        %684 = vperm.xlu0 %683, %v208
        %v685 = vpop.permute.xlu0 %684
        %688 = vset.pattern.permute.xlu0 0
        %689 = vperm.xlu0 %688, %v209
        %v690 = vpop.permute.xlu0 %689
        %693 = vset.pattern.permute.xlu0 0
        %694 = vperm.xlu0 %693, %v210
        %v695 = vpop.permute.xlu0 %694
        %698 = vset.pattern.permute.xlu0 0
        %699 = vperm.xlu0 %698, %v211
        %v700 = vpop.permute.xlu0 %699
        %703 = vset.pattern.permute.xlu0 0
        %704 = vperm.xlu0 %703, %v212
        %v705 = vpop.permute.xlu0 %704
        %708 = vset.pattern.permute.xlu0 0
        %709 = vperm.xlu0 %708, %v213
        %v710 = vpop.permute.xlu0 %709
        %713 = vset.pattern.permute.xlu0 0
        %714 = vperm.xlu0 %713, %v214
        %v715 = vpop.permute.xlu0 %714
        %718 = vset.pattern.permute.xlu0 0
        %719 = vperm.xlu0 %718, %v215
        %v720 = vpop.permute.xlu0 %719
        %723 = vset.pattern.permute.xlu0 0
        %724 = vperm.xlu0 %723, %v216
        %v725 = vpop.permute.xlu0 %724
        %728 = vset.pattern.permute.xlu0 0
        %729 = vperm.xlu0 %728, %v217
        %v730 = vpop.permute.xlu0 %729
        %733 = vset.pattern.permute.xlu0 0
        %734 = vperm.xlu0 %733, %v218
        %v735 = vpop.permute.xlu0 %734
        %738 = vset.pattern.permute.xlu0 0
        %739 = vperm.xlu0 %738, %v219
        %v740 = vpop.permute.xlu0 %739
        %743 = vset.pattern.permute.xlu0 0
        %744 = vperm.xlu0 %743, %v220
        %v745 = vpop.permute.xlu0 %744
        %748 = vset.pattern.permute.xlu0 0
        %749 = vperm.xlu0 %748, %v221
        %v750 = vpop.permute.xlu0 %749
        %753 = vset.pattern.permute.xlu0 0
        %754 = vperm.xlu0 %753, %v222
        %v755 = vpop.permute.xlu0 %754
        %758 = vset.pattern.permute.xlu0 0
        %759 = vperm.xlu0 %758, %v223
        %v760 = vpop.permute.xlu0 %759
        %763 = vset.pattern.permute.xlu0 0
        %764 = vperm.xlu0 %763, %v224
        %v765 = vpop.permute.xlu0 %764
        %768 = vset.pattern.permute.xlu0 0
        %769 = vperm.xlu0 %768, %v225
        %v770 = vpop.permute.xlu0 %769
        %773 = vset.pattern.permute.xlu0 0
        %774 = vperm.xlu0 %773, %v226
        %v775 = vpop.permute.xlu0 %774
        %778 = vset.pattern.permute.xlu0 0
        %779 = vperm.xlu0 %778, %v227
        %v780 = vpop.permute.xlu0 %779
        %783 = vset.pattern.permute.xlu0 0
        %784 = vperm.xlu0 %783, %v228
        %v785 = vpop.permute.xlu0 %784
        %788 = vset.pattern.permute.xlu0 0
        %789 = vperm.xlu0 %788, %v229
        %v790 = vpop.permute.xlu0 %789
        %793 = vset.pattern.permute.xlu0 0
        %794 = vperm.xlu0 %793, %v230
        %v795 = vpop.permute.xlu0 %794
        %798 = vset.pattern.permute.xlu0 0
        %799 = vperm.xlu0 %798, %v231
        %v800 = vpop.permute.xlu0 %799
        %803 = vset.pattern.permute.xlu0 0
        %804 = vperm.xlu0 %803, %v232
        %v805 = vpop.permute.xlu0 %804
        %808 = vset.pattern.permute.xlu0 0
        %809 = vperm.xlu0 %808, %v233
        %v810 = vpop.permute.xlu0 %809
        %813 = vset.pattern.permute.xlu0 0
        %814 = vperm.xlu0 %813, %v234
        %v815 = vpop.permute.xlu0 %814
        %818 = vset.pattern.permute.xlu0 0
        %819 = vperm.xlu0 %818, %v235
        %v820 = vpop.permute.xlu0 %819
        %823 = vset.pattern.permute.xlu0 0
        %824 = vperm.xlu0 %823, %v236
        %v825 = vpop.permute.xlu0 %824
        %828 = vset.pattern.permute.xlu0 0
        %829 = vperm.xlu0 %828, %v237
        %v830 = vpop.permute.xlu0 %829
        %833 = vset.pattern.permute.xlu0 0
        %834 = vperm.xlu0 %833, %v238
        %v835 = vpop.permute.xlu0 %834
        %838 = vset.pattern.permute.xlu0 0
        %839 = vperm.xlu0 %838, %v239
        %v840 = vpop.permute.xlu0 %839
        %843 = vset.pattern.permute.xlu0 0
        %844 = vperm.xlu0 %843, %v240
        %v845 = vpop.permute.xlu0 %844
        %848 = vset.pattern.permute.xlu0 0
        %849 = vperm.xlu0 %848, %v241
        %v850 = vpop.permute.xlu0 %849
        %853 = vset.pattern.permute.xlu0 0
        %854 = vperm.xlu0 %853, %v242
        %v855 = vpop.permute.xlu0 %854
        %858 = vset.pattern.permute.xlu0 0
        %859 = vperm.xlu0 %858, %v243
        %v860 = vpop.permute.xlu0 %859
        %863 = vset.pattern.permute.xlu0 0
        %864 = vperm.xlu0 %863, %v244
        %v865 = vpop.permute.xlu0 %864
        %868 = vset.pattern.permute.xlu0 0
        %869 = vperm.xlu0 %868, %v245
        %v870 = vpop.permute.xlu0 %869
        %873 = vset.pattern.permute.xlu0 0
        %874 = vperm.xlu0 %873, %v246
        %v875 = vpop.permute.xlu0 %874
        %878 = vset.pattern.permute.xlu0 0
        %879 = vperm.xlu0 %878, %v247
        %v880 = vpop.permute.xlu0 %879
        %883 = vset.pattern.permute.xlu0 0
        %884 = vperm.xlu0 %883, %v248
        %v885 = vpop.permute.xlu0 %884
        %888 = vset.pattern.permute.xlu0 0
        %889 = vperm.xlu0 %888, %v249
        %v890 = vpop.permute.xlu0 %889
        %893 = vset.pattern.permute.xlu0 0
        %894 = vperm.xlu0 %893, %v250
        %v895 = vpop.permute.xlu0 %894
        %898 = vset.pattern.permute.xlu0 0
        %899 = vperm.xlu0 %898, %v251
        %v900 = vpop.permute.xlu0 %899
        %903 = vset.pattern.permute.xlu0 0
        %904 = vperm.xlu0 %903, %v252
        %v905 = vpop.permute.xlu0 %904
        %908 = vset.pattern.permute.xlu0 0
        %909 = vperm.xlu0 %908, %v253
        %v910 = vpop.permute.xlu0 %909
        %913 = vset.pattern.permute.xlu0 0
        %914 = vperm.xlu0 %913, %v254
        %v915 = vpop.permute.xlu0 %914
        %918 = vset.pattern.permute.xlu0 0
        %919 = vperm.xlu0 %918, %v255
        %v920 = vpop.permute.xlu0 %919
        %923 = vset.pattern.permute.xlu0 0
        %924 = vperm.xlu0 %923, %v256
        %v925 = vpop.permute.xlu0 %924
        %928 = vset.pattern.permute.xlu0 0
        %929 = vperm.xlu0 %928, %v257
        %v930 = vpop.permute.xlu0 %929
        %933 = vset.pattern.permute.xlu0 0
        %934 = vperm.xlu0 %933, %v258
        %v935 = vpop.permute.xlu0 %934
        %938 = vset.pattern.permute.xlu0 0
        %939 = vperm.xlu0 %938, %v259
        %v940 = vpop.permute.xlu0 %939
        %943 = vset.pattern.permute.xlu0 0
        %944 = vperm.xlu0 %943, %v260
        %v945 = vpop.permute.xlu0 %944
        %948 = vset.pattern.permute.xlu0 0
        %949 = vperm.xlu0 %948, %v261
        %v950 = vpop.permute.xlu0 %949
        %953 = vset.pattern.permute.xlu0 0
        %954 = vperm.xlu0 %953, %v262
        %v955 = vpop.permute.xlu0 %954
        %958 = vset.pattern.permute.xlu0 0
        %959 = vperm.xlu0 %958, %v263
        %v960 = vpop.permute.xlu0 %959
        %963 = vset.pattern.permute.xlu0 0
        %964 = vperm.xlu0 %963, %v264
        %v965 = vpop.permute.xlu0 %964
        %968 = vset.pattern.permute.xlu0 0
        %969 = vperm.xlu0 %968, %v265
        %v970 = vpop.permute.xlu0 %969
        %973 = vset.pattern.permute.xlu0 0
        %974 = vperm.xlu0 %973, %v266
        %v975 = vpop.permute.xlu0 %974
        %978 = vset.pattern.permute.xlu0 0
        %979 = vperm.xlu0 %978, %v267
        %v980 = vpop.permute.xlu0 %979
        %983 = vset.pattern.permute.xlu0 0
        %984 = vperm.xlu0 %983, %v268
        %v985 = vpop.permute.xlu0 %984
        %988 = vset.pattern.permute.xlu0 0
        %989 = vperm.xlu0 %988, %v269
        %v990 = vpop.permute.xlu0 %989
        %993 = vset.pattern.permute.xlu0 0
        %994 = vperm.xlu0 %993, %v270
        %v995 = vpop.permute.xlu0 %994
        %998 = vset.pattern.permute.xlu0 0
        %999 = vperm.xlu0 %998, %v271
        %v1000 = vpop.permute.xlu0 %999
        %1003 = vset.pattern.permute.xlu0 0
        %1004 = vperm.xlu0 %1003, %v272
        %v1005 = vpop.permute.xlu0 %1004
        %1008 = vset.pattern.permute.xlu0 0
        %1009 = vperm.xlu0 %1008, %v273
        %v1010 = vpop.permute.xlu0 %1009
        %1013 = vset.pattern.permute.xlu0 0
        %1014 = vperm.xlu0 %1013, %v274
        %v1015 = vpop.permute.xlu0 %1014
        %1018 = vset.pattern.permute.xlu0 0
        %1019 = vperm.xlu0 %1018, %v275
        %v1020 = vpop.permute.xlu0 %1019
        %1023 = vset.pattern.permute.xlu0 0
        %1024 = vperm.xlu0 %1023, %v276
        %v1025 = vpop.permute.xlu0 %1024
        %1028 = vset.pattern.permute.xlu0 0
        %1029 = vperm.xlu0 %1028, %v277
        %v1030 = vpop.permute.xlu0 %1029
        %1033 = vset.pattern.permute.xlu0 0
        %1034 = vperm.xlu0 %1033, %v278
        %v1035 = vpop.permute.xlu0 %1034
        %1038 = vset.pattern.permute.xlu0 0
        %1039 = vperm.xlu0 %1038, %v279
        %v1040 = vpop.permute.xlu0 %1039
        %1043 = vset.pattern.permute.xlu0 0
        %1044 = vperm.xlu0 %1043, %v280
        %v1045 = vpop.permute.xlu0 %1044
        %1048 = vset.pattern.permute.xlu0 0
        %1049 = vperm.xlu0 %1048, %v281
        %v1050 = vpop.permute.xlu0 %1049
        %1053 = vset.pattern.permute.xlu0 0
        %1054 = vperm.xlu0 %1053, %v282
        %v1055 = vpop.permute.xlu0 %1054
        %1058 = vset.pattern.permute.xlu0 0
        %1059 = vperm.xlu0 %1058, %v283
        %v1060 = vpop.permute.xlu0 %1059
        %1063 = vset.pattern.permute.xlu0 0
        %1064 = vperm.xlu0 %1063, %v284
        %v1065 = vpop.permute.xlu0 %1064
        %1068 = vset.pattern.permute.xlu0 0
        %1069 = vperm.xlu0 %1068, %v285
        %v1070 = vpop.permute.xlu0 %1069
        %1073 = vset.pattern.permute.xlu0 0
        %1074 = vperm.xlu0 %1073, %v286
        %v1075 = vpop.permute.xlu0 %1074
        %1078 = vset.pattern.permute.xlu0 0
        %1079 = vperm.xlu0 %1078, %v287
        %v1080 = vpop.permute.xlu0 %1079
        %1083 = vset.pattern.permute.xlu0 0
        %1084 = vperm.xlu0 %1083, %v288
        %v1085 = vpop.permute.xlu0 %1084
        %1088 = vset.pattern.permute.xlu0 0
        %1089 = vperm.xlu0 %1088, %v289
        %v1090 = vpop.permute.xlu0 %1089
        %1093 = vset.pattern.permute.xlu0 0
        %1094 = vperm.xlu0 %1093, %v290
        %v1095 = vpop.permute.xlu0 %1094
        %1098 = vset.pattern.permute.xlu0 0
        %1099 = vperm.xlu0 %1098, %v291
        %v1100 = vpop.permute.xlu0 %1099
        %1103 = vset.pattern.permute.xlu0 0
        %1104 = vperm.xlu0 %1103, %v292
        %v1105 = vpop.permute.xlu0 %1104
        %1108 = vset.pattern.permute.xlu0 0
        %1109 = vperm.xlu0 %1108, %v293
        %v1110 = vpop.permute.xlu0 %1109
        %1113 = vset.pattern.permute.xlu0 0
        %1114 = vperm.xlu0 %1113, %v294
        %v1115 = vpop.permute.xlu0 %1114
        %1118 = vset.pattern.permute.xlu0 0
        %1119 = vperm.xlu0 %1118, %v295
        %v1120 = vpop.permute.xlu0 %1119
        %1123 = vset.pattern.permute.xlu0 0
        %1124 = vperm.xlu0 %1123, %v296
        %v1125 = vpop.permute.xlu0 %1124
        %1128 = vset.pattern.permute.xlu0 0
        %1129 = vperm.xlu0 %1128, %v297
        %v1130 = vpop.permute.xlu0 %1129
        %1133 = vset.pattern.permute.xlu0 0
        %1134 = vperm.xlu0 %1133, %v298
        %v1135 = vpop.permute.xlu0 %1134
        %1138 = vset.pattern.permute.xlu0 0
        %1139 = vperm.xlu0 %1138, %v299
        %v1140 = vpop.permute.xlu0 %1139
        %1143 = vset.pattern.permute.xlu0 0
        %1144 = vperm.xlu0 %1143, %v300
        %v1145 = vpop.permute.xlu0 %1144
        %1148 = vset.pattern.permute.xlu0 0
        %1149 = vperm.xlu0 %1148, %v301
        %v1150 = vpop.permute.xlu0 %1149
        %1153 = vset.pattern.permute.xlu0 0
        %1154 = vperm.xlu0 %1153, %v302
        %v1155 = vpop.permute.xlu0 %1154
        %1158 = vset.pattern.permute.xlu0 0
        %1159 = vperm.xlu0 %1158, %v303
        %v1160 = vpop.permute.xlu0 %1159
        %1163 = vset.pattern.permute.xlu0 0
        %1164 = vperm.xlu0 %1163, %v304
        %v1165 = vpop.permute.xlu0 %1164
        %1168 = vset.pattern.permute.xlu0 0
        %1169 = vperm.xlu0 %1168, %v305
        %v1170 = vpop.permute.xlu0 %1169
        %1173 = vset.pattern.permute.xlu0 0
        %1174 = vperm.xlu0 %1173, %v306
        %v1175 = vpop.permute.xlu0 %1174
        %1178 = vset.pattern.permute.xlu0 0
        %1179 = vperm.xlu0 %1178, %v307
        %v1180 = vpop.permute.xlu0 %1179
        %1183 = vset.pattern.permute.xlu0 0
        %1184 = vperm.xlu0 %1183, %v308
        %v1185 = vpop.permute.xlu0 %1184
        %1188 = vset.pattern.permute.xlu0 0
        %1189 = vperm.xlu0 %1188, %v309
        %v1190 = vpop.permute.xlu0 %1189
        %1193 = vset.pattern.permute.xlu0 0
        %1194 = vperm.xlu0 %1193, %v310
        %v1195 = vpop.permute.xlu0 %1194
        %1198 = vset.pattern.permute.xlu0 0
        %1199 = vperm.xlu0 %1198, %v311
        %v1200 = vpop.permute.xlu0 %1199
        %1203 = vset.pattern.permute.xlu0 0
        %1204 = vperm.xlu0 %1203, %v312
        %v1205 = vpop.permute.xlu0 %1204
        %1208 = vset.pattern.permute.xlu0 0
        %1209 = vperm.xlu0 %1208, %v313
        %v1210 = vpop.permute.xlu0 %1209
        %1213 = vset.pattern.permute.xlu0 0
        %1214 = vperm.xlu0 %1213, %v314
        %v1215 = vpop.permute.xlu0 %1214
        %1218 = vset.pattern.permute.xlu0 0
        %1219 = vperm.xlu0 %1218, %v315
        %v1220 = vpop.permute.xlu0 %1219
        %1223 = vset.pattern.permute.xlu0 0
        %1224 = vperm.xlu0 %1223, %v316
        %v1225 = vpop.permute.xlu0 %1224
        %1228 = vset.pattern.permute.xlu0 0
        %1229 = vperm.xlu0 %1228, %v317
        %v1230 = vpop.permute.xlu0 %1229
        %1233 = vset.pattern.permute.xlu0 0
        %1234 = vperm.xlu0 %1233, %v318
        %v1235 = vpop.permute.xlu0 %1234
        %1238 = vset.pattern.permute.xlu0 0
        %1239 = vperm.xlu0 %1238, %v319
        %v1240 = vpop.permute.xlu0 %1239
        %1243 = vset.pattern.permute.xlu0 0
        %1244 = vperm.xlu0 %1243, %v320
        %v1245 = vpop.permute.xlu0 %1244
        %1248 = vset.pattern.permute.xlu0 0
        %1249 = vperm.xlu0 %1248, %v321
        %v1250 = vpop.permute.xlu0 %1249
        %1253 = vset.pattern.permute.xlu0 0
        %1254 = vperm.xlu0 %1253, %v322
        %v1255 = vpop.permute.xlu0 %1254
        %1258 = vset.pattern.permute.xlu0 0
        %1259 = vperm.xlu0 %1258, %v323
        %v1260 = vpop.permute.xlu0 %1259
        %1263 = vset.pattern.permute.xlu0 0
        %1264 = vperm.xlu0 %1263, %v324
        %v1265 = vpop.permute.xlu0 %1264
        %1268 = vset.pattern.permute.xlu0 0
        %1269 = vperm.xlu0 %1268, %v325
        %v1270 = vpop.permute.xlu0 %1269
        %1273 = vset.pattern.permute.xlu0 0
        %1274 = vperm.xlu0 %1273, %v326
        %v1275 = vpop.permute.xlu0 %1274
        %1278 = vset.pattern.permute.xlu0 0
        %1279 = vperm.xlu0 %1278, %v327
        %v1280 = vpop.permute.xlu0 %1279
        %1283 = vset.pattern.permute.xlu0 0
        %1284 = vperm.xlu0 %1283, %v328
        %v1285 = vpop.permute.xlu0 %1284
        %1288 = vset.pattern.permute.xlu0 0
        %1289 = vperm.xlu0 %1288, %v329
        %v1290 = vpop.permute.xlu0 %1289
        %1293 = vset.pattern.permute.xlu0 0
        %1294 = vperm.xlu0 %1293, %v330
        %v1295 = vpop.permute.xlu0 %1294
        %1298 = vset.pattern.permute.xlu0 0
        %1299 = vperm.xlu0 %1298, %v331
        %v1300 = vpop.permute.xlu0 %1299
        %1303 = vset.pattern.permute.xlu0 0
        %1304 = vperm.xlu0 %1303, %v332
        %v1305 = vpop.permute.xlu0 %1304
        %1308 = vset.pattern.permute.xlu0 0
        %1309 = vperm.xlu0 %1308, %v333
        %v1310 = vpop.permute.xlu0 %1309
        %1313 = vset.pattern.permute.xlu0 0
        %1314 = vperm.xlu0 %1313, %v334
        %v1315 = vpop.permute.xlu0 %1314
        %1318 = vset.pattern.permute.xlu0 0
        %1319 = vperm.xlu0 %1318, %v335
        %v1320 = vpop.permute.xlu0 %1319
        %1323 = vset.pattern.permute.xlu0 0
        %1324 = vperm.xlu0 %1323, %v336
        %v1325 = vpop.permute.xlu0 %1324
        %1328 = vset.pattern.permute.xlu0 0
        %1329 = vperm.xlu0 %1328, %v337
        %v1330 = vpop.permute.xlu0 %1329
        %1333 = vset.pattern.permute.xlu0 0
        %1334 = vperm.xlu0 %1333, %v338
        %v1335 = vpop.permute.xlu0 %1334
        %1338 = vset.pattern.permute.xlu0 0
        %1339 = vperm.xlu0 %1338, %v339
        %v1340 = vpop.permute.xlu0 %1339
        %1343 = vset.pattern.permute.xlu0 0
        %1344 = vperm.xlu0 %1343, %v340
        %v1345 = vpop.permute.xlu0 %1344
        %1348 = vset.pattern.permute.xlu0 0
        %1349 = vperm.xlu0 %1348, %v341
        %v1350 = vpop.permute.xlu0 %1349
        %1353 = vset.pattern.permute.xlu0 0
        %1354 = vperm.xlu0 %1353, %v342
        %v1355 = vpop.permute.xlu0 %1354
        %1358 = vset.pattern.permute.xlu0 0
        %1359 = vperm.xlu0 %1358, %v343
        %v1360 = vpop.permute.xlu0 %1359
        %1363 = vset.pattern.permute.xlu0 0
        %1364 = vperm.xlu0 %1363, %v344
        %v1365 = vpop.permute.xlu0 %1364
        %1368 = vset.pattern.permute.xlu0 0
        %1369 = vperm.xlu0 %1368, %v345
        %v1370 = vpop.permute.xlu0 %1369
        %1373 = vset.pattern.permute.xlu0 0
        %1374 = vperm.xlu0 %1373, %v346
        %v1375 = vpop.permute.xlu0 %1374
        %1378 = vset.pattern.permute.xlu0 0
        %1379 = vperm.xlu0 %1378, %v347
        %v1380 = vpop.permute.xlu0 %1379
        %1383 = vset.pattern.permute.xlu0 0
        %1384 = vperm.xlu0 %1383, %v348
        %v1385 = vpop.permute.xlu0 %1384
        %1388 = vset.pattern.permute.xlu0 0
        %1389 = vperm.xlu0 %1388, %v349
        %v1390 = vpop.permute.xlu0 %1389
        %1393 = vset.pattern.permute.xlu0 0
        %1394 = vperm.xlu0 %1393, %v350
        %v1395 = vpop.permute.xlu0 %1394
        %1398 = vset.pattern.permute.xlu0 0
        %1399 = vperm.xlu0 %1398, %v351
        %v1400 = vpop.permute.xlu0 %1399
        %1403 = vset.pattern.permute.xlu0 0
        %1404 = vperm.xlu0 %1403, %v352
        %v1405 = vpop.permute.xlu0 %1404
        %1408 = vset.pattern.permute.xlu0 0
        %1409 = vperm.xlu0 %1408, %v353
        %v1410 = vpop.permute.xlu0 %1409
        %1413 = vset.pattern.permute.xlu0 0
        %1414 = vperm.xlu0 %1413, %v354
        %v1415 = vpop.permute.xlu0 %1414
        %1418 = vset.pattern.permute.xlu0 0
        %1419 = vperm.xlu0 %1418, %v355
        %v1420 = vpop.permute.xlu0 %1419
        %1423 = vset.pattern.permute.xlu0 0
        %1424 = vperm.xlu0 %1423, %v356
        %v1425 = vpop.permute.xlu0 %1424
        %1428 = vset.pattern.permute.xlu0 0
        %1429 = vperm.xlu0 %1428, %v357
        %v1430 = vpop.permute.xlu0 %1429
        %1433 = vset.pattern.permute.xlu0 0
        %1434 = vperm.xlu0 %1433, %v358
        %v1435 = vpop.permute.xlu0 %1434
        %1438 = vset.pattern.permute.xlu0 0
        %1439 = vperm.xlu0 %1438, %v359
        %v1440 = vpop.permute.xlu0 %1439
        %1443 = vset.pattern.permute.xlu0 0
        %1444 = vperm.xlu0 %1443, %v360
        %v1445 = vpop.permute.xlu0 %1444
        %1448 = vset.pattern.permute.xlu0 0
        %1449 = vperm.xlu0 %1448, %v361
        %v1450 = vpop.permute.xlu0 %1449
        %1453 = vset.pattern.permute.xlu0 0
        %1454 = vperm.xlu0 %1453, %v362
        %v1455 = vpop.permute.xlu0 %1454
        %1458 = vset.pattern.permute.xlu0 0
        %1459 = vperm.xlu0 %1458, %v363
        %v1460 = vpop.permute.xlu0 %1459
        %1463 = vset.pattern.permute.xlu0 0
        %1464 = vperm.xlu0 %1463, %v364
        %v1465 = vpop.permute.xlu0 %1464
        %1468 = vset.pattern.permute.xlu0 0
        %1469 = vperm.xlu0 %1468, %v365
        %v1470 = vpop.permute.xlu0 %1469
        %1473 = vset.pattern.permute.xlu0 0
        %1474 = vperm.xlu0 %1473, %v366
        %v1475 = vpop.permute.xlu0 %1474
        %1478 = vset.pattern.permute.xlu0 0
        %1479 = vperm.xlu0 %1478, %v367
        %v1480 = vpop.permute.xlu0 %1479
        %1483 = vset.pattern.permute.xlu0 0
        %1484 = vperm.xlu0 %1483, %v368
        %v1485 = vpop.permute.xlu0 %1484
        %1488 = vset.pattern.permute.xlu0 0
        %1489 = vperm.xlu0 %1488, %v369
        %v1490 = vpop.permute.xlu0 %1489
        %1493 = vset.pattern.permute.xlu0 0
        %1494 = vperm.xlu0 %1493, %v370
        %v1495 = vpop.permute.xlu0 %1494
        %1498 = vset.pattern.permute.xlu0 0
        %1499 = vperm.xlu0 %1498, %v371
        %v1500 = vpop.permute.xlu0 %1499
        %1503 = vset.pattern.permute.xlu0 0
        %1504 = vperm.xlu0 %1503, %v372
        %v1505 = vpop.permute.xlu0 %1504
        %1508 = vset.pattern.permute.xlu0 0
        %1509 = vperm.xlu0 %1508, %v373
        %v1510 = vpop.permute.xlu0 %1509
        %1513 = vset.pattern.permute.xlu0 0
        %1514 = vperm.xlu0 %1513, %v374
        %v1515 = vpop.permute.xlu0 %1514
        %1518 = vset.pattern.permute.xlu0 0
        %1519 = vperm.xlu0 %1518, %v375
        %v1520 = vpop.permute.xlu0 %1519
        %1523 = vset.pattern.permute.xlu0 0
        %1524 = vperm.xlu0 %1523, %v376
        %v1525 = vpop.permute.xlu0 %1524
        %1528 = vset.pattern.permute.xlu0 0
        %1529 = vperm.xlu0 %1528, %v377
        %v1530 = vpop.permute.xlu0 %1529
        %1533 = vset.pattern.permute.xlu0 0
        %1534 = vperm.xlu0 %1533, %v378
        %v1535 = vpop.permute.xlu0 %1534
        %1538 = vset.pattern.permute.xlu0 0
        %1539 = vperm.xlu0 %1538, %v379
        %v1540 = vpop.permute.xlu0 %1539
        %1543 = vset.pattern.permute.xlu0 0
        %1544 = vperm.xlu0 %1543, %v380
        %v1545 = vpop.permute.xlu0 %1544
        %1548 = vset.pattern.permute.xlu0 0
        %1549 = vperm.xlu0 %1548, %v381
        %v1550 = vpop.permute.xlu0 %1549
        %1553 = vset.pattern.permute.xlu0 0
        %1554 = vperm.xlu0 %1553, %v382
        %v1555 = vpop.permute.xlu0 %1554
        %1558 = vset.pattern.permute.xlu0 0
        %1559 = vperm.xlu0 %1558, %v383
        %v1560 = vpop.permute.xlu0 %1559
        %1563 = vset.pattern.permute.xlu0 0
        %1564 = vperm.xlu0 %1563, %v384
        %v1565 = vpop.permute.xlu0 %1564
        %1568 = vset.pattern.permute.xlu0 0
        %1569 = vperm.xlu0 %1568, %v385
        %v1570 = vpop.permute.xlu0 %1569
        %1573 = vset.pattern.permute.xlu0 0
        %1574 = vperm.xlu0 %1573, %v386
        %v1575 = vpop.permute.xlu0 %1574
        %1578 = vset.pattern.permute.xlu0 0
        %1579 = vperm.xlu0 %1578, %v387
        %v1580 = vpop.permute.xlu0 %1579
        %1583 = vset.pattern.permute.xlu0 0
        %1584 = vperm.xlu0 %1583, %v388
        %v1585 = vpop.permute.xlu0 %1584
        %1588 = vset.pattern.permute.xlu0 0
        %1589 = vperm.xlu0 %1588, %v389
        %v1590 = vpop.permute.xlu0 %1589
        %1593 = vset.pattern.permute.xlu0 0
        %1594 = vperm.xlu0 %1593, %v390
        %v1595 = vpop.permute.xlu0 %1594
        %1598 = vset.pattern.permute.xlu0 0
        %1599 = vperm.xlu0 %1598, %v391
        %v1600 = vpop.permute.xlu0 %1599
        %1603 = vset.pattern.permute.xlu0 0
        %1604 = vperm.xlu0 %1603, %v392
        %v1605 = vpop.permute.xlu0 %1604
        %1608 = vset.pattern.permute.xlu0 0
        %1609 = vperm.xlu0 %1608, %v393
        %v1610 = vpop.permute.xlu0 %1609
        %1613 = vset.pattern.permute.xlu0 0
        %1614 = vperm.xlu0 %1613, %v394
        %v1615 = vpop.permute.xlu0 %1614
        %1618 = vset.pattern.permute.xlu0 0
        %1619 = vperm.xlu0 %1618, %v395
        %v1620 = vpop.permute.xlu0 %1619
        %1623 = vset.pattern.permute.xlu0 0
        %1624 = vperm.xlu0 %1623, %v396
        %v1625 = vpop.permute.xlu0 %1624
        %1628 = vset.pattern.permute.xlu0 0
        %1629 = vperm.xlu0 %1628, %v397
        %v1630 = vpop.permute.xlu0 %1629
        %1633 = vset.pattern.permute.xlu0 0
        %1634 = vperm.xlu0 %1633, %v398
        %v1635 = vpop.permute.xlu0 %1634
        %1638 = vset.pattern.permute.xlu0 0
        %1639 = vperm.xlu0 %1638, %v399
        %v1640 = vpop.permute.xlu0 %1639
        %1643 = vset.pattern.permute.xlu0 0
        %1644 = vperm.xlu0 %1643, %v400
        %v1645 = vpop.permute.xlu0 %1644
        %1648 = vset.pattern.permute.xlu0 0
        %1649 = vperm.xlu0 %1648, %v401
        %v1650 = vpop.permute.xlu0 %1649
        %1653 = vset.pattern.permute.xlu0 0
        %1654 = vperm.xlu0 %1653, %v402
        %v1655 = vpop.permute.xlu0 %1654
        %1658 = vset.pattern.permute.xlu0 0
        %1659 = vperm.xlu0 %1658, %v403
        %v1660 = vpop.permute.xlu0 %1659
        %1663 = vset.pattern.permute.xlu0 0
        %1664 = vperm.xlu0 %1663, %v404
        %v1665 = vpop.permute.xlu0 %1664
        %1668 = vset.pattern.permute.xlu0 0
        %1669 = vperm.xlu0 %1668, %v405
        %v1670 = vpop.permute.xlu0 %1669
        %1673 = vset.pattern.permute.xlu0 0
        %1674 = vperm.xlu0 %1673, %v406
        %v1675 = vpop.permute.xlu0 %1674
        %1678 = vset.pattern.permute.xlu0 0
        %1679 = vperm.xlu0 %1678, %v407
        %v1680 = vpop.permute.xlu0 %1679
        %1683 = vset.pattern.permute.xlu0 0
        %1684 = vperm.xlu0 %1683, %v408
        %v1685 = vpop.permute.xlu0 %1684
        %1688 = vset.pattern.permute.xlu0 0
        %1689 = vperm.xlu0 %1688, %v409
        %v1690 = vpop.permute.xlu0 %1689
        %1693 = vset.pattern.permute.xlu0 0
        %1694 = vperm.xlu0 %1693, %v410
        %v1695 = vpop.permute.xlu0 %1694
        %1698 = vset.pattern.permute.xlu0 0
        %1699 = vperm.xlu0 %1698, %v411
        %v1700 = vpop.permute.xlu0 %1699
        %1703 = vset.pattern.permute.xlu0 0
        %1704 = vperm.xlu0 %1703, %v412
        %v1705 = vpop.permute.xlu0 %1704
        %1708 = vset.pattern.permute.xlu0 0
        %1709 = vperm.xlu0 %1708, %v413
        %v1710 = vpop.permute.xlu0 %1709
        %1713 = vset.pattern.permute.xlu0 0
        %1714 = vperm.xlu0 %1713, %v414
        %v1715 = vpop.permute.xlu0 %1714
        %1718 = vset.pattern.permute.xlu0 0
        %1719 = vperm.xlu0 %1718, %v415
        %v1720 = vpop.permute.xlu0 %1719
        %1723 = vset.pattern.permute.xlu0 0
        %1724 = vperm.xlu0 %1723, %v416
        %v1725 = vpop.permute.xlu0 %1724
        %v1727 = vmul.f32 %v450, %v436
        %v1728 = vmul.f32 %v455, %v436
        %v1729 = vmul.f32 %v460, %v436
        %v1730 = vmul.f32 %v465, %v436
        %v1731 = vmul.f32 %v470, %v436
        %v1732 = vmul.f32 %v475, %v436
        %v1733 = vmul.f32 %v480, %v436
        %v1734 = vmul.f32 %v485, %v436
        %v1735 = vmul.f32 %v490, %v436
        %v1736 = vmul.f32 %v495, %v436
        %v1737 = vmul.f32 %v500, %v436
        %v1738 = vmul.f32 %v505, %v436
        %v1739 = vmul.f32 %v510, %v436
        %v1740 = vmul.f32 %v515, %v436
        %v1741 = vmul.f32 %v520, %v436
        %v1742 = vmul.f32 %v525, %v436
        %v1743 = vmul.f32 %v530, %v436
        %v1744 = vmul.f32 %v535, %v436
        %v1745 = vmul.f32 %v540, %v436
        %v1746 = vmul.f32 %v545, %v436
        %v1747 = vmul.f32 %v550, %v436
        %v1748 = vmul.f32 %v555, %v436
        %v1749 = vmul.f32 %v560, %v436
        %v1750 = vmul.f32 %v565, %v436
        %v1751 = vmul.f32 %v570, %v436
        %v1752 = vmul.f32 %v575, %v436
        %v1753 = vmul.f32 %v580, %v436
        %v1754 = vmul.f32 %v585, %v436
        %v1755 = vmul.f32 %v590, %v436
        %v1756 = vmul.f32 %v595, %v436
        %v1757 = vmul.f32 %v600, %v436
        %v1758 = vmul.f32 %v605, %v436
        %v1759 = vmul.f32 %v610, %v436
        %v1760 = vmul.f32 %v615, %v436
        %v1761 = vmul.f32 %v620, %v436
        %v1762 = vmul.f32 %v625, %v436
        %v1763 = vmul.f32 %v630, %v436
        %v1764 = vmul.f32 %v635, %v436
        %v1765 = vmul.f32 %v640, %v436
        %v1766 = vmul.f32 %v645, %v436
        %v1767 = vmul.f32 %v650, %v436
        %v1768 = vmul.f32 %v655, %v436
        %v1769 = vmul.f32 %v660, %v436
        %v1770 = vmul.f32 %v665, %v436
        %v1771 = vmul.f32 %v670, %v436
        %v1772 = vmul.f32 %v675, %v436
        %v1773 = vmul.f32 %v680, %v436
        %v1774 = vmul.f32 %v685, %v436
        %v1775 = vmul.f32 %v690, %v436
        %v1776 = vmul.f32 %v695, %v436
        %v1777 = vmul.f32 %v700, %v436
        %v1778 = vmul.f32 %v705, %v436
        %v1779 = vmul.f32 %v710, %v436
        %v1780 = vmul.f32 %v715, %v436
        %v1781 = vmul.f32 %v720, %v436
        %v1782 = vmul.f32 %v725, %v436
        %v1783 = vmul.f32 %v730, %v436
        %v1784 = vmul.f32 %v735, %v436
        %v1785 = vmul.f32 %v740, %v436
        %v1786 = vmul.f32 %v745, %v436
        %v1787 = vmul.f32 %v750, %v436
        %v1788 = vmul.f32 %v755, %v436
        %v1789 = vmul.f32 %v760, %v436
        %v1790 = vmul.f32 %v765, %v436
        %v1791 = vmul.f32 %v770, %v436
        %v1792 = vmul.f32 %v775, %v436
        %v1793 = vmul.f32 %v780, %v436
        %v1794 = vmul.f32 %v785, %v436
        %v1795 = vmul.f32 %v790, %v436
        %v1796 = vmul.f32 %v795, %v436
        %v1797 = vmul.f32 %v800, %v436
        %v1798 = vmul.f32 %v805, %v436
        %v1799 = vmul.f32 %v810, %v436
        %v1800 = vmul.f32 %v815, %v436
        %v1801 = vmul.f32 %v820, %v436
        %v1802 = vmul.f32 %v825, %v436
        %v1803 = vmul.f32 %v830, %v436
        %v1804 = vmul.f32 %v835, %v436
        %v1805 = vmul.f32 %v840, %v436
        %v1806 = vmul.f32 %v845, %v436
        %v1807 = vmul.f32 %v850, %v436
        %v1808 = vmul.f32 %v855, %v436
        %v1809 = vmul.f32 %v860, %v436
        %v1810 = vmul.f32 %v865, %v436
        %v1811 = vmul.f32 %v870, %v436
        %v1812 = vmul.f32 %v875, %v436
        %v1813 = vmul.f32 %v880, %v436
        %v1814 = vmul.f32 %v885, %v436
        %v1815 = vmul.f32 %v890, %v436
        %v1816 = vmul.f32 %v895, %v436
        %v1817 = vmul.f32 %v900, %v436
        %v1818 = vmul.f32 %v905, %v436
        %v1819 = vmul.f32 %v910, %v436
        %v1820 = vmul.f32 %v915, %v436
        %v1821 = vmul.f32 %v920, %v436
        %v1822 = vmul.f32 %v925, %v436
        %v1823 = vmul.f32 %v930, %v436
        %v1824 = vmul.f32 %v935, %v436
        %v1825 = vmul.f32 %v940, %v436
        %v1826 = vmul.f32 %v945, %v436
        %v1827 = vmul.f32 %v950, %v436
        %v1828 = vmul.f32 %v955, %v436
        %v1829 = vmul.f32 %v960, %v436
        %v1830 = vmul.f32 %v965, %v436
        %v1831 = vmul.f32 %v970, %v436
        %v1832 = vmul.f32 %v975, %v436
        %v1833 = vmul.f32 %v980, %v436
        %v1834 = vmul.f32 %v985, %v436
        %v1835 = vmul.f32 %v990, %v436
        %v1836 = vmul.f32 %v995, %v436
        %v1837 = vmul.f32 %v1000, %v436
        %v1838 = vmul.f32 %v1005, %v436
        %v1839 = vmul.f32 %v1010, %v436
        %v1840 = vmul.f32 %v1015, %v436
        %v1841 = vmul.f32 %v1020, %v436
        %v1842 = vmul.f32 %v1025, %v436
        %v1843 = vmul.f32 %v1030, %v436
        %v1844 = vmul.f32 %v1035, %v436
        %v1845 = vmul.f32 %v1040, %v436
        %v1846 = vmul.f32 %v1045, %v436
        %v1847 = vmul.f32 %v1050, %v436
        %v1848 = vmul.f32 %v1055, %v436
        %v1849 = vmul.f32 %v1060, %v436
        %v1850 = vmul.f32 %v1065, %v436
        %v1851 = vmul.f32 %v1070, %v436
        %v1852 = vmul.f32 %v1075, %v436
        %v1853 = vmul.f32 %v1080, %v436
        %v1854 = vmul.f32 %v1085, %v436
        %v1855 = vmul.f32 %v1090, %v436
        %v1856 = vmul.f32 %v1095, %v436
        %v1857 = vmul.f32 %v1100, %v436
        %v1858 = vmul.f32 %v1105, %v436
        %v1859 = vmul.f32 %v1110, %v436
        %v1860 = vmul.f32 %v1115, %v436
        %v1861 = vmul.f32 %v1120, %v436
        %v1862 = vmul.f32 %v1125, %v436
        %v1863 = vmul.f32 %v1130, %v436
        %v1864 = vmul.f32 %v1135, %v436
        %v1865 = vmul.f32 %v1140, %v436
        %v1866 = vmul.f32 %v1145, %v436
        %v1867 = vmul.f32 %v1150, %v436
        %v1868 = vmul.f32 %v1155, %v436
        %v1869 = vmul.f32 %v1160, %v436
        %v1870 = vmul.f32 %v1165, %v436
        %v1871 = vmul.f32 %v1170, %v436
        %v1872 = vmul.f32 %v1175, %v436
        %v1873 = vmul.f32 %v1180, %v436
        %v1874 = vmul.f32 %v1185, %v436
        %v1875 = vmul.f32 %v1190, %v436
        %v1876 = vmul.f32 %v1195, %v436
        %v1877 = vmul.f32 %v1200, %v436
        %v1878 = vmul.f32 %v1205, %v436
        %v1879 = vmul.f32 %v1210, %v436
        %v1880 = vmul.f32 %v1215, %v436
        %v1881 = vmul.f32 %v1220, %v436
        %v1882 = vmul.f32 %v1225, %v436
        %v1883 = vmul.f32 %v1230, %v436
        %v1884 = vmul.f32 %v1235, %v436
        %v1885 = vmul.f32 %v1240, %v436
        %v1886 = vmul.f32 %v1245, %v436
        %v1887 = vmul.f32 %v1250, %v436
        %v1888 = vmul.f32 %v1255, %v436
        %v1889 = vmul.f32 %v1260, %v436
        %v1890 = vmul.f32 %v1265, %v436
        %v1891 = vmul.f32 %v1270, %v436
        %v1892 = vmul.f32 %v1275, %v436
        %v1893 = vmul.f32 %v1280, %v436
        %v1894 = vmul.f32 %v1285, %v436
        %v1895 = vmul.f32 %v1290, %v436
        %v1896 = vmul.f32 %v1295, %v436
        %v1897 = vmul.f32 %v1300, %v436
        %v1898 = vmul.f32 %v1305, %v436
        %v1899 = vmul.f32 %v1310, %v436
        %v1900 = vmul.f32 %v1315, %v436
        %v1901 = vmul.f32 %v1320, %v436
        %v1902 = vmul.f32 %v1325, %v436
        %v1903 = vmul.f32 %v1330, %v436
        %v1904 = vmul.f32 %v1335, %v436
        %v1905 = vmul.f32 %v1340, %v436
        %v1906 = vmul.f32 %v1345, %v436
        %v1907 = vmul.f32 %v1350, %v436
        %v1908 = vmul.f32 %v1355, %v436
        %v1909 = vmul.f32 %v1360, %v436
        %v1910 = vmul.f32 %v1365, %v436
        %v1911 = vmul.f32 %v1370, %v436
        %v1912 = vmul.f32 %v1375, %v436
        %v1913 = vmul.f32 %v1380, %v436
        %v1914 = vmul.f32 %v1385, %v436
        %v1915 = vmul.f32 %v1390, %v436
        %v1916 = vmul.f32 %v1395, %v436
        %v1917 = vmul.f32 %v1400, %v436
        %v1918 = vmul.f32 %v1405, %v436
        %v1919 = vmul.f32 %v1410, %v436
        %v1920 = vmul.f32 %v1415, %v436
        %v1921 = vmul.f32 %v1420, %v436
        %v1922 = vmul.f32 %v1425, %v436
        %v1923 = vmul.f32 %v1430, %v436
        %v1924 = vmul.f32 %v1435, %v436
        %v1925 = vmul.f32 %v1440, %v436
        %v1926 = vmul.f32 %v1445, %v436
        %v1927 = vmul.f32 %v1450, %v436
        %v1928 = vmul.f32 %v1455, %v436
        %v1929 = vmul.f32 %v1460, %v436
        %v1930 = vmul.f32 %v1465, %v436
        %v1931 = vmul.f32 %v1470, %v436
        %v1932 = vmul.f32 %v1475, %v436
        %v1933 = vmul.f32 %v1480, %v436
        %v1934 = vmul.f32 %v1485, %v436
        %v1935 = vmul.f32 %v1490, %v436
        %v1936 = vmul.f32 %v1495, %v436
        %v1937 = vmul.f32 %v1500, %v436
        %v1938 = vmul.f32 %v1505, %v436
        %v1939 = vmul.f32 %v1510, %v436
        %v1940 = vmul.f32 %v1515, %v436
        %v1941 = vmul.f32 %v1520, %v436
        %v1942 = vmul.f32 %v1525, %v436
        %v1943 = vmul.f32 %v1530, %v436
        %v1944 = vmul.f32 %v1535, %v436
        %v1945 = vmul.f32 %v1540, %v436
        %v1946 = vmul.f32 %v1545, %v436
        %v1947 = vmul.f32 %v1550, %v436
        %v1948 = vmul.f32 %v1555, %v436
        %v1949 = vmul.f32 %v1560, %v436
        %v1950 = vmul.f32 %v1565, %v436
        %v1951 = vmul.f32 %v1570, %v436
        %v1952 = vmul.f32 %v1575, %v436
        %v1953 = vmul.f32 %v1580, %v436
        %v1954 = vmul.f32 %v1585, %v436
        %v1955 = vmul.f32 %v1590, %v436
        %v1956 = vmul.f32 %v1595, %v436
        %v1957 = vmul.f32 %v1600, %v436
        %v1958 = vmul.f32 %v1605, %v436
        %v1959 = vmul.f32 %v1610, %v436
        %v1960 = vmul.f32 %v1615, %v436
        %v1961 = vmul.f32 %v1620, %v436
        %v1962 = vmul.f32 %v1625, %v436
        %v1963 = vmul.f32 %v1630, %v436
        %v1964 = vmul.f32 %v1635, %v436
        %v1965 = vmul.f32 %v1640, %v436
        %v1966 = vmul.f32 %v1645, %v436
        %v1967 = vmul.f32 %v1650, %v436
        %v1968 = vmul.f32 %v1655, %v436
        %v1969 = vmul.f32 %v1660, %v436
        %v1970 = vmul.f32 %v1665, %v436
        %v1971 = vmul.f32 %v1670, %v436
        %v1972 = vmul.f32 %v1675, %v436
        %v1973 = vmul.f32 %v1680, %v436
        %v1974 = vmul.f32 %v1685, %v436
        %v1975 = vmul.f32 %v1690, %v436
        %v1976 = vmul.f32 %v1695, %v436
        %v1977 = vmul.f32 %v1700, %v436
        %v1978 = vmul.f32 %v1705, %v436
        %v1979 = vmul.f32 %v1710, %v436
        %v1980 = vmul.f32 %v1715, %v436
        %v1981 = vmul.f32 %v1720, %v436
        %v1982 = vmul.f32 %v1725, %v436
        %1983 = vset.pattern.permute.xlu0 1
        %1984 = vperm.xlu0 %1983, %v161
        %v1985 = vpop.permute.xlu0 %1984
        %1987 = vset.pattern.permute.xlu0 1
        %1988 = vperm.xlu0 %1987, %v162
        %v1989 = vpop.permute.xlu0 %1988
        %1991 = vset.pattern.permute.xlu0 1
        %1992 = vperm.xlu0 %1991, %v163
        %v1993 = vpop.permute.xlu0 %1992
        %1995 = vset.pattern.permute.xlu0 1
        %1996 = vperm.xlu0 %1995, %v164
        %v1997 = vpop.permute.xlu0 %1996
        %1999 = vset.pattern.permute.xlu0 1
        %2000 = vperm.xlu0 %1999, %v165
        %v2001 = vpop.permute.xlu0 %2000
        %2003 = vset.pattern.permute.xlu0 1
        %2004 = vperm.xlu0 %2003, %v166
        %v2005 = vpop.permute.xlu0 %2004
        %2007 = vset.pattern.permute.xlu0 1
        %2008 = vperm.xlu0 %2007, %v167
        %v2009 = vpop.permute.xlu0 %2008
        %2011 = vset.pattern.permute.xlu0 1
        %2012 = vperm.xlu0 %2011, %v168
        %v2013 = vpop.permute.xlu0 %2012
        %2015 = vset.pattern.permute.xlu0 1
        %2016 = vperm.xlu0 %2015, %v169
        %v2017 = vpop.permute.xlu0 %2016
        %2019 = vset.pattern.permute.xlu0 1
        %2020 = vperm.xlu0 %2019, %v170
        %v2021 = vpop.permute.xlu0 %2020
        %2023 = vset.pattern.permute.xlu0 1
        %2024 = vperm.xlu0 %2023, %v171
        %v2025 = vpop.permute.xlu0 %2024
        %2027 = vset.pattern.permute.xlu0 1
        %2028 = vperm.xlu0 %2027, %v172
        %v2029 = vpop.permute.xlu0 %2028
        %2031 = vset.pattern.permute.xlu0 1
        %2032 = vperm.xlu0 %2031, %v173
        %v2033 = vpop.permute.xlu0 %2032
        %2035 = vset.pattern.permute.xlu0 1
        %2036 = vperm.xlu0 %2035, %v174
        %v2037 = vpop.permute.xlu0 %2036
        %2039 = vset.pattern.permute.xlu0 1
        %2040 = vperm.xlu0 %2039, %v175
        %v2041 = vpop.permute.xlu0 %2040
        %2043 = vset.pattern.permute.xlu0 1
        %2044 = vperm.xlu0 %2043, %v176
        %v2045 = vpop.permute.xlu0 %2044
        %2047 = vset.pattern.permute.xlu0 1
        %2048 = vperm.xlu0 %2047, %v177
        %v2049 = vpop.permute.xlu0 %2048
        %2051 = vset.pattern.permute.xlu0 1
        %2052 = vperm.xlu0 %2051, %v178
        %v2053 = vpop.permute.xlu0 %2052
        %2055 = vset.pattern.permute.xlu0 1
        %2056 = vperm.xlu0 %2055, %v179
        %v2057 = vpop.permute.xlu0 %2056
        %2059 = vset.pattern.permute.xlu0 1
        %2060 = vperm.xlu0 %2059, %v180
        %v2061 = vpop.permute.xlu0 %2060
        %2063 = vset.pattern.permute.xlu0 1
        %2064 = vperm.xlu0 %2063, %v181
        %v2065 = vpop.permute.xlu0 %2064
        %2067 = vset.pattern.permute.xlu0 1
        %2068 = vperm.xlu0 %2067, %v182
        %v2069 = vpop.permute.xlu0 %2068
        %2071 = vset.pattern.permute.xlu0 1
        %2072 = vperm.xlu0 %2071, %v183
        %v2073 = vpop.permute.xlu0 %2072
        %2075 = vset.pattern.permute.xlu0 1
        %2076 = vperm.xlu0 %2075, %v184
        %v2077 = vpop.permute.xlu0 %2076
        %2079 = vset.pattern.permute.xlu0 1
        %2080 = vperm.xlu0 %2079, %v185
        %v2081 = vpop.permute.xlu0 %2080
        %2083 = vset.pattern.permute.xlu0 1
        %2084 = vperm.xlu0 %2083, %v186
        %v2085 = vpop.permute.xlu0 %2084
        %2087 = vset.pattern.permute.xlu0 1
        %2088 = vperm.xlu0 %2087, %v187
        %v2089 = vpop.permute.xlu0 %2088
        %2091 = vset.pattern.permute.xlu0 1
        %2092 = vperm.xlu0 %2091, %v188
        %v2093 = vpop.permute.xlu0 %2092
        %2095 = vset.pattern.permute.xlu0 1
        %2096 = vperm.xlu0 %2095, %v189
        %v2097 = vpop.permute.xlu0 %2096
        %2099 = vset.pattern.permute.xlu0 1
        %2100 = vperm.xlu0 %2099, %v190
        %v2101 = vpop.permute.xlu0 %2100
        %2103 = vset.pattern.permute.xlu0 1
        %2104 = vperm.xlu0 %2103, %v191
        %v2105 = vpop.permute.xlu0 %2104
        %2107 = vset.pattern.permute.xlu0 1
        %2108 = vperm.xlu0 %2107, %v192
        %v2109 = vpop.permute.xlu0 %2108
        %2111 = vset.pattern.permute.xlu0 1
        %2112 = vperm.xlu0 %2111, %v193
        %v2113 = vpop.permute.xlu0 %2112
        %2115 = vset.pattern.permute.xlu0 1
        %2116 = vperm.xlu0 %2115, %v194
        %v2117 = vpop.permute.xlu0 %2116
        %2119 = vset.pattern.permute.xlu0 1
        %2120 = vperm.xlu0 %2119, %v195
        %v2121 = vpop.permute.xlu0 %2120
        %2123 = vset.pattern.permute.xlu0 1
        %2124 = vperm.xlu0 %2123, %v196
        %v2125 = vpop.permute.xlu0 %2124
        %2127 = vset.pattern.permute.xlu0 1
        %2128 = vperm.xlu0 %2127, %v197
        %v2129 = vpop.permute.xlu0 %2128
        %2131 = vset.pattern.permute.xlu0 1
        %2132 = vperm.xlu0 %2131, %v198
        %v2133 = vpop.permute.xlu0 %2132
        %2135 = vset.pattern.permute.xlu0 1
        %2136 = vperm.xlu0 %2135, %v199
        %v2137 = vpop.permute.xlu0 %2136
        %2139 = vset.pattern.permute.xlu0 1
        %2140 = vperm.xlu0 %2139, %v200
        %v2141 = vpop.permute.xlu0 %2140
        %2143 = vset.pattern.permute.xlu0 1
        %2144 = vperm.xlu0 %2143, %v201
        %v2145 = vpop.permute.xlu0 %2144
        %2147 = vset.pattern.permute.xlu0 1
        %2148 = vperm.xlu0 %2147, %v202
        %v2149 = vpop.permute.xlu0 %2148
        %2151 = vset.pattern.permute.xlu0 1
        %2152 = vperm.xlu0 %2151, %v203
        %v2153 = vpop.permute.xlu0 %2152
        %2155 = vset.pattern.permute.xlu0 1
        %2156 = vperm.xlu0 %2155, %v204
        %v2157 = vpop.permute.xlu0 %2156
        %2159 = vset.pattern.permute.xlu0 1
        %2160 = vperm.xlu0 %2159, %v205
        %v2161 = vpop.permute.xlu0 %2160
        %2163 = vset.pattern.permute.xlu0 1
        %2164 = vperm.xlu0 %2163, %v206
        %v2165 = vpop.permute.xlu0 %2164
        %2167 = vset.pattern.permute.xlu0 1
        %2168 = vperm.xlu0 %2167, %v207
        %v2169 = vpop.permute.xlu0 %2168
        %2171 = vset.pattern.permute.xlu0 1
        %2172 = vperm.xlu0 %2171, %v208
        %v2173 = vpop.permute.xlu0 %2172
        %2175 = vset.pattern.permute.xlu0 1
        %2176 = vperm.xlu0 %2175, %v209
        %v2177 = vpop.permute.xlu0 %2176
        %2179 = vset.pattern.permute.xlu0 1
        %2180 = vperm.xlu0 %2179, %v210
        %v2181 = vpop.permute.xlu0 %2180
        %2183 = vset.pattern.permute.xlu0 1
        %2184 = vperm.xlu0 %2183, %v211
        %v2185 = vpop.permute.xlu0 %2184
        %2187 = vset.pattern.permute.xlu0 1
        %2188 = vperm.xlu0 %2187, %v212
        %v2189 = vpop.permute.xlu0 %2188
        %2191 = vset.pattern.permute.xlu0 1
        %2192 = vperm.xlu0 %2191, %v213
        %v2193 = vpop.permute.xlu0 %2192
        %2195 = vset.pattern.permute.xlu0 1
        %2196 = vperm.xlu0 %2195, %v214
        %v2197 = vpop.permute.xlu0 %2196
        %2199 = vset.pattern.permute.xlu0 1
        %2200 = vperm.xlu0 %2199, %v215
        %v2201 = vpop.permute.xlu0 %2200
        %2203 = vset.pattern.permute.xlu0 1
        %2204 = vperm.xlu0 %2203, %v216
        %v2205 = vpop.permute.xlu0 %2204
        %2207 = vset.pattern.permute.xlu0 1
        %2208 = vperm.xlu0 %2207, %v217
        %v2209 = vpop.permute.xlu0 %2208
        %2211 = vset.pattern.permute.xlu0 1
        %2212 = vperm.xlu0 %2211, %v218
        %v2213 = vpop.permute.xlu0 %2212
        %2215 = vset.pattern.permute.xlu0 1
        %2216 = vperm.xlu0 %2215, %v219
        %v2217 = vpop.permute.xlu0 %2216
        %2219 = vset.pattern.permute.xlu0 1
        %2220 = vperm.xlu0 %2219, %v220
        %v2221 = vpop.permute.xlu0 %2220
        %2223 = vset.pattern.permute.xlu0 1
        %2224 = vperm.xlu0 %2223, %v221
        %v2225 = vpop.permute.xlu0 %2224
        %2227 = vset.pattern.permute.xlu0 1
        %2228 = vperm.xlu0 %2227, %v222
        %v2229 = vpop.permute.xlu0 %2228
        %2231 = vset.pattern.permute.xlu0 1
        %2232 = vperm.xlu0 %2231, %v223
        %v2233 = vpop.permute.xlu0 %2232
        %2235 = vset.pattern.permute.xlu0 1
        %2236 = vperm.xlu0 %2235, %v224
        %v2237 = vpop.permute.xlu0 %2236
        %2239 = vset.pattern.permute.xlu0 1
        %2240 = vperm.xlu0 %2239, %v225
        %v2241 = vpop.permute.xlu0 %2240
        %2243 = vset.pattern.permute.xlu0 1
        %2244 = vperm.xlu0 %2243, %v226
        %v2245 = vpop.permute.xlu0 %2244
        %2247 = vset.pattern.permute.xlu0 1
        %2248 = vperm.xlu0 %2247, %v227
        %v2249 = vpop.permute.xlu0 %2248
        %2251 = vset.pattern.permute.xlu0 1
        %2252 = vperm.xlu0 %2251, %v228
        %v2253 = vpop.permute.xlu0 %2252
        %2255 = vset.pattern.permute.xlu0 1
        %2256 = vperm.xlu0 %2255, %v229
        %v2257 = vpop.permute.xlu0 %2256
        %2259 = vset.pattern.permute.xlu0 1
        %2260 = vperm.xlu0 %2259, %v230
        %v2261 = vpop.permute.xlu0 %2260
        %2263 = vset.pattern.permute.xlu0 1
        %2264 = vperm.xlu0 %2263, %v231
        %v2265 = vpop.permute.xlu0 %2264
        %2267 = vset.pattern.permute.xlu0 1
        %2268 = vperm.xlu0 %2267, %v232
        %v2269 = vpop.permute.xlu0 %2268
        %2271 = vset.pattern.permute.xlu0 1
        %2272 = vperm.xlu0 %2271, %v233
        %v2273 = vpop.permute.xlu0 %2272
        %2275 = vset.pattern.permute.xlu0 1
        %2276 = vperm.xlu0 %2275, %v234
        %v2277 = vpop.permute.xlu0 %2276
        %2279 = vset.pattern.permute.xlu0 1
        %2280 = vperm.xlu0 %2279, %v235
        %v2281 = vpop.permute.xlu0 %2280
        %2283 = vset.pattern.permute.xlu0 1
        %2284 = vperm.xlu0 %2283, %v236
        %v2285 = vpop.permute.xlu0 %2284
        %2287 = vset.pattern.permute.xlu0 1
        %2288 = vperm.xlu0 %2287, %v237
        %v2289 = vpop.permute.xlu0 %2288
        %2291 = vset.pattern.permute.xlu0 1
        %2292 = vperm.xlu0 %2291, %v238
        %v2293 = vpop.permute.xlu0 %2292
        %2295 = vset.pattern.permute.xlu0 1
        %2296 = vperm.xlu0 %2295, %v239
        %v2297 = vpop.permute.xlu0 %2296
        %2299 = vset.pattern.permute.xlu0 1
        %2300 = vperm.xlu0 %2299, %v240
        %v2301 = vpop.permute.xlu0 %2300
        %2303 = vset.pattern.permute.xlu0 1
        %2304 = vperm.xlu0 %2303, %v241
        %v2305 = vpop.permute.xlu0 %2304
        %2307 = vset.pattern.permute.xlu0 1
        %2308 = vperm.xlu0 %2307, %v242
        %v2309 = vpop.permute.xlu0 %2308
        %2311 = vset.pattern.permute.xlu0 1
        %2312 = vperm.xlu0 %2311, %v243
        %v2313 = vpop.permute.xlu0 %2312
        %2315 = vset.pattern.permute.xlu0 1
        %2316 = vperm.xlu0 %2315, %v244
        %v2317 = vpop.permute.xlu0 %2316
        %2319 = vset.pattern.permute.xlu0 1
        %2320 = vperm.xlu0 %2319, %v245
        %v2321 = vpop.permute.xlu0 %2320
        %2323 = vset.pattern.permute.xlu0 1
        %2324 = vperm.xlu0 %2323, %v246
        %v2325 = vpop.permute.xlu0 %2324
        %2327 = vset.pattern.permute.xlu0 1
        %2328 = vperm.xlu0 %2327, %v247
        %v2329 = vpop.permute.xlu0 %2328
        %2331 = vset.pattern.permute.xlu0 1
        %2332 = vperm.xlu0 %2331, %v248
        %v2333 = vpop.permute.xlu0 %2332
        %2335 = vset.pattern.permute.xlu0 1
        %2336 = vperm.xlu0 %2335, %v249
        %v2337 = vpop.permute.xlu0 %2336
        %2339 = vset.pattern.permute.xlu0 1
        %2340 = vperm.xlu0 %2339, %v250
        %v2341 = vpop.permute.xlu0 %2340
        %2343 = vset.pattern.permute.xlu0 1
        %2344 = vperm.xlu0 %2343, %v251
        %v2345 = vpop.permute.xlu0 %2344
        %2347 = vset.pattern.permute.xlu0 1
        %2348 = vperm.xlu0 %2347, %v252
        %v2349 = vpop.permute.xlu0 %2348
        %2351 = vset.pattern.permute.xlu0 1
        %2352 = vperm.xlu0 %2351, %v253
        %v2353 = vpop.permute.xlu0 %2352
        %2355 = vset.pattern.permute.xlu0 1
        %2356 = vperm.xlu0 %2355, %v254
        %v2357 = vpop.permute.xlu0 %2356
        %2359 = vset.pattern.permute.xlu0 1
        %2360 = vperm.xlu0 %2359, %v255
        %v2361 = vpop.permute.xlu0 %2360
        %2363 = vset.pattern.permute.xlu0 1
        %2364 = vperm.xlu0 %2363, %v256
        %v2365 = vpop.permute.xlu0 %2364
        %2367 = vset.pattern.permute.xlu0 1
        %2368 = vperm.xlu0 %2367, %v257
        %v2369 = vpop.permute.xlu0 %2368
        %2371 = vset.pattern.permute.xlu0 1
        %2372 = vperm.xlu0 %2371, %v258
        %v2373 = vpop.permute.xlu0 %2372
        %2375 = vset.pattern.permute.xlu0 1
        %2376 = vperm.xlu0 %2375, %v259
        %v2377 = vpop.permute.xlu0 %2376
        %2379 = vset.pattern.permute.xlu0 1
        %2380 = vperm.xlu0 %2379, %v260
        %v2381 = vpop.permute.xlu0 %2380
        %2383 = vset.pattern.permute.xlu0 1
        %2384 = vperm.xlu0 %2383, %v261
        %v2385 = vpop.permute.xlu0 %2384
        %2387 = vset.pattern.permute.xlu0 1
        %2388 = vperm.xlu0 %2387, %v262
        %v2389 = vpop.permute.xlu0 %2388
        %2391 = vset.pattern.permute.xlu0 1
        %2392 = vperm.xlu0 %2391, %v263
        %v2393 = vpop.permute.xlu0 %2392
        %2395 = vset.pattern.permute.xlu0 1
        %2396 = vperm.xlu0 %2395, %v264
        %v2397 = vpop.permute.xlu0 %2396
        %2399 = vset.pattern.permute.xlu0 1
        %2400 = vperm.xlu0 %2399, %v265
        %v2401 = vpop.permute.xlu0 %2400
        %2403 = vset.pattern.permute.xlu0 1
        %2404 = vperm.xlu0 %2403, %v266
        %v2405 = vpop.permute.xlu0 %2404
        %2407 = vset.pattern.permute.xlu0 1
        %2408 = vperm.xlu0 %2407, %v267
        %v2409 = vpop.permute.xlu0 %2408
        %2411 = vset.pattern.permute.xlu0 1
        %2412 = vperm.xlu0 %2411, %v268
        %v2413 = vpop.permute.xlu0 %2412
        %2415 = vset.pattern.permute.xlu0 1
        %2416 = vperm.xlu0 %2415, %v269
        %v2417 = vpop.permute.xlu0 %2416
        %2419 = vset.pattern.permute.xlu0 1
        %2420 = vperm.xlu0 %2419, %v270
        %v2421 = vpop.permute.xlu0 %2420
        %2423 = vset.pattern.permute.xlu0 1
        %2424 = vperm.xlu0 %2423, %v271
        %v2425 = vpop.permute.xlu0 %2424
        %2427 = vset.pattern.permute.xlu0 1
        %2428 = vperm.xlu0 %2427, %v272
        %v2429 = vpop.permute.xlu0 %2428
        %2431 = vset.pattern.permute.xlu0 1
        %2432 = vperm.xlu0 %2431, %v273
        %v2433 = vpop.permute.xlu0 %2432
        %2435 = vset.pattern.permute.xlu0 1
        %2436 = vperm.xlu0 %2435, %v274
        %v2437 = vpop.permute.xlu0 %2436
        %2439 = vset.pattern.permute.xlu0 1
        %2440 = vperm.xlu0 %2439, %v275
        %v2441 = vpop.permute.xlu0 %2440
        %2443 = vset.pattern.permute.xlu0 1
        %2444 = vperm.xlu0 %2443, %v276
        %v2445 = vpop.permute.xlu0 %2444
        %2447 = vset.pattern.permute.xlu0 1
        %2448 = vperm.xlu0 %2447, %v277
        %v2449 = vpop.permute.xlu0 %2448
        %2451 = vset.pattern.permute.xlu0 1
        %2452 = vperm.xlu0 %2451, %v278
        %v2453 = vpop.permute.xlu0 %2452
        %2455 = vset.pattern.permute.xlu0 1
        %2456 = vperm.xlu0 %2455, %v279
        %v2457 = vpop.permute.xlu0 %2456
        %2459 = vset.pattern.permute.xlu0 1
        %2460 = vperm.xlu0 %2459, %v280
        %v2461 = vpop.permute.xlu0 %2460
        %2463 = vset.pattern.permute.xlu0 1
        %2464 = vperm.xlu0 %2463, %v281
        %v2465 = vpop.permute.xlu0 %2464
        %2467 = vset.pattern.permute.xlu0 1
        %2468 = vperm.xlu0 %2467, %v282
        %v2469 = vpop.permute.xlu0 %2468
        %2471 = vset.pattern.permute.xlu0 1
        %2472 = vperm.xlu0 %2471, %v283
        %v2473 = vpop.permute.xlu0 %2472
        %2475 = vset.pattern.permute.xlu0 1
        %2476 = vperm.xlu0 %2475, %v284
        %v2477 = vpop.permute.xlu0 %2476
        %2479 = vset.pattern.permute.xlu0 1
        %2480 = vperm.xlu0 %2479, %v285
        %v2481 = vpop.permute.xlu0 %2480
        %2483 = vset.pattern.permute.xlu0 1
        %2484 = vperm.xlu0 %2483, %v286
        %v2485 = vpop.permute.xlu0 %2484
        %2487 = vset.pattern.permute.xlu0 1
        %2488 = vperm.xlu0 %2487, %v287
        %v2489 = vpop.permute.xlu0 %2488
        %2491 = vset.pattern.permute.xlu0 1
        %2492 = vperm.xlu0 %2491, %v288
        %v2493 = vpop.permute.xlu0 %2492
        %2495 = vset.pattern.permute.xlu0 1
        %2496 = vperm.xlu0 %2495, %v289
        %v2497 = vpop.permute.xlu0 %2496
        %2499 = vset.pattern.permute.xlu0 1
        %2500 = vperm.xlu0 %2499, %v290
        %v2501 = vpop.permute.xlu0 %2500
        %2503 = vset.pattern.permute.xlu0 1
        %2504 = vperm.xlu0 %2503, %v291
        %v2505 = vpop.permute.xlu0 %2504
        %2507 = vset.pattern.permute.xlu0 1
        %2508 = vperm.xlu0 %2507, %v292
        %v2509 = vpop.permute.xlu0 %2508
        %2511 = vset.pattern.permute.xlu0 1
        %2512 = vperm.xlu0 %2511, %v293
        %v2513 = vpop.permute.xlu0 %2512
        %2515 = vset.pattern.permute.xlu0 1
        %2516 = vperm.xlu0 %2515, %v294
        %v2517 = vpop.permute.xlu0 %2516
        %2519 = vset.pattern.permute.xlu0 1
        %2520 = vperm.xlu0 %2519, %v295
        %v2521 = vpop.permute.xlu0 %2520
        %2523 = vset.pattern.permute.xlu0 1
        %2524 = vperm.xlu0 %2523, %v296
        %v2525 = vpop.permute.xlu0 %2524
        %2527 = vset.pattern.permute.xlu0 1
        %2528 = vperm.xlu0 %2527, %v297
        %v2529 = vpop.permute.xlu0 %2528
        %2531 = vset.pattern.permute.xlu0 1
        %2532 = vperm.xlu0 %2531, %v298
        %v2533 = vpop.permute.xlu0 %2532
        %2535 = vset.pattern.permute.xlu0 1
        %2536 = vperm.xlu0 %2535, %v299
        %v2537 = vpop.permute.xlu0 %2536
        %2539 = vset.pattern.permute.xlu0 1
        %2540 = vperm.xlu0 %2539, %v300
        %v2541 = vpop.permute.xlu0 %2540
        %2543 = vset.pattern.permute.xlu0 1
        %2544 = vperm.xlu0 %2543, %v301
        %v2545 = vpop.permute.xlu0 %2544
        %2547 = vset.pattern.permute.xlu0 1
        %2548 = vperm.xlu0 %2547, %v302
        %v2549 = vpop.permute.xlu0 %2548
        %2551 = vset.pattern.permute.xlu0 1
        %2552 = vperm.xlu0 %2551, %v303
        %v2553 = vpop.permute.xlu0 %2552
        %2555 = vset.pattern.permute.xlu0 1
        %2556 = vperm.xlu0 %2555, %v304
        %v2557 = vpop.permute.xlu0 %2556
        %2559 = vset.pattern.permute.xlu0 1
        %2560 = vperm.xlu0 %2559, %v305
        %v2561 = vpop.permute.xlu0 %2560
        %2563 = vset.pattern.permute.xlu0 1
        %2564 = vperm.xlu0 %2563, %v306
        %v2565 = vpop.permute.xlu0 %2564
        %2567 = vset.pattern.permute.xlu0 1
        %2568 = vperm.xlu0 %2567, %v307
        %v2569 = vpop.permute.xlu0 %2568
        %2571 = vset.pattern.permute.xlu0 1
        %2572 = vperm.xlu0 %2571, %v308
        %v2573 = vpop.permute.xlu0 %2572
        %2575 = vset.pattern.permute.xlu0 1
        %2576 = vperm.xlu0 %2575, %v309
        %v2577 = vpop.permute.xlu0 %2576
        %2579 = vset.pattern.permute.xlu0 1
        %2580 = vperm.xlu0 %2579, %v310
        %v2581 = vpop.permute.xlu0 %2580
        %2583 = vset.pattern.permute.xlu0 1
        %2584 = vperm.xlu0 %2583, %v311
        %v2585 = vpop.permute.xlu0 %2584
        %2587 = vset.pattern.permute.xlu0 1
        %2588 = vperm.xlu0 %2587, %v312
        %v2589 = vpop.permute.xlu0 %2588
        %2591 = vset.pattern.permute.xlu0 1
        %2592 = vperm.xlu0 %2591, %v313
        %v2593 = vpop.permute.xlu0 %2592
        %2595 = vset.pattern.permute.xlu0 1
        %2596 = vperm.xlu0 %2595, %v314
        %v2597 = vpop.permute.xlu0 %2596
        %2599 = vset.pattern.permute.xlu0 1
        %2600 = vperm.xlu0 %2599, %v315
        %v2601 = vpop.permute.xlu0 %2600
        %2603 = vset.pattern.permute.xlu0 1
        %2604 = vperm.xlu0 %2603, %v316
        %v2605 = vpop.permute.xlu0 %2604
        %2607 = vset.pattern.permute.xlu0 1
        %2608 = vperm.xlu0 %2607, %v317
        %v2609 = vpop.permute.xlu0 %2608
        %2611 = vset.pattern.permute.xlu0 1
        %2612 = vperm.xlu0 %2611, %v318
        %v2613 = vpop.permute.xlu0 %2612
        %2615 = vset.pattern.permute.xlu0 1
        %2616 = vperm.xlu0 %2615, %v319
        %v2617 = vpop.permute.xlu0 %2616
        %2619 = vset.pattern.permute.xlu0 1
        %2620 = vperm.xlu0 %2619, %v320
        %v2621 = vpop.permute.xlu0 %2620
        %2623 = vset.pattern.permute.xlu0 1
        %2624 = vperm.xlu0 %2623, %v321
        %v2625 = vpop.permute.xlu0 %2624
        %2627 = vset.pattern.permute.xlu0 1
        %2628 = vperm.xlu0 %2627, %v322
        %v2629 = vpop.permute.xlu0 %2628
        %2631 = vset.pattern.permute.xlu0 1
        %2632 = vperm.xlu0 %2631, %v323
        %v2633 = vpop.permute.xlu0 %2632
        %2635 = vset.pattern.permute.xlu0 1
        %2636 = vperm.xlu0 %2635, %v324
        %v2637 = vpop.permute.xlu0 %2636
        %2639 = vset.pattern.permute.xlu0 1
        %2640 = vperm.xlu0 %2639, %v325
        %v2641 = vpop.permute.xlu0 %2640
        %2643 = vset.pattern.permute.xlu0 1
        %2644 = vperm.xlu0 %2643, %v326
        %v2645 = vpop.permute.xlu0 %2644
        %2647 = vset.pattern.permute.xlu0 1
        %2648 = vperm.xlu0 %2647, %v327
        %v2649 = vpop.permute.xlu0 %2648
        %2651 = vset.pattern.permute.xlu0 1
        %2652 = vperm.xlu0 %2651, %v328
        %v2653 = vpop.permute.xlu0 %2652
        %2655 = vset.pattern.permute.xlu0 1
        %2656 = vperm.xlu0 %2655, %v329
        %v2657 = vpop.permute.xlu0 %2656
        %2659 = vset.pattern.permute.xlu0 1
        %2660 = vperm.xlu0 %2659, %v330
        %v2661 = vpop.permute.xlu0 %2660
        %2663 = vset.pattern.permute.xlu0 1
        %2664 = vperm.xlu0 %2663, %v331
        %v2665 = vpop.permute.xlu0 %2664
        %2667 = vset.pattern.permute.xlu0 1
        %2668 = vperm.xlu0 %2667, %v332
        %v2669 = vpop.permute.xlu0 %2668
        %2671 = vset.pattern.permute.xlu0 1
        %2672 = vperm.xlu0 %2671, %v333
        %v2673 = vpop.permute.xlu0 %2672
        %2675 = vset.pattern.permute.xlu0 1
        %2676 = vperm.xlu0 %2675, %v334
        %v2677 = vpop.permute.xlu0 %2676
        %2679 = vset.pattern.permute.xlu0 1
        %2680 = vperm.xlu0 %2679, %v335
        %v2681 = vpop.permute.xlu0 %2680
        %2683 = vset.pattern.permute.xlu0 1
        %2684 = vperm.xlu0 %2683, %v336
        %v2685 = vpop.permute.xlu0 %2684
        %2687 = vset.pattern.permute.xlu0 1
        %2688 = vperm.xlu0 %2687, %v337
        %v2689 = vpop.permute.xlu0 %2688
        %2691 = vset.pattern.permute.xlu0 1
        %2692 = vperm.xlu0 %2691, %v338
        %v2693 = vpop.permute.xlu0 %2692
        %2695 = vset.pattern.permute.xlu0 1
        %2696 = vperm.xlu0 %2695, %v339
        %v2697 = vpop.permute.xlu0 %2696
        %2699 = vset.pattern.permute.xlu0 1
        %2700 = vperm.xlu0 %2699, %v340
        %v2701 = vpop.permute.xlu0 %2700
        %2703 = vset.pattern.permute.xlu0 1
        %2704 = vperm.xlu0 %2703, %v341
        %v2705 = vpop.permute.xlu0 %2704
        %2707 = vset.pattern.permute.xlu0 1
        %2708 = vperm.xlu0 %2707, %v342
        %v2709 = vpop.permute.xlu0 %2708
        %2711 = vset.pattern.permute.xlu0 1
        %2712 = vperm.xlu0 %2711, %v343
        %v2713 = vpop.permute.xlu0 %2712
        %2715 = vset.pattern.permute.xlu0 1
        %2716 = vperm.xlu0 %2715, %v344
        %v2717 = vpop.permute.xlu0 %2716
        %2719 = vset.pattern.permute.xlu0 1
        %2720 = vperm.xlu0 %2719, %v345
        %v2721 = vpop.permute.xlu0 %2720
        %2723 = vset.pattern.permute.xlu0 1
        %2724 = vperm.xlu0 %2723, %v346
        %v2725 = vpop.permute.xlu0 %2724
        %2727 = vset.pattern.permute.xlu0 1
        %2728 = vperm.xlu0 %2727, %v347
        %v2729 = vpop.permute.xlu0 %2728
        %2731 = vset.pattern.permute.xlu0 1
        %2732 = vperm.xlu0 %2731, %v348
        %v2733 = vpop.permute.xlu0 %2732
        %2735 = vset.pattern.permute.xlu0 1
        %2736 = vperm.xlu0 %2735, %v349
        %v2737 = vpop.permute.xlu0 %2736
        %2739 = vset.pattern.permute.xlu0 1
        %2740 = vperm.xlu0 %2739, %v350
        %v2741 = vpop.permute.xlu0 %2740
        %2743 = vset.pattern.permute.xlu0 1
        %2744 = vperm.xlu0 %2743, %v351
        %v2745 = vpop.permute.xlu0 %2744
        %2747 = vset.pattern.permute.xlu0 1
        %2748 = vperm.xlu0 %2747, %v352
        %v2749 = vpop.permute.xlu0 %2748
        %2751 = vset.pattern.permute.xlu0 1
        %2752 = vperm.xlu0 %2751, %v353
        %v2753 = vpop.permute.xlu0 %2752
        %2755 = vset.pattern.permute.xlu0 1
        %2756 = vperm.xlu0 %2755, %v354
        %v2757 = vpop.permute.xlu0 %2756
        %2759 = vset.pattern.permute.xlu0 1
        %2760 = vperm.xlu0 %2759, %v355
        %v2761 = vpop.permute.xlu0 %2760
        %2763 = vset.pattern.permute.xlu0 1
        %2764 = vperm.xlu0 %2763, %v356
        %v2765 = vpop.permute.xlu0 %2764
        %2767 = vset.pattern.permute.xlu0 1
        %2768 = vperm.xlu0 %2767, %v357
        %v2769 = vpop.permute.xlu0 %2768
        %2771 = vset.pattern.permute.xlu0 1
        %2772 = vperm.xlu0 %2771, %v358
        %v2773 = vpop.permute.xlu0 %2772
        %2775 = vset.pattern.permute.xlu0 1
        %2776 = vperm.xlu0 %2775, %v359
        %v2777 = vpop.permute.xlu0 %2776
        %2779 = vset.pattern.permute.xlu0 1
        %2780 = vperm.xlu0 %2779, %v360
        %v2781 = vpop.permute.xlu0 %2780
        %2783 = vset.pattern.permute.xlu0 1
        %2784 = vperm.xlu0 %2783, %v361
        %v2785 = vpop.permute.xlu0 %2784
        %2787 = vset.pattern.permute.xlu0 1
        %2788 = vperm.xlu0 %2787, %v362
        %v2789 = vpop.permute.xlu0 %2788
        %2791 = vset.pattern.permute.xlu0 1
        %2792 = vperm.xlu0 %2791, %v363
        %v2793 = vpop.permute.xlu0 %2792
        %2795 = vset.pattern.permute.xlu0 1
        %2796 = vperm.xlu0 %2795, %v364
        %v2797 = vpop.permute.xlu0 %2796
        %2799 = vset.pattern.permute.xlu0 1
        %2800 = vperm.xlu0 %2799, %v365
        %v2801 = vpop.permute.xlu0 %2800
        %2803 = vset.pattern.permute.xlu0 1
        %2804 = vperm.xlu0 %2803, %v366
        %v2805 = vpop.permute.xlu0 %2804
        %2807 = vset.pattern.permute.xlu0 1
        %2808 = vperm.xlu0 %2807, %v367
        %v2809 = vpop.permute.xlu0 %2808
        %2811 = vset.pattern.permute.xlu0 1
        %2812 = vperm.xlu0 %2811, %v368
        %v2813 = vpop.permute.xlu0 %2812
        %2815 = vset.pattern.permute.xlu0 1
        %2816 = vperm.xlu0 %2815, %v369
        %v2817 = vpop.permute.xlu0 %2816
        %2819 = vset.pattern.permute.xlu0 1
        %2820 = vperm.xlu0 %2819, %v370
        %v2821 = vpop.permute.xlu0 %2820
        %2823 = vset.pattern.permute.xlu0 1
        %2824 = vperm.xlu0 %2823, %v371
        %v2825 = vpop.permute.xlu0 %2824
        %2827 = vset.pattern.permute.xlu0 1
        %2828 = vperm.xlu0 %2827, %v372
        %v2829 = vpop.permute.xlu0 %2828
        %2831 = vset.pattern.permute.xlu0 1
        %2832 = vperm.xlu0 %2831, %v373
        %v2833 = vpop.permute.xlu0 %2832
        %2835 = vset.pattern.permute.xlu0 1
        %2836 = vperm.xlu0 %2835, %v374
        %v2837 = vpop.permute.xlu0 %2836
        %2839 = vset.pattern.permute.xlu0 1
        %2840 = vperm.xlu0 %2839, %v375
        %v2841 = vpop.permute.xlu0 %2840
        %2843 = vset.pattern.permute.xlu0 1
        %2844 = vperm.xlu0 %2843, %v376
        %v2845 = vpop.permute.xlu0 %2844
        %2847 = vset.pattern.permute.xlu0 1
        %2848 = vperm.xlu0 %2847, %v377
        %v2849 = vpop.permute.xlu0 %2848
        %2851 = vset.pattern.permute.xlu0 1
        %2852 = vperm.xlu0 %2851, %v378
        %v2853 = vpop.permute.xlu0 %2852
        %2855 = vset.pattern.permute.xlu0 1
        %2856 = vperm.xlu0 %2855, %v379
        %v2857 = vpop.permute.xlu0 %2856
        %2859 = vset.pattern.permute.xlu0 1
        %2860 = vperm.xlu0 %2859, %v380
        %v2861 = vpop.permute.xlu0 %2860
        %2863 = vset.pattern.permute.xlu0 1
        %2864 = vperm.xlu0 %2863, %v381
        %v2865 = vpop.permute.xlu0 %2864
        %2867 = vset.pattern.permute.xlu0 1
        %2868 = vperm.xlu0 %2867, %v382
        %v2869 = vpop.permute.xlu0 %2868
        %2871 = vset.pattern.permute.xlu0 1
        %2872 = vperm.xlu0 %2871, %v383
        %v2873 = vpop.permute.xlu0 %2872
        %2875 = vset.pattern.permute.xlu0 1
        %2876 = vperm.xlu0 %2875, %v384
        %v2877 = vpop.permute.xlu0 %2876
        %2879 = vset.pattern.permute.xlu0 1
        %2880 = vperm.xlu0 %2879, %v385
        %v2881 = vpop.permute.xlu0 %2880
        %2883 = vset.pattern.permute.xlu0 1
        %2884 = vperm.xlu0 %2883, %v386
        %v2885 = vpop.permute.xlu0 %2884
        %2887 = vset.pattern.permute.xlu0 1
        %2888 = vperm.xlu0 %2887, %v387
        %v2889 = vpop.permute.xlu0 %2888
        %2891 = vset.pattern.permute.xlu0 1
        %2892 = vperm.xlu0 %2891, %v388
        %v2893 = vpop.permute.xlu0 %2892
        %2895 = vset.pattern.permute.xlu0 1
        %2896 = vperm.xlu0 %2895, %v389
        %v2897 = vpop.permute.xlu0 %2896
        %2899 = vset.pattern.permute.xlu0 1
        %2900 = vperm.xlu0 %2899, %v390
        %v2901 = vpop.permute.xlu0 %2900
        %2903 = vset.pattern.permute.xlu0 1
        %2904 = vperm.xlu0 %2903, %v391
        %v2905 = vpop.permute.xlu0 %2904
        %2907 = vset.pattern.permute.xlu0 1
        %2908 = vperm.xlu0 %2907, %v392
        %v2909 = vpop.permute.xlu0 %2908
        %2911 = vset.pattern.permute.xlu0 1
        %2912 = vperm.xlu0 %2911, %v393
        %v2913 = vpop.permute.xlu0 %2912
        %2915 = vset.pattern.permute.xlu0 1
        %2916 = vperm.xlu0 %2915, %v394
        %v2917 = vpop.permute.xlu0 %2916
        %2919 = vset.pattern.permute.xlu0 1
        %2920 = vperm.xlu0 %2919, %v395
        %v2921 = vpop.permute.xlu0 %2920
        %2923 = vset.pattern.permute.xlu0 1
        %2924 = vperm.xlu0 %2923, %v396
        %v2925 = vpop.permute.xlu0 %2924
        %2927 = vset.pattern.permute.xlu0 1
        %2928 = vperm.xlu0 %2927, %v397
        %v2929 = vpop.permute.xlu0 %2928
        %2931 = vset.pattern.permute.xlu0 1
        %2932 = vperm.xlu0 %2931, %v398
        %v2933 = vpop.permute.xlu0 %2932
        %2935 = vset.pattern.permute.xlu0 1
        %2936 = vperm.xlu0 %2935, %v399
        %v2937 = vpop.permute.xlu0 %2936
        %2939 = vset.pattern.permute.xlu0 1
        %2940 = vperm.xlu0 %2939, %v400
        %v2941 = vpop.permute.xlu0 %2940
        %2943 = vset.pattern.permute.xlu0 1
        %2944 = vperm.xlu0 %2943, %v401
        %v2945 = vpop.permute.xlu0 %2944
        %2947 = vset.pattern.permute.xlu0 1
        %2948 = vperm.xlu0 %2947, %v402
        %v2949 = vpop.permute.xlu0 %2948
        %2951 = vset.pattern.permute.xlu0 1
        %2952 = vperm.xlu0 %2951, %v403
        %v2953 = vpop.permute.xlu0 %2952
        %2955 = vset.pattern.permute.xlu0 1
        %2956 = vperm.xlu0 %2955, %v404
        %v2957 = vpop.permute.xlu0 %2956
        %2959 = vset.pattern.permute.xlu0 1
        %2960 = vperm.xlu0 %2959, %v405
        %v2961 = vpop.permute.xlu0 %2960
        %2963 = vset.pattern.permute.xlu0 1
        %2964 = vperm.xlu0 %2963, %v406
        %v2965 = vpop.permute.xlu0 %2964
        %2967 = vset.pattern.permute.xlu0 1
        %2968 = vperm.xlu0 %2967, %v407
        %v2969 = vpop.permute.xlu0 %2968
        %2971 = vset.pattern.permute.xlu0 1
        %2972 = vperm.xlu0 %2971, %v408
        %v2973 = vpop.permute.xlu0 %2972
        %2975 = vset.pattern.permute.xlu0 1
        %2976 = vperm.xlu0 %2975, %v409
        %v2977 = vpop.permute.xlu0 %2976
        %2979 = vset.pattern.permute.xlu0 1
        %2980 = vperm.xlu0 %2979, %v410
        %v2981 = vpop.permute.xlu0 %2980
        %2983 = vset.pattern.permute.xlu0 1
        %2984 = vperm.xlu0 %2983, %v411
        %v2985 = vpop.permute.xlu0 %2984
        %2987 = vset.pattern.permute.xlu0 1
        %2988 = vperm.xlu0 %2987, %v412
        %v2989 = vpop.permute.xlu0 %2988
        %2991 = vset.pattern.permute.xlu0 1
        %2992 = vperm.xlu0 %2991, %v413
        %v2993 = vpop.permute.xlu0 %2992
        %2995 = vset.pattern.permute.xlu0 1
        %2996 = vperm.xlu0 %2995, %v414
        %v2997 = vpop.permute.xlu0 %2996
        %2999 = vset.pattern.permute.xlu0 1
        %3000 = vperm.xlu0 %2999, %v415
        %v3001 = vpop.permute.xlu0 %3000
        %3003 = vset.pattern.permute.xlu0 1
        %3004 = vperm.xlu0 %3003, %v416
        %v3005 = vpop.permute.xlu0 %3004
        %v3007 = vmul.f32 %v1985, %v441
        %v3008 = vmul.f32 %v1989, %v441
        %v3009 = vmul.f32 %v1993, %v441
        %v3010 = vmul.f32 %v1997, %v441
        %v3011 = vmul.f32 %v2001, %v441
        %v3012 = vmul.f32 %v2005, %v441
        %v3013 = vmul.f32 %v2009, %v441
        %v3014 = vmul.f32 %v2013, %v441
        %v3015 = vmul.f32 %v2017, %v441
        %v3016 = vmul.f32 %v2021, %v441
        %v3017 = vmul.f32 %v2025, %v441
        %v3018 = vmul.f32 %v2029, %v441
        %v3019 = vmul.f32 %v2033, %v441
        %v3020 = vmul.f32 %v2037, %v441
        %v3021 = vmul.f32 %v2041, %v441
        %v3022 = vmul.f32 %v2045, %v441
        %v3023 = vmul.f32 %v2049, %v441
        %v3024 = vmul.f32 %v2053, %v441
        %v3025 = vmul.f32 %v2057, %v441
        %v3026 = vmul.f32 %v2061, %v441
        %v3027 = vmul.f32 %v2065, %v441
        %v3028 = vmul.f32 %v2069, %v441
        %v3029 = vmul.f32 %v2073, %v441
        %v3030 = vmul.f32 %v2077, %v441
        %v3031 = vmul.f32 %v2081, %v441
        %v3032 = vmul.f32 %v2085, %v441
        %v3033 = vmul.f32 %v2089, %v441
        %v3034 = vmul.f32 %v2093, %v441
        %v3035 = vmul.f32 %v2097, %v441
        %v3036 = vmul.f32 %v2101, %v441
        %v3037 = vmul.f32 %v2105, %v441
        %v3038 = vmul.f32 %v2109, %v441
        %v3039 = vmul.f32 %v2113, %v441
        %v3040 = vmul.f32 %v2117, %v441
        %v3041 = vmul.f32 %v2121, %v441
        %v3042 = vmul.f32 %v2125, %v441
        %v3043 = vmul.f32 %v2129, %v441
        %v3044 = vmul.f32 %v2133, %v441
        %v3045 = vmul.f32 %v2137, %v441
        %v3046 = vmul.f32 %v2141, %v441
        %v3047 = vmul.f32 %v2145, %v441
        %v3048 = vmul.f32 %v2149, %v441
        %v3049 = vmul.f32 %v2153, %v441
        %v3050 = vmul.f32 %v2157, %v441
        %v3051 = vmul.f32 %v2161, %v441
        %v3052 = vmul.f32 %v2165, %v441
        %v3053 = vmul.f32 %v2169, %v441
        %v3054 = vmul.f32 %v2173, %v441
        %v3055 = vmul.f32 %v2177, %v441
        %v3056 = vmul.f32 %v2181, %v441
        %v3057 = vmul.f32 %v2185, %v441
        %v3058 = vmul.f32 %v2189, %v441
        %v3059 = vmul.f32 %v2193, %v441
        %v3060 = vmul.f32 %v2197, %v441
        %v3061 = vmul.f32 %v2201, %v441
        %v3062 = vmul.f32 %v2205, %v441
        %v3063 = vmul.f32 %v2209, %v441
        %v3064 = vmul.f32 %v2213, %v441
        %v3065 = vmul.f32 %v2217, %v441
        %v3066 = vmul.f32 %v2221, %v441
        %v3067 = vmul.f32 %v2225, %v441
        %v3068 = vmul.f32 %v2229, %v441
        %v3069 = vmul.f32 %v2233, %v441
        %v3070 = vmul.f32 %v2237, %v441
        %v3071 = vmul.f32 %v2241, %v441
        %v3072 = vmul.f32 %v2245, %v441
        %v3073 = vmul.f32 %v2249, %v441
        %v3074 = vmul.f32 %v2253, %v441
        %v3075 = vmul.f32 %v2257, %v441
        %v3076 = vmul.f32 %v2261, %v441
        %v3077 = vmul.f32 %v2265, %v441
        %v3078 = vmul.f32 %v2269, %v441
        %v3079 = vmul.f32 %v2273, %v441
        %v3080 = vmul.f32 %v2277, %v441
        %v3081 = vmul.f32 %v2281, %v441
        %v3082 = vmul.f32 %v2285, %v441
        %v3083 = vmul.f32 %v2289, %v441
        %v3084 = vmul.f32 %v2293, %v441
        %v3085 = vmul.f32 %v2297, %v441
        %v3086 = vmul.f32 %v2301, %v441
        %v3087 = vmul.f32 %v2305, %v441
        %v3088 = vmul.f32 %v2309, %v441
        %v3089 = vmul.f32 %v2313, %v441
        %v3090 = vmul.f32 %v2317, %v441
        %v3091 = vmul.f32 %v2321, %v441
        %v3092 = vmul.f32 %v2325, %v441
        %v3093 = vmul.f32 %v2329, %v441
        %v3094 = vmul.f32 %v2333, %v441
        %v3095 = vmul.f32 %v2337, %v441
        %v3096 = vmul.f32 %v2341, %v441
        %v3097 = vmul.f32 %v2345, %v441
        %v3098 = vmul.f32 %v2349, %v441
        %v3099 = vmul.f32 %v2353, %v441
        %v3100 = vmul.f32 %v2357, %v441
        %v3101 = vmul.f32 %v2361, %v441
        %v3102 = vmul.f32 %v2365, %v441
        %v3103 = vmul.f32 %v2369, %v441
        %v3104 = vmul.f32 %v2373, %v441
        %v3105 = vmul.f32 %v2377, %v441
        %v3106 = vmul.f32 %v2381, %v441
        %v3107 = vmul.f32 %v2385, %v441
        %v3108 = vmul.f32 %v2389, %v441
        %v3109 = vmul.f32 %v2393, %v441
        %v3110 = vmul.f32 %v2397, %v441
        %v3111 = vmul.f32 %v2401, %v441
        %v3112 = vmul.f32 %v2405, %v441
        %v3113 = vmul.f32 %v2409, %v441
        %v3114 = vmul.f32 %v2413, %v441
        %v3115 = vmul.f32 %v2417, %v441
        %v3116 = vmul.f32 %v2421, %v441
        %v3117 = vmul.f32 %v2425, %v441
        %v3118 = vmul.f32 %v2429, %v441
        %v3119 = vmul.f32 %v2433, %v441
        %v3120 = vmul.f32 %v2437, %v441
        %v3121 = vmul.f32 %v2441, %v441
        %v3122 = vmul.f32 %v2445, %v441
        %v3123 = vmul.f32 %v2449, %v441
        %v3124 = vmul.f32 %v2453, %v441
        %v3125 = vmul.f32 %v2457, %v441
        %v3126 = vmul.f32 %v2461, %v441
        %v3127 = vmul.f32 %v2465, %v441
        %v3128 = vmul.f32 %v2469, %v441
        %v3129 = vmul.f32 %v2473, %v441
        %v3130 = vmul.f32 %v2477, %v441
        %v3131 = vmul.f32 %v2481, %v441
        %v3132 = vmul.f32 %v2485, %v441
        %v3133 = vmul.f32 %v2489, %v441
        %v3134 = vmul.f32 %v2493, %v441
        %v3135 = vmul.f32 %v2497, %v441
        %v3136 = vmul.f32 %v2501, %v441
        %v3137 = vmul.f32 %v2505, %v441
        %v3138 = vmul.f32 %v2509, %v441
        %v3139 = vmul.f32 %v2513, %v441
        %v3140 = vmul.f32 %v2517, %v441
        %v3141 = vmul.f32 %v2521, %v441
        %v3142 = vmul.f32 %v2525, %v441
        %v3143 = vmul.f32 %v2529, %v441
        %v3144 = vmul.f32 %v2533, %v441
        %v3145 = vmul.f32 %v2537, %v441
        %v3146 = vmul.f32 %v2541, %v441
        %v3147 = vmul.f32 %v2545, %v441
        %v3148 = vmul.f32 %v2549, %v441
        %v3149 = vmul.f32 %v2553, %v441
        %v3150 = vmul.f32 %v2557, %v441
        %v3151 = vmul.f32 %v2561, %v441
        %v3152 = vmul.f32 %v2565, %v441
        %v3153 = vmul.f32 %v2569, %v441
        %v3154 = vmul.f32 %v2573, %v441
        %v3155 = vmul.f32 %v2577, %v441
        %v3156 = vmul.f32 %v2581, %v441
        %v3157 = vmul.f32 %v2585, %v441
        %v3158 = vmul.f32 %v2589, %v441
        %v3159 = vmul.f32 %v2593, %v441
        %v3160 = vmul.f32 %v2597, %v441
        %v3161 = vmul.f32 %v2601, %v441
        %v3162 = vmul.f32 %v2605, %v441
        %v3163 = vmul.f32 %v2609, %v441
        %v3164 = vmul.f32 %v2613, %v441
        %v3165 = vmul.f32 %v2617, %v441
        %v3166 = vmul.f32 %v2621, %v441
        %v3167 = vmul.f32 %v2625, %v441
        %v3168 = vmul.f32 %v2629, %v441
        %v3169 = vmul.f32 %v2633, %v441
        %v3170 = vmul.f32 %v2637, %v441
        %v3171 = vmul.f32 %v2641, %v441
        %v3172 = vmul.f32 %v2645, %v441
        %v3173 = vmul.f32 %v2649, %v441
        %v3174 = vmul.f32 %v2653, %v441
        %v3175 = vmul.f32 %v2657, %v441
        %v3176 = vmul.f32 %v2661, %v441
        %v3177 = vmul.f32 %v2665, %v441
        %v3178 = vmul.f32 %v2669, %v441
        %v3179 = vmul.f32 %v2673, %v441
        %v3180 = vmul.f32 %v2677, %v441
        %v3181 = vmul.f32 %v2681, %v441
        %v3182 = vmul.f32 %v2685, %v441
        %v3183 = vmul.f32 %v2689, %v441
        %v3184 = vmul.f32 %v2693, %v441
        %v3185 = vmul.f32 %v2697, %v441
        %v3186 = vmul.f32 %v2701, %v441
        %v3187 = vmul.f32 %v2705, %v441
        %v3188 = vmul.f32 %v2709, %v441
        %v3189 = vmul.f32 %v2713, %v441
        %v3190 = vmul.f32 %v2717, %v441
        %v3191 = vmul.f32 %v2721, %v441
        %v3192 = vmul.f32 %v2725, %v441
        %v3193 = vmul.f32 %v2729, %v441
        %v3194 = vmul.f32 %v2733, %v441
        %v3195 = vmul.f32 %v2737, %v441
        %v3196 = vmul.f32 %v2741, %v441
        %v3197 = vmul.f32 %v2745, %v441
        %v3198 = vmul.f32 %v2749, %v441
        %v3199 = vmul.f32 %v2753, %v441
        %v3200 = vmul.f32 %v2757, %v441
        %v3201 = vmul.f32 %v2761, %v441
        %v3202 = vmul.f32 %v2765, %v441
        %v3203 = vmul.f32 %v2769, %v441
        %v3204 = vmul.f32 %v2773, %v441
        %v3205 = vmul.f32 %v2777, %v441
        %v3206 = vmul.f32 %v2781, %v441
        %v3207 = vmul.f32 %v2785, %v441
        %v3208 = vmul.f32 %v2789, %v441
        %v3209 = vmul.f32 %v2793, %v441
        %v3210 = vmul.f32 %v2797, %v441
        %v3211 = vmul.f32 %v2801, %v441
        %v3212 = vmul.f32 %v2805, %v441
        %v3213 = vmul.f32 %v2809, %v441
        %v3214 = vmul.f32 %v2813, %v441
        %v3215 = vmul.f32 %v2817, %v441
        %v3216 = vmul.f32 %v2821, %v441
        %v3217 = vmul.f32 %v2825, %v441
        %v3218 = vmul.f32 %v2829, %v441
        %v3219 = vmul.f32 %v2833, %v441
        %v3220 = vmul.f32 %v2837, %v441
        %v3221 = vmul.f32 %v2841, %v441
        %v3222 = vmul.f32 %v2845, %v441
        %v3223 = vmul.f32 %v2849, %v441
        %v3224 = vmul.f32 %v2853, %v441
        %v3225 = vmul.f32 %v2857, %v441
        %v3226 = vmul.f32 %v2861, %v441
        %v3227 = vmul.f32 %v2865, %v441
        %v3228 = vmul.f32 %v2869, %v441
        %v3229 = vmul.f32 %v2873, %v441
        %v3230 = vmul.f32 %v2877, %v441
        %v3231 = vmul.f32 %v2881, %v441
        %v3232 = vmul.f32 %v2885, %v441
        %v3233 = vmul.f32 %v2889, %v441
        %v3234 = vmul.f32 %v2893, %v441
        %v3235 = vmul.f32 %v2897, %v441
        %v3236 = vmul.f32 %v2901, %v441
        %v3237 = vmul.f32 %v2905, %v441
        %v3238 = vmul.f32 %v2909, %v441
        %v3239 = vmul.f32 %v2913, %v441
        %v3240 = vmul.f32 %v2917, %v441
        %v3241 = vmul.f32 %v2921, %v441
        %v3242 = vmul.f32 %v2925, %v441
        %v3243 = vmul.f32 %v2929, %v441
        %v3244 = vmul.f32 %v2933, %v441
        %v3245 = vmul.f32 %v2937, %v441
        %v3246 = vmul.f32 %v2941, %v441
        %v3247 = vmul.f32 %v2945, %v441
        %v3248 = vmul.f32 %v2949, %v441
        %v3249 = vmul.f32 %v2953, %v441
        %v3250 = vmul.f32 %v2957, %v441
        %v3251 = vmul.f32 %v2961, %v441
        %v3252 = vmul.f32 %v2965, %v441
        %v3253 = vmul.f32 %v2969, %v441
        %v3254 = vmul.f32 %v2973, %v441
        %v3255 = vmul.f32 %v2977, %v441
        %v3256 = vmul.f32 %v2981, %v441
        %v3257 = vmul.f32 %v2985, %v441
        %v3258 = vmul.f32 %v2989, %v441
        %v3259 = vmul.f32 %v2993, %v441
        %v3260 = vmul.f32 %v2997, %v441
        %v3261 = vmul.f32 %v3001, %v441
        %v3262 = vmul.f32 %v3005, %v441
        %v3263 = vadd.f32 %v1727, %v3007
        %v3264 = vadd.f32 %v1728, %v3008
        %v3265 = vadd.f32 %v1729, %v3009
        %v3266 = vadd.f32 %v1730, %v3010
        %v3267 = vadd.f32 %v1731, %v3011
        %v3268 = vadd.f32 %v1732, %v3012
        %v3269 = vadd.f32 %v1733, %v3013
        %v3270 = vadd.f32 %v1734, %v3014
        %v3271 = vadd.f32 %v1735, %v3015
        %v3272 = vadd.f32 %v1736, %v3016
        %v3273 = vadd.f32 %v1737, %v3017
        %v3274 = vadd.f32 %v1738, %v3018
        %v3275 = vadd.f32 %v1739, %v3019
        %v3276 = vadd.f32 %v1740, %v3020
        %v3277 = vadd.f32 %v1741, %v3021
        %v3278 = vadd.f32 %v1742, %v3022
        %v3279 = vadd.f32 %v1743, %v3023
        %v3280 = vadd.f32 %v1744, %v3024
        %v3281 = vadd.f32 %v1745, %v3025
        %v3282 = vadd.f32 %v1746, %v3026
        %v3283 = vadd.f32 %v1747, %v3027
        %v3284 = vadd.f32 %v1748, %v3028
        %v3285 = vadd.f32 %v1749, %v3029
        %v3286 = vadd.f32 %v1750, %v3030
        %v3287 = vadd.f32 %v1751, %v3031
        %v3288 = vadd.f32 %v1752, %v3032
        %v3289 = vadd.f32 %v1753, %v3033
        %v3290 = vadd.f32 %v1754, %v3034
        %v3291 = vadd.f32 %v1755, %v3035
        %v3292 = vadd.f32 %v1756, %v3036
        %v3293 = vadd.f32 %v1757, %v3037
        %v3294 = vadd.f32 %v1758, %v3038
        %v3295 = vadd.f32 %v1759, %v3039
        %v3296 = vadd.f32 %v1760, %v3040
        %v3297 = vadd.f32 %v1761, %v3041
        %v3298 = vadd.f32 %v1762, %v3042
        %v3299 = vadd.f32 %v1763, %v3043
        %v3300 = vadd.f32 %v1764, %v3044
        %v3301 = vadd.f32 %v1765, %v3045
        %v3302 = vadd.f32 %v1766, %v3046
        %v3303 = vadd.f32 %v1767, %v3047
        %v3304 = vadd.f32 %v1768, %v3048
        %v3305 = vadd.f32 %v1769, %v3049
        %v3306 = vadd.f32 %v1770, %v3050
        %v3307 = vadd.f32 %v1771, %v3051
        %v3308 = vadd.f32 %v1772, %v3052
        %v3309 = vadd.f32 %v1773, %v3053
        %v3310 = vadd.f32 %v1774, %v3054
        %v3311 = vadd.f32 %v1775, %v3055
        %v3312 = vadd.f32 %v1776, %v3056
        %v3313 = vadd.f32 %v1777, %v3057
        %v3314 = vadd.f32 %v1778, %v3058
        %v3315 = vadd.f32 %v1779, %v3059
        %v3316 = vadd.f32 %v1780, %v3060
        %v3317 = vadd.f32 %v1781, %v3061
        %v3318 = vadd.f32 %v1782, %v3062
        %v3319 = vadd.f32 %v1783, %v3063
        %v3320 = vadd.f32 %v1784, %v3064
        %v3321 = vadd.f32 %v1785, %v3065
        %v3322 = vadd.f32 %v1786, %v3066
        %v3323 = vadd.f32 %v1787, %v3067
        %v3324 = vadd.f32 %v1788, %v3068
        %v3325 = vadd.f32 %v1789, %v3069
        %v3326 = vadd.f32 %v1790, %v3070
        %v3327 = vadd.f32 %v1791, %v3071
        %v3328 = vadd.f32 %v1792, %v3072
        %v3329 = vadd.f32 %v1793, %v3073
        %v3330 = vadd.f32 %v1794, %v3074
        %v3331 = vadd.f32 %v1795, %v3075
        %v3332 = vadd.f32 %v1796, %v3076
        %v3333 = vadd.f32 %v1797, %v3077
        %v3334 = vadd.f32 %v1798, %v3078
        %v3335 = vadd.f32 %v1799, %v3079
        %v3336 = vadd.f32 %v1800, %v3080
        %v3337 = vadd.f32 %v1801, %v3081
        %v3338 = vadd.f32 %v1802, %v3082
        %v3339 = vadd.f32 %v1803, %v3083
        %v3340 = vadd.f32 %v1804, %v3084
        %v3341 = vadd.f32 %v1805, %v3085
        %v3342 = vadd.f32 %v1806, %v3086
        %v3343 = vadd.f32 %v1807, %v3087
        %v3344 = vadd.f32 %v1808, %v3088
        %v3345 = vadd.f32 %v1809, %v3089
        %v3346 = vadd.f32 %v1810, %v3090
        %v3347 = vadd.f32 %v1811, %v3091
        %v3348 = vadd.f32 %v1812, %v3092
        %v3349 = vadd.f32 %v1813, %v3093
        %v3350 = vadd.f32 %v1814, %v3094
        %v3351 = vadd.f32 %v1815, %v3095
        %v3352 = vadd.f32 %v1816, %v3096
        %v3353 = vadd.f32 %v1817, %v3097
        %v3354 = vadd.f32 %v1818, %v3098
        %v3355 = vadd.f32 %v1819, %v3099
        %v3356 = vadd.f32 %v1820, %v3100
        %v3357 = vadd.f32 %v1821, %v3101
        %v3358 = vadd.f32 %v1822, %v3102
        %v3359 = vadd.f32 %v1823, %v3103
        %v3360 = vadd.f32 %v1824, %v3104
        %v3361 = vadd.f32 %v1825, %v3105
        %v3362 = vadd.f32 %v1826, %v3106
        %v3363 = vadd.f32 %v1827, %v3107
        %v3364 = vadd.f32 %v1828, %v3108
        %v3365 = vadd.f32 %v1829, %v3109
        %v3366 = vadd.f32 %v1830, %v3110
        %v3367 = vadd.f32 %v1831, %v3111
        %v3368 = vadd.f32 %v1832, %v3112
        %v3369 = vadd.f32 %v1833, %v3113
        %v3370 = vadd.f32 %v1834, %v3114
        %v3371 = vadd.f32 %v1835, %v3115
        %v3372 = vadd.f32 %v1836, %v3116
        %v3373 = vadd.f32 %v1837, %v3117
        %v3374 = vadd.f32 %v1838, %v3118
        %v3375 = vadd.f32 %v1839, %v3119
        %v3376 = vadd.f32 %v1840, %v3120
        %v3377 = vadd.f32 %v1841, %v3121
        %v3378 = vadd.f32 %v1842, %v3122
        %v3379 = vadd.f32 %v1843, %v3123
        %v3380 = vadd.f32 %v1844, %v3124
        %v3381 = vadd.f32 %v1845, %v3125
        %v3382 = vadd.f32 %v1846, %v3126
        %v3383 = vadd.f32 %v1847, %v3127
        %v3384 = vadd.f32 %v1848, %v3128
        %v3385 = vadd.f32 %v1849, %v3129
        %v3386 = vadd.f32 %v1850, %v3130
        %v3387 = vadd.f32 %v1851, %v3131
        %v3388 = vadd.f32 %v1852, %v3132
        %v3389 = vadd.f32 %v1853, %v3133
        %v3390 = vadd.f32 %v1854, %v3134
        %v3391 = vadd.f32 %v1855, %v3135
        %v3392 = vadd.f32 %v1856, %v3136
        %v3393 = vadd.f32 %v1857, %v3137
        %v3394 = vadd.f32 %v1858, %v3138
        %v3395 = vadd.f32 %v1859, %v3139
        %v3396 = vadd.f32 %v1860, %v3140
        %v3397 = vadd.f32 %v1861, %v3141
        %v3398 = vadd.f32 %v1862, %v3142
        %v3399 = vadd.f32 %v1863, %v3143
        %v3400 = vadd.f32 %v1864, %v3144
        %v3401 = vadd.f32 %v1865, %v3145
        %v3402 = vadd.f32 %v1866, %v3146
        %v3403 = vadd.f32 %v1867, %v3147
        %v3404 = vadd.f32 %v1868, %v3148
        %v3405 = vadd.f32 %v1869, %v3149
        %v3406 = vadd.f32 %v1870, %v3150
        %v3407 = vadd.f32 %v1871, %v3151
        %v3408 = vadd.f32 %v1872, %v3152
        %v3409 = vadd.f32 %v1873, %v3153
        %v3410 = vadd.f32 %v1874, %v3154
        %v3411 = vadd.f32 %v1875, %v3155
        %v3412 = vadd.f32 %v1876, %v3156
        %v3413 = vadd.f32 %v1877, %v3157
        %v3414 = vadd.f32 %v1878, %v3158
        %v3415 = vadd.f32 %v1879, %v3159
        %v3416 = vadd.f32 %v1880, %v3160
        %v3417 = vadd.f32 %v1881, %v3161
        %v3418 = vadd.f32 %v1882, %v3162
        %v3419 = vadd.f32 %v1883, %v3163
        %v3420 = vadd.f32 %v1884, %v3164
        %v3421 = vadd.f32 %v1885, %v3165
        %v3422 = vadd.f32 %v1886, %v3166
        %v3423 = vadd.f32 %v1887, %v3167
        %v3424 = vadd.f32 %v1888, %v3168
        %v3425 = vadd.f32 %v1889, %v3169
        %v3426 = vadd.f32 %v1890, %v3170
        %v3427 = vadd.f32 %v1891, %v3171
        %v3428 = vadd.f32 %v1892, %v3172
        %v3429 = vadd.f32 %v1893, %v3173
        %v3430 = vadd.f32 %v1894, %v3174
        %v3431 = vadd.f32 %v1895, %v3175
        %v3432 = vadd.f32 %v1896, %v3176
        %v3433 = vadd.f32 %v1897, %v3177
        %v3434 = vadd.f32 %v1898, %v3178
        %v3435 = vadd.f32 %v1899, %v3179
        %v3436 = vadd.f32 %v1900, %v3180
        %v3437 = vadd.f32 %v1901, %v3181
        %v3438 = vadd.f32 %v1902, %v3182
        %v3439 = vadd.f32 %v1903, %v3183
        %v3440 = vadd.f32 %v1904, %v3184
        %v3441 = vadd.f32 %v1905, %v3185
        %v3442 = vadd.f32 %v1906, %v3186
        %v3443 = vadd.f32 %v1907, %v3187
        %v3444 = vadd.f32 %v1908, %v3188
        %v3445 = vadd.f32 %v1909, %v3189
        %v3446 = vadd.f32 %v1910, %v3190
        %v3447 = vadd.f32 %v1911, %v3191
        %v3448 = vadd.f32 %v1912, %v3192
        %v3449 = vadd.f32 %v1913, %v3193
        %v3450 = vadd.f32 %v1914, %v3194
        %v3451 = vadd.f32 %v1915, %v3195
        %v3452 = vadd.f32 %v1916, %v3196
        %v3453 = vadd.f32 %v1917, %v3197
        %v3454 = vadd.f32 %v1918, %v3198
        %v3455 = vadd.f32 %v1919, %v3199
        %v3456 = vadd.f32 %v1920, %v3200
        %v3457 = vadd.f32 %v1921, %v3201
        %v3458 = vadd.f32 %v1922, %v3202
        %v3459 = vadd.f32 %v1923, %v3203
        %v3460 = vadd.f32 %v1924, %v3204
        %v3461 = vadd.f32 %v1925, %v3205
        %v3462 = vadd.f32 %v1926, %v3206
        %v3463 = vadd.f32 %v1927, %v3207
        %v3464 = vadd.f32 %v1928, %v3208
        %v3465 = vadd.f32 %v1929, %v3209
        %v3466 = vadd.f32 %v1930, %v3210
        %v3467 = vadd.f32 %v1931, %v3211
        %v3468 = vadd.f32 %v1932, %v3212
        %v3469 = vadd.f32 %v1933, %v3213
        %v3470 = vadd.f32 %v1934, %v3214
        %v3471 = vadd.f32 %v1935, %v3215
        %v3472 = vadd.f32 %v1936, %v3216
        %v3473 = vadd.f32 %v1937, %v3217
        %v3474 = vadd.f32 %v1938, %v3218
        %v3475 = vadd.f32 %v1939, %v3219
        %v3476 = vadd.f32 %v1940, %v3220
        %v3477 = vadd.f32 %v1941, %v3221
        %v3478 = vadd.f32 %v1942, %v3222
        %v3479 = vadd.f32 %v1943, %v3223
        %v3480 = vadd.f32 %v1944, %v3224
        %v3481 = vadd.f32 %v1945, %v3225
        %v3482 = vadd.f32 %v1946, %v3226
        %v3483 = vadd.f32 %v1947, %v3227
        %v3484 = vadd.f32 %v1948, %v3228
        %v3485 = vadd.f32 %v1949, %v3229
        %v3486 = vadd.f32 %v1950, %v3230
        %v3487 = vadd.f32 %v1951, %v3231
        %v3488 = vadd.f32 %v1952, %v3232
        %v3489 = vadd.f32 %v1953, %v3233
        %v3490 = vadd.f32 %v1954, %v3234
        %v3491 = vadd.f32 %v1955, %v3235
        %v3492 = vadd.f32 %v1956, %v3236
        %v3493 = vadd.f32 %v1957, %v3237
        %v3494 = vadd.f32 %v1958, %v3238
        %v3495 = vadd.f32 %v1959, %v3239
        %v3496 = vadd.f32 %v1960, %v3240
        %v3497 = vadd.f32 %v1961, %v3241
        %v3498 = vadd.f32 %v1962, %v3242
        %v3499 = vadd.f32 %v1963, %v3243
        %v3500 = vadd.f32 %v1964, %v3244
        %v3501 = vadd.f32 %v1965, %v3245
        %v3502 = vadd.f32 %v1966, %v3246
        %v3503 = vadd.f32 %v1967, %v3247
        %v3504 = vadd.f32 %v1968, %v3248
        %v3505 = vadd.f32 %v1969, %v3249
        %v3506 = vadd.f32 %v1970, %v3250
        %v3507 = vadd.f32 %v1971, %v3251
        %v3508 = vadd.f32 %v1972, %v3252
        %v3509 = vadd.f32 %v1973, %v3253
        %v3510 = vadd.f32 %v1974, %v3254
        %v3511 = vadd.f32 %v1975, %v3255
        %v3512 = vadd.f32 %v1976, %v3256
        %v3513 = vadd.f32 %v1977, %v3257
        %v3514 = vadd.f32 %v1978, %v3258
        %v3515 = vadd.f32 %v1979, %v3259
        %v3516 = vadd.f32 %v1980, %v3260
        %v3517 = vadd.f32 %v1981, %v3261
        %v3518 = vadd.f32 %v1982, %v3262
        %v3519 = vadd.f32 %v3263, %v446
        %v3520 = vadd.f32 %v3264, %v446
        %v3521 = vadd.f32 %v3265, %v446
        %v3522 = vadd.f32 %v3266, %v446
        %v3523 = vadd.f32 %v3267, %v446
        %v3524 = vadd.f32 %v3268, %v446
        %v3525 = vadd.f32 %v3269, %v446
        %v3526 = vadd.f32 %v3270, %v446
        %v3527 = vadd.f32 %v3271, %v446
        %v3528 = vadd.f32 %v3272, %v446
        %v3529 = vadd.f32 %v3273, %v446
        %v3530 = vadd.f32 %v3274, %v446
        %v3531 = vadd.f32 %v3275, %v446
        %v3532 = vadd.f32 %v3276, %v446
        %v3533 = vadd.f32 %v3277, %v446
        %v3534 = vadd.f32 %v3278, %v446
        %v3535 = vadd.f32 %v3279, %v446
        %v3536 = vadd.f32 %v3280, %v446
        %v3537 = vadd.f32 %v3281, %v446
        %v3538 = vadd.f32 %v3282, %v446
        %v3539 = vadd.f32 %v3283, %v446
        %v3540 = vadd.f32 %v3284, %v446
        %v3541 = vadd.f32 %v3285, %v446
        %v3542 = vadd.f32 %v3286, %v446
        %v3543 = vadd.f32 %v3287, %v446
        %v3544 = vadd.f32 %v3288, %v446
        %v3545 = vadd.f32 %v3289, %v446
        %v3546 = vadd.f32 %v3290, %v446
        %v3547 = vadd.f32 %v3291, %v446
        %v3548 = vadd.f32 %v3292, %v446
        %v3549 = vadd.f32 %v3293, %v446
        %v3550 = vadd.f32 %v3294, %v446
        %v3551 = vadd.f32 %v3295, %v446
        %v3552 = vadd.f32 %v3296, %v446
        %v3553 = vadd.f32 %v3297, %v446
        %v3554 = vadd.f32 %v3298, %v446
        %v3555 = vadd.f32 %v3299, %v446
        %v3556 = vadd.f32 %v3300, %v446
        %v3557 = vadd.f32 %v3301, %v446
        %v3558 = vadd.f32 %v3302, %v446
        %v3559 = vadd.f32 %v3303, %v446
        %v3560 = vadd.f32 %v3304, %v446
        %v3561 = vadd.f32 %v3305, %v446
        %v3562 = vadd.f32 %v3306, %v446
        %v3563 = vadd.f32 %v3307, %v446
        %v3564 = vadd.f32 %v3308, %v446
        %v3565 = vadd.f32 %v3309, %v446
        %v3566 = vadd.f32 %v3310, %v446
        %v3567 = vadd.f32 %v3311, %v446
        %v3568 = vadd.f32 %v3312, %v446
        %v3569 = vadd.f32 %v3313, %v446
        %v3570 = vadd.f32 %v3314, %v446
        %v3571 = vadd.f32 %v3315, %v446
        %v3572 = vadd.f32 %v3316, %v446
        %v3573 = vadd.f32 %v3317, %v446
        %v3574 = vadd.f32 %v3318, %v446
        %v3575 = vadd.f32 %v3319, %v446
        %v3576 = vadd.f32 %v3320, %v446
        %v3577 = vadd.f32 %v3321, %v446
        %v3578 = vadd.f32 %v3322, %v446
        %v3579 = vadd.f32 %v3323, %v446
        %v3580 = vadd.f32 %v3324, %v446
        %v3581 = vadd.f32 %v3325, %v446
        %v3582 = vadd.f32 %v3326, %v446
        %v3583 = vadd.f32 %v3327, %v446
        %v3584 = vadd.f32 %v3328, %v446
        %v3585 = vadd.f32 %v3329, %v446
        %v3586 = vadd.f32 %v3330, %v446
        %v3587 = vadd.f32 %v3331, %v446
        %v3588 = vadd.f32 %v3332, %v446
        %v3589 = vadd.f32 %v3333, %v446
        %v3590 = vadd.f32 %v3334, %v446
        %v3591 = vadd.f32 %v3335, %v446
        %v3592 = vadd.f32 %v3336, %v446
        %v3593 = vadd.f32 %v3337, %v446
        %v3594 = vadd.f32 %v3338, %v446
        %v3595 = vadd.f32 %v3339, %v446
        %v3596 = vadd.f32 %v3340, %v446
        %v3597 = vadd.f32 %v3341, %v446
        %v3598 = vadd.f32 %v3342, %v446
        %v3599 = vadd.f32 %v3343, %v446
        %v3600 = vadd.f32 %v3344, %v446
        %v3601 = vadd.f32 %v3345, %v446
        %v3602 = vadd.f32 %v3346, %v446
        %v3603 = vadd.f32 %v3347, %v446
        %v3604 = vadd.f32 %v3348, %v446
        %v3605 = vadd.f32 %v3349, %v446
        %v3606 = vadd.f32 %v3350, %v446
        %v3607 = vadd.f32 %v3351, %v446
        %v3608 = vadd.f32 %v3352, %v446
        %v3609 = vadd.f32 %v3353, %v446
        %v3610 = vadd.f32 %v3354, %v446
        %v3611 = vadd.f32 %v3355, %v446
        %v3612 = vadd.f32 %v3356, %v446
        %v3613 = vadd.f32 %v3357, %v446
        %v3614 = vadd.f32 %v3358, %v446
        %v3615 = vadd.f32 %v3359, %v446
        %v3616 = vadd.f32 %v3360, %v446
        %v3617 = vadd.f32 %v3361, %v446
        %v3618 = vadd.f32 %v3362, %v446
        %v3619 = vadd.f32 %v3363, %v446
        %v3620 = vadd.f32 %v3364, %v446
        %v3621 = vadd.f32 %v3365, %v446
        %v3622 = vadd.f32 %v3366, %v446
        %v3623 = vadd.f32 %v3367, %v446
        %v3624 = vadd.f32 %v3368, %v446
        %v3625 = vadd.f32 %v3369, %v446
        %v3626 = vadd.f32 %v3370, %v446
        %v3627 = vadd.f32 %v3371, %v446
        %v3628 = vadd.f32 %v3372, %v446
        %v3629 = vadd.f32 %v3373, %v446
        %v3630 = vadd.f32 %v3374, %v446
        %v3631 = vadd.f32 %v3375, %v446
        %v3632 = vadd.f32 %v3376, %v446
        %v3633 = vadd.f32 %v3377, %v446
        %v3634 = vadd.f32 %v3378, %v446
        %v3635 = vadd.f32 %v3379, %v446
        %v3636 = vadd.f32 %v3380, %v446
        %v3637 = vadd.f32 %v3381, %v446
        %v3638 = vadd.f32 %v3382, %v446
        %v3639 = vadd.f32 %v3383, %v446
        %v3640 = vadd.f32 %v3384, %v446
        %v3641 = vadd.f32 %v3385, %v446
        %v3642 = vadd.f32 %v3386, %v446
        %v3643 = vadd.f32 %v3387, %v446
        %v3644 = vadd.f32 %v3388, %v446
        %v3645 = vadd.f32 %v3389, %v446
        %v3646 = vadd.f32 %v3390, %v446
        %v3647 = vadd.f32 %v3391, %v446
        %v3648 = vadd.f32 %v3392, %v446
        %v3649 = vadd.f32 %v3393, %v446
        %v3650 = vadd.f32 %v3394, %v446
        %v3651 = vadd.f32 %v3395, %v446
        %v3652 = vadd.f32 %v3396, %v446
        %v3653 = vadd.f32 %v3397, %v446
        %v3654 = vadd.f32 %v3398, %v446
        %v3655 = vadd.f32 %v3399, %v446
        %v3656 = vadd.f32 %v3400, %v446
        %v3657 = vadd.f32 %v3401, %v446
        %v3658 = vadd.f32 %v3402, %v446
        %v3659 = vadd.f32 %v3403, %v446
        %v3660 = vadd.f32 %v3404, %v446
        %v3661 = vadd.f32 %v3405, %v446
        %v3662 = vadd.f32 %v3406, %v446
        %v3663 = vadd.f32 %v3407, %v446
        %v3664 = vadd.f32 %v3408, %v446
        %v3665 = vadd.f32 %v3409, %v446
        %v3666 = vadd.f32 %v3410, %v446
        %v3667 = vadd.f32 %v3411, %v446
        %v3668 = vadd.f32 %v3412, %v446
        %v3669 = vadd.f32 %v3413, %v446
        %v3670 = vadd.f32 %v3414, %v446
        %v3671 = vadd.f32 %v3415, %v446
        %v3672 = vadd.f32 %v3416, %v446
        %v3673 = vadd.f32 %v3417, %v446
        %v3674 = vadd.f32 %v3418, %v446
        %v3675 = vadd.f32 %v3419, %v446
        %v3676 = vadd.f32 %v3420, %v446
        %v3677 = vadd.f32 %v3421, %v446
        %v3678 = vadd.f32 %v3422, %v446
        %v3679 = vadd.f32 %v3423, %v446
        %v3680 = vadd.f32 %v3424, %v446
        %v3681 = vadd.f32 %v3425, %v446
        %v3682 = vadd.f32 %v3426, %v446
        %v3683 = vadd.f32 %v3427, %v446
        %v3684 = vadd.f32 %v3428, %v446
        %v3685 = vadd.f32 %v3429, %v446
        %v3686 = vadd.f32 %v3430, %v446
        %v3687 = vadd.f32 %v3431, %v446
        %v3688 = vadd.f32 %v3432, %v446
        %v3689 = vadd.f32 %v3433, %v446
        %v3690 = vadd.f32 %v3434, %v446
        %v3691 = vadd.f32 %v3435, %v446
        %v3692 = vadd.f32 %v3436, %v446
        %v3693 = vadd.f32 %v3437, %v446
        %v3694 = vadd.f32 %v3438, %v446
        %v3695 = vadd.f32 %v3439, %v446
        %v3696 = vadd.f32 %v3440, %v446
        %v3697 = vadd.f32 %v3441, %v446
        %v3698 = vadd.f32 %v3442, %v446
        %v3699 = vadd.f32 %v3443, %v446
        %v3700 = vadd.f32 %v3444, %v446
        %v3701 = vadd.f32 %v3445, %v446
        %v3702 = vadd.f32 %v3446, %v446
        %v3703 = vadd.f32 %v3447, %v446
        %v3704 = vadd.f32 %v3448, %v446
        %v3705 = vadd.f32 %v3449, %v446
        %v3706 = vadd.f32 %v3450, %v446
        %v3707 = vadd.f32 %v3451, %v446
        %v3708 = vadd.f32 %v3452, %v446
        %v3709 = vadd.f32 %v3453, %v446
        %v3710 = vadd.f32 %v3454, %v446
        %v3711 = vadd.f32 %v3455, %v446
        %v3712 = vadd.f32 %v3456, %v446
        %v3713 = vadd.f32 %v3457, %v446
        %v3714 = vadd.f32 %v3458, %v446
        %v3715 = vadd.f32 %v3459, %v446
        %v3716 = vadd.f32 %v3460, %v446
        %v3717 = vadd.f32 %v3461, %v446
        %v3718 = vadd.f32 %v3462, %v446
        %v3719 = vadd.f32 %v3463, %v446
        %v3720 = vadd.f32 %v3464, %v446
        %v3721 = vadd.f32 %v3465, %v446
        %v3722 = vadd.f32 %v3466, %v446
        %v3723 = vadd.f32 %v3467, %v446
        %v3724 = vadd.f32 %v3468, %v446
        %v3725 = vadd.f32 %v3469, %v446
        %v3726 = vadd.f32 %v3470, %v446
        %v3727 = vadd.f32 %v3471, %v446
        %v3728 = vadd.f32 %v3472, %v446
        %v3729 = vadd.f32 %v3473, %v446
        %v3730 = vadd.f32 %v3474, %v446
        %v3731 = vadd.f32 %v3475, %v446
        %v3732 = vadd.f32 %v3476, %v446
        %v3733 = vadd.f32 %v3477, %v446
        %v3734 = vadd.f32 %v3478, %v446
        %v3735 = vadd.f32 %v3479, %v446
        %v3736 = vadd.f32 %v3480, %v446
        %v3737 = vadd.f32 %v3481, %v446
        %v3738 = vadd.f32 %v3482, %v446
        %v3739 = vadd.f32 %v3483, %v446
        %v3740 = vadd.f32 %v3484, %v446
        %v3741 = vadd.f32 %v3485, %v446
        %v3742 = vadd.f32 %v3486, %v446
        %v3743 = vadd.f32 %v3487, %v446
        %v3744 = vadd.f32 %v3488, %v446
        %v3745 = vadd.f32 %v3489, %v446
        %v3746 = vadd.f32 %v3490, %v446
        %v3747 = vadd.f32 %v3491, %v446
        %v3748 = vadd.f32 %v3492, %v446
        %v3749 = vadd.f32 %v3493, %v446
        %v3750 = vadd.f32 %v3494, %v446
        %v3751 = vadd.f32 %v3495, %v446
        %v3752 = vadd.f32 %v3496, %v446
        %v3753 = vadd.f32 %v3497, %v446
        %v3754 = vadd.f32 %v3498, %v446
        %v3755 = vadd.f32 %v3499, %v446
        %v3756 = vadd.f32 %v3500, %v446
        %v3757 = vadd.f32 %v3501, %v446
        %v3758 = vadd.f32 %v3502, %v446
        %v3759 = vadd.f32 %v3503, %v446
        %v3760 = vadd.f32 %v3504, %v446
        %v3761 = vadd.f32 %v3505, %v446
        %v3762 = vadd.f32 %v3506, %v446
        %v3763 = vadd.f32 %v3507, %v446
        %v3764 = vadd.f32 %v3508, %v446
        %v3765 = vadd.f32 %v3509, %v446
        %v3766 = vadd.f32 %v3510, %v446
        %v3767 = vadd.f32 %v3511, %v446
        %v3768 = vadd.f32 %v3512, %v446
        %v3769 = vadd.f32 %v3513, %v446
        %v3770 = vadd.f32 %v3514, %v446
        %v3771 = vadd.f32 %v3515, %v446
        %v3772 = vadd.f32 %v3516, %v446
        %v3773 = vadd.f32 %v3517, %v446
        %v3774 = vadd.f32 %v3518, %v446
        %vm3775 = vcmask 97280
        %3776 = vst.msk [vmem:[%s159] sm:$0xff] %vm3775, %v3519
        %3777 = vst.msk [vmem:[%s159 + $0x8] sm:$0xff] %vm3775, %v3520
        %3778 = vst.msk [vmem:[%s159 + $0x10] sm:$0xff] %vm3775, %v3521
        %3779 = vst.msk [vmem:[%s159 + $0x18] sm:$0xff] %vm3775, %v3522
        %3780 = vst.msk [vmem:[%s159 + $0x20] sm:$0xff] %vm3775, %v3523
        %3781 = vst.msk [vmem:[%s159 + $0x28] sm:$0xff] %vm3775, %v3524
        %3782 = vst.msk [vmem:[%s159 + $0x30] sm:$0xff] %vm3775, %v3525
        %3783 = vst.msk [vmem:[%s159 + $0x38] sm:$0xff] %vm3775, %v3526
        %3784 = vst.msk [vmem:[%s159 + $0x40] sm:$0xff] %vm3775, %v3527
        %3785 = vst.msk [vmem:[%s159 + $0x48] sm:$0xff] %vm3775, %v3528
        %3786 = vst.msk [vmem:[%s159 + $0x50] sm:$0xff] %vm3775, %v3529
        %3787 = vst.msk [vmem:[%s159 + $0x58] sm:$0xff] %vm3775, %v3530
        %3788 = vst.msk [vmem:[%s159 + $0x60] sm:$0xff] %vm3775, %v3531
        %3789 = vst.msk [vmem:[%s159 + $0x68] sm:$0xff] %vm3775, %v3532
        %3790 = vst.msk [vmem:[%s159 + $0x70] sm:$0xff] %vm3775, %v3533
        %3791 = vst.msk [vmem:[%s159 + $0x78] sm:$0xff] %vm3775, %v3534
        %3792 = vst.msk [vmem:[%s159 + $0x80] sm:$0xff] %vm3775, %v3535
        %3793 = vst.msk [vmem:[%s159 + $0x88] sm:$0xff] %vm3775, %v3536
        %3794 = vst.msk [vmem:[%s159 + $0x90] sm:$0xff] %vm3775, %v3537
        %3795 = vst.msk [vmem:[%s159 + $0x98] sm:$0xff] %vm3775, %v3538
        %3796 = vst.msk [vmem:[%s159 + $0xa0] sm:$0xff] %vm3775, %v3539
        %3797 = vst.msk [vmem:[%s159 + $0xa8] sm:$0xff] %vm3775, %v3540
        %3798 = vst.msk [vmem:[%s159 + $0xb0] sm:$0xff] %vm3775, %v3541
        %3799 = vst.msk [vmem:[%s159 + $0xb8] sm:$0xff] %vm3775, %v3542
        %3800 = vst.msk [vmem:[%s159 + $0xc0] sm:$0xff] %vm3775, %v3543
        %3801 = vst.msk [vmem:[%s159 + $0xc8] sm:$0xff] %vm3775, %v3544
        %3802 = vst.msk [vmem:[%s159 + $0xd0] sm:$0xff] %vm3775, %v3545
        %3803 = vst.msk [vmem:[%s159 + $0xd8] sm:$0xff] %vm3775, %v3546
        %3804 = vst.msk [vmem:[%s159 + $0xe0] sm:$0xff] %vm3775, %v3547
        %3805 = vst.msk [vmem:[%s159 + $0xe8] sm:$0xff] %vm3775, %v3548
        %3806 = vst.msk [vmem:[%s159 + $0xf0] sm:$0xff] %vm3775, %v3549
        %3807 = vst.msk [vmem:[%s159 + $0xf8] sm:$0xff] %vm3775, %v3550
        %3808 = vst.msk [vmem:[%s159 + $0x100] sm:$0xff] %vm3775, %v3551
        %3809 = vst.msk [vmem:[%s159 + $0x108] sm:$0xff] %vm3775, %v3552
        %3810 = vst.msk [vmem:[%s159 + $0x110] sm:$0xff] %vm3775, %v3553
        %3811 = vst.msk [vmem:[%s159 + $0x118] sm:$0xff] %vm3775, %v3554
        %3812 = vst.msk [vmem:[%s159 + $0x120] sm:$0xff] %vm3775, %v3555
        %3813 = vst.msk [vmem:[%s159 + $0x128] sm:$0xff] %vm3775, %v3556
        %3814 = vst.msk [vmem:[%s159 + $0x130] sm:$0xff] %vm3775, %v3557
        %3815 = vst.msk [vmem:[%s159 + $0x138] sm:$0xff] %vm3775, %v3558
        %3816 = vst.msk [vmem:[%s159 + $0x140] sm:$0xff] %vm3775, %v3559
        %3817 = vst.msk [vmem:[%s159 + $0x148] sm:$0xff] %vm3775, %v3560
        %3818 = vst.msk [vmem:[%s159 + $0x150] sm:$0xff] %vm3775, %v3561
        %3819 = vst.msk [vmem:[%s159 + $0x158] sm:$0xff] %vm3775, %v3562
        %3820 = vst.msk [vmem:[%s159 + $0x160] sm:$0xff] %vm3775, %v3563
        %3821 = vst.msk [vmem:[%s159 + $0x168] sm:$0xff] %vm3775, %v3564
        %3822 = vst.msk [vmem:[%s159 + $0x170] sm:$0xff] %vm3775, %v3565
        %3823 = vst.msk [vmem:[%s159 + $0x178] sm:$0xff] %vm3775, %v3566
        %3824 = vst.msk [vmem:[%s159 + $0x180] sm:$0xff] %vm3775, %v3567
        %3825 = vst.msk [vmem:[%s159 + $0x188] sm:$0xff] %vm3775, %v3568
        %3826 = vst.msk [vmem:[%s159 + $0x190] sm:$0xff] %vm3775, %v3569
        %3827 = vst.msk [vmem:[%s159 + $0x198] sm:$0xff] %vm3775, %v3570
        %3828 = vst.msk [vmem:[%s159 + $0x1a0] sm:$0xff] %vm3775, %v3571
        %3829 = vst.msk [vmem:[%s159 + $0x1a8] sm:$0xff] %vm3775, %v3572
        %3830 = vst.msk [vmem:[%s159 + $0x1b0] sm:$0xff] %vm3775, %v3573
        %3831 = vst.msk [vmem:[%s159 + $0x1b8] sm:$0xff] %vm3775, %v3574
        %3832 = vst.msk [vmem:[%s159 + $0x1c0] sm:$0xff] %vm3775, %v3575
        %3833 = vst.msk [vmem:[%s159 + $0x1c8] sm:$0xff] %vm3775, %v3576
        %3834 = vst.msk [vmem:[%s159 + $0x1d0] sm:$0xff] %vm3775, %v3577
        %3835 = vst.msk [vmem:[%s159 + $0x1d8] sm:$0xff] %vm3775, %v3578
        %3836 = vst.msk [vmem:[%s159 + $0x1e0] sm:$0xff] %vm3775, %v3579
        %3837 = vst.msk [vmem:[%s159 + $0x1e8] sm:$0xff] %vm3775, %v3580
        %3838 = vst.msk [vmem:[%s159 + $0x1f0] sm:$0xff] %vm3775, %v3581
        %3839 = vst.msk [vmem:[%s159 + $0x1f8] sm:$0xff] %vm3775, %v3582
        %3840 = vst.msk [vmem:[%s159 + $0x200] sm:$0xff] %vm3775, %v3583
        %3841 = vst.msk [vmem:[%s159 + $0x208] sm:$0xff] %vm3775, %v3584
        %3842 = vst.msk [vmem:[%s159 + $0x210] sm:$0xff] %vm3775, %v3585
        %3843 = vst.msk [vmem:[%s159 + $0x218] sm:$0xff] %vm3775, %v3586
        %3844 = vst.msk [vmem:[%s159 + $0x220] sm:$0xff] %vm3775, %v3587
        %3845 = vst.msk [vmem:[%s159 + $0x228] sm:$0xff] %vm3775, %v3588
        %3846 = vst.msk [vmem:[%s159 + $0x230] sm:$0xff] %vm3775, %v3589
        %3847 = vst.msk [vmem:[%s159 + $0x238] sm:$0xff] %vm3775, %v3590
        %3848 = vst.msk [vmem:[%s159 + $0x240] sm:$0xff] %vm3775, %v3591
        %3849 = vst.msk [vmem:[%s159 + $0x248] sm:$0xff] %vm3775, %v3592
        %3850 = vst.msk [vmem:[%s159 + $0x250] sm:$0xff] %vm3775, %v3593
        %3851 = vst.msk [vmem:[%s159 + $0x258] sm:$0xff] %vm3775, %v3594
        %3852 = vst.msk [vmem:[%s159 + $0x260] sm:$0xff] %vm3775, %v3595
        %3853 = vst.msk [vmem:[%s159 + $0x268] sm:$0xff] %vm3775, %v3596
        %3854 = vst.msk [vmem:[%s159 + $0x270] sm:$0xff] %vm3775, %v3597
        %3855 = vst.msk [vmem:[%s159 + $0x278] sm:$0xff] %vm3775, %v3598
        %3856 = vst.msk [vmem:[%s159 + $0x280] sm:$0xff] %vm3775, %v3599
        %3857 = vst.msk [vmem:[%s159 + $0x288] sm:$0xff] %vm3775, %v3600
        %3858 = vst.msk [vmem:[%s159 + $0x290] sm:$0xff] %vm3775, %v3601
        %3859 = vst.msk [vmem:[%s159 + $0x298] sm:$0xff] %vm3775, %v3602
        %3860 = vst.msk [vmem:[%s159 + $0x2a0] sm:$0xff] %vm3775, %v3603
        %3861 = vst.msk [vmem:[%s159 + $0x2a8] sm:$0xff] %vm3775, %v3604
        %3862 = vst.msk [vmem:[%s159 + $0x2b0] sm:$0xff] %vm3775, %v3605
        %3863 = vst.msk [vmem:[%s159 + $0x2b8] sm:$0xff] %vm3775, %v3606
        %3864 = vst.msk [vmem:[%s159 + $0x2c0] sm:$0xff] %vm3775, %v3607
        %3865 = vst.msk [vmem:[%s159 + $0x2c8] sm:$0xff] %vm3775, %v3608
        %3866 = vst.msk [vmem:[%s159 + $0x2d0] sm:$0xff] %vm3775, %v3609
        %3867 = vst.msk [vmem:[%s159 + $0x2d8] sm:$0xff] %vm3775, %v3610
        %3868 = vst.msk [vmem:[%s159 + $0x2e0] sm:$0xff] %vm3775, %v3611
        %3869 = vst.msk [vmem:[%s159 + $0x2e8] sm:$0xff] %vm3775, %v3612
        %3870 = vst.msk [vmem:[%s159 + $0x2f0] sm:$0xff] %vm3775, %v3613
        %3871 = vst.msk [vmem:[%s159 + $0x2f8] sm:$0xff] %vm3775, %v3614
        %3872 = vst.msk [vmem:[%s159 + $0x300] sm:$0xff] %vm3775, %v3615
        %3873 = vst.msk [vmem:[%s159 + $0x308] sm:$0xff] %vm3775, %v3616
        %3874 = vst.msk [vmem:[%s159 + $0x310] sm:$0xff] %vm3775, %v3617
        %3875 = vst.msk [vmem:[%s159 + $0x318] sm:$0xff] %vm3775, %v3618
        %3876 = vst.msk [vmem:[%s159 + $0x320] sm:$0xff] %vm3775, %v3619
        %3877 = vst.msk [vmem:[%s159 + $0x328] sm:$0xff] %vm3775, %v3620
        %3878 = vst.msk [vmem:[%s159 + $0x330] sm:$0xff] %vm3775, %v3621
        %3879 = vst.msk [vmem:[%s159 + $0x338] sm:$0xff] %vm3775, %v3622
        %3880 = vst.msk [vmem:[%s159 + $0x340] sm:$0xff] %vm3775, %v3623
        %3881 = vst.msk [vmem:[%s159 + $0x348] sm:$0xff] %vm3775, %v3624
        %3882 = vst.msk [vmem:[%s159 + $0x350] sm:$0xff] %vm3775, %v3625
        %3883 = vst.msk [vmem:[%s159 + $0x358] sm:$0xff] %vm3775, %v3626
        %3884 = vst.msk [vmem:[%s159 + $0x360] sm:$0xff] %vm3775, %v3627
        %3885 = vst.msk [vmem:[%s159 + $0x368] sm:$0xff] %vm3775, %v3628
        %3886 = vst.msk [vmem:[%s159 + $0x370] sm:$0xff] %vm3775, %v3629
        %3887 = vst.msk [vmem:[%s159 + $0x378] sm:$0xff] %vm3775, %v3630
        %3888 = vst.msk [vmem:[%s159 + $0x380] sm:$0xff] %vm3775, %v3631
        %3889 = vst.msk [vmem:[%s159 + $0x388] sm:$0xff] %vm3775, %v3632
        %3890 = vst.msk [vmem:[%s159 + $0x390] sm:$0xff] %vm3775, %v3633
        %3891 = vst.msk [vmem:[%s159 + $0x398] sm:$0xff] %vm3775, %v3634
        %3892 = vst.msk [vmem:[%s159 + $0x3a0] sm:$0xff] %vm3775, %v3635
        %3893 = vst.msk [vmem:[%s159 + $0x3a8] sm:$0xff] %vm3775, %v3636
        %3894 = vst.msk [vmem:[%s159 + $0x3b0] sm:$0xff] %vm3775, %v3637
        %3895 = vst.msk [vmem:[%s159 + $0x3b8] sm:$0xff] %vm3775, %v3638
        %3896 = vst.msk [vmem:[%s159 + $0x3c0] sm:$0xff] %vm3775, %v3639
        %3897 = vst.msk [vmem:[%s159 + $0x3c8] sm:$0xff] %vm3775, %v3640
        %3898 = vst.msk [vmem:[%s159 + $0x3d0] sm:$0xff] %vm3775, %v3641
        %3899 = vst.msk [vmem:[%s159 + $0x3d8] sm:$0xff] %vm3775, %v3642
        %3900 = vst.msk [vmem:[%s159 + $0x3e0] sm:$0xff] %vm3775, %v3643
        %3901 = vst.msk [vmem:[%s159 + $0x3e8] sm:$0xff] %vm3775, %v3644
        %3902 = vst.msk [vmem:[%s159 + $0x3f0] sm:$0xff] %vm3775, %v3645
        %3903 = vst.msk [vmem:[%s159 + $0x3f8] sm:$0xff] %vm3775, %v3646
        %3904 = vst.msk [vmem:[%s159 + $0x400] sm:$0xff] %vm3775, %v3647
        %3905 = vst.msk [vmem:[%s159 + $0x408] sm:$0xff] %vm3775, %v3648
        %3906 = vst.msk [vmem:[%s159 + $0x410] sm:$0xff] %vm3775, %v3649
        %3907 = vst.msk [vmem:[%s159 + $0x418] sm:$0xff] %vm3775, %v3650
        %3908 = vst.msk [vmem:[%s159 + $0x420] sm:$0xff] %vm3775, %v3651
        %3909 = vst.msk [vmem:[%s159 + $0x428] sm:$0xff] %vm3775, %v3652
        %3910 = vst.msk [vmem:[%s159 + $0x430] sm:$0xff] %vm3775, %v3653
        %3911 = vst.msk [vmem:[%s159 + $0x438] sm:$0xff] %vm3775, %v3654
        %3912 = vst.msk [vmem:[%s159 + $0x440] sm:$0xff] %vm3775, %v3655
        %3913 = vst.msk [vmem:[%s159 + $0x448] sm:$0xff] %vm3775, %v3656
        %3914 = vst.msk [vmem:[%s159 + $0x450] sm:$0xff] %vm3775, %v3657
        %3915 = vst.msk [vmem:[%s159 + $0x458] sm:$0xff] %vm3775, %v3658
        %3916 = vst.msk [vmem:[%s159 + $0x460] sm:$0xff] %vm3775, %v3659
        %3917 = vst.msk [vmem:[%s159 + $0x468] sm:$0xff] %vm3775, %v3660
        %3918 = vst.msk [vmem:[%s159 + $0x470] sm:$0xff] %vm3775, %v3661
        %3919 = vst.msk [vmem:[%s159 + $0x478] sm:$0xff] %vm3775, %v3662
        %3920 = vst.msk [vmem:[%s159 + $0x480] sm:$0xff] %vm3775, %v3663
        %3921 = vst.msk [vmem:[%s159 + $0x488] sm:$0xff] %vm3775, %v3664
        %3922 = vst.msk [vmem:[%s159 + $0x490] sm:$0xff] %vm3775, %v3665
        %3923 = vst.msk [vmem:[%s159 + $0x498] sm:$0xff] %vm3775, %v3666
        %3924 = vst.msk [vmem:[%s159 + $0x4a0] sm:$0xff] %vm3775, %v3667
        %3925 = vst.msk [vmem:[%s159 + $0x4a8] sm:$0xff] %vm3775, %v3668
        %3926 = vst.msk [vmem:[%s159 + $0x4b0] sm:$0xff] %vm3775, %v3669
        %3927 = vst.msk [vmem:[%s159 + $0x4b8] sm:$0xff] %vm3775, %v3670
        %3928 = vst.msk [vmem:[%s159 + $0x4c0] sm:$0xff] %vm3775, %v3671
        %3929 = vst.msk [vmem:[%s159 + $0x4c8] sm:$0xff] %vm3775, %v3672
        %3930 = vst.msk [vmem:[%s159 + $0x4d0] sm:$0xff] %vm3775, %v3673
        %3931 = vst.msk [vmem:[%s159 + $0x4d8] sm:$0xff] %vm3775, %v3674
        %3932 = vst.msk [vmem:[%s159 + $0x4e0] sm:$0xff] %vm3775, %v3675
        %3933 = vst.msk [vmem:[%s159 + $0x4e8] sm:$0xff] %vm3775, %v3676
        %3934 = vst.msk [vmem:[%s159 + $0x4f0] sm:$0xff] %vm3775, %v3677
        %3935 = vst.msk [vmem:[%s159 + $0x4f8] sm:$0xff] %vm3775, %v3678
        %3936 = vst.msk [vmem:[%s159 + $0x500] sm:$0xff] %vm3775, %v3679
        %3937 = vst.msk [vmem:[%s159 + $0x508] sm:$0xff] %vm3775, %v3680
        %3938 = vst.msk [vmem:[%s159 + $0x510] sm:$0xff] %vm3775, %v3681
        %3939 = vst.msk [vmem:[%s159 + $0x518] sm:$0xff] %vm3775, %v3682
        %3940 = vst.msk [vmem:[%s159 + $0x520] sm:$0xff] %vm3775, %v3683
        %3941 = vst.msk [vmem:[%s159 + $0x528] sm:$0xff] %vm3775, %v3684
        %3942 = vst.msk [vmem:[%s159 + $0x530] sm:$0xff] %vm3775, %v3685
        %3943 = vst.msk [vmem:[%s159 + $0x538] sm:$0xff] %vm3775, %v3686
        %3944 = vst.msk [vmem:[%s159 + $0x540] sm:$0xff] %vm3775, %v3687
        %3945 = vst.msk [vmem:[%s159 + $0x548] sm:$0xff] %vm3775, %v3688
        %3946 = vst.msk [vmem:[%s159 + $0x550] sm:$0xff] %vm3775, %v3689
        %3947 = vst.msk [vmem:[%s159 + $0x558] sm:$0xff] %vm3775, %v3690
        %3948 = vst.msk [vmem:[%s159 + $0x560] sm:$0xff] %vm3775, %v3691
        %3949 = vst.msk [vmem:[%s159 + $0x568] sm:$0xff] %vm3775, %v3692
        %3950 = vst.msk [vmem:[%s159 + $0x570] sm:$0xff] %vm3775, %v3693
        %3951 = vst.msk [vmem:[%s159 + $0x578] sm:$0xff] %vm3775, %v3694
        %3952 = vst.msk [vmem:[%s159 + $0x580] sm:$0xff] %vm3775, %v3695
        %3953 = vst.msk [vmem:[%s159 + $0x588] sm:$0xff] %vm3775, %v3696
        %3954 = vst.msk [vmem:[%s159 + $0x590] sm:$0xff] %vm3775, %v3697
        %3955 = vst.msk [vmem:[%s159 + $0x598] sm:$0xff] %vm3775, %v3698
        %3956 = vst.msk [vmem:[%s159 + $0x5a0] sm:$0xff] %vm3775, %v3699
        %3957 = vst.msk [vmem:[%s159 + $0x5a8] sm:$0xff] %vm3775, %v3700
        %3958 = vst.msk [vmem:[%s159 + $0x5b0] sm:$0xff] %vm3775, %v3701
        %3959 = vst.msk [vmem:[%s159 + $0x5b8] sm:$0xff] %vm3775, %v3702
        %3960 = vst.msk [vmem:[%s159 + $0x5c0] sm:$0xff] %vm3775, %v3703
        %3961 = vst.msk [vmem:[%s159 + $0x5c8] sm:$0xff] %vm3775, %v3704
        %3962 = vst.msk [vmem:[%s159 + $0x5d0] sm:$0xff] %vm3775, %v3705
        %3963 = vst.msk [vmem:[%s159 + $0x5d8] sm:$0xff] %vm3775, %v3706
        %3964 = vst.msk [vmem:[%s159 + $0x5e0] sm:$0xff] %vm3775, %v3707
        %3965 = vst.msk [vmem:[%s159 + $0x5e8] sm:$0xff] %vm3775, %v3708
        %3966 = vst.msk [vmem:[%s159 + $0x5f0] sm:$0xff] %vm3775, %v3709
        %3967 = vst.msk [vmem:[%s159 + $0x5f8] sm:$0xff] %vm3775, %v3710
        %3968 = vst.msk [vmem:[%s159 + $0x600] sm:$0xff] %vm3775, %v3711
        %3969 = vst.msk [vmem:[%s159 + $0x608] sm:$0xff] %vm3775, %v3712
        %3970 = vst.msk [vmem:[%s159 + $0x610] sm:$0xff] %vm3775, %v3713
        %3971 = vst.msk [vmem:[%s159 + $0x618] sm:$0xff] %vm3775, %v3714
        %3972 = vst.msk [vmem:[%s159 + $0x620] sm:$0xff] %vm3775, %v3715
        %3973 = vst.msk [vmem:[%s159 + $0x628] sm:$0xff] %vm3775, %v3716
        %3974 = vst.msk [vmem:[%s159 + $0x630] sm:$0xff] %vm3775, %v3717
        %3975 = vst.msk [vmem:[%s159 + $0x638] sm:$0xff] %vm3775, %v3718
        %3976 = vst.msk [vmem:[%s159 + $0x640] sm:$0xff] %vm3775, %v3719
        %3977 = vst.msk [vmem:[%s159 + $0x648] sm:$0xff] %vm3775, %v3720
        %3978 = vst.msk [vmem:[%s159 + $0x650] sm:$0xff] %vm3775, %v3721
        %3979 = vst.msk [vmem:[%s159 + $0x658] sm:$0xff] %vm3775, %v3722
        %3980 = vst.msk [vmem:[%s159 + $0x660] sm:$0xff] %vm3775, %v3723
        %3981 = vst.msk [vmem:[%s159 + $0x668] sm:$0xff] %vm3775, %v3724
        %3982 = vst.msk [vmem:[%s159 + $0x670] sm:$0xff] %vm3775, %v3725
        %3983 = vst.msk [vmem:[%s159 + $0x678] sm:$0xff] %vm3775, %v3726
        %3984 = vst.msk [vmem:[%s159 + $0x680] sm:$0xff] %vm3775, %v3727
        %3985 = vst.msk [vmem:[%s159 + $0x688] sm:$0xff] %vm3775, %v3728
        %3986 = vst.msk [vmem:[%s159 + $0x690] sm:$0xff] %vm3775, %v3729
        %3987 = vst.msk [vmem:[%s159 + $0x698] sm:$0xff] %vm3775, %v3730
        %3988 = vst.msk [vmem:[%s159 + $0x6a0] sm:$0xff] %vm3775, %v3731
        %3989 = vst.msk [vmem:[%s159 + $0x6a8] sm:$0xff] %vm3775, %v3732
        %3990 = vst.msk [vmem:[%s159 + $0x6b0] sm:$0xff] %vm3775, %v3733
        %3991 = vst.msk [vmem:[%s159 + $0x6b8] sm:$0xff] %vm3775, %v3734
        %3992 = vst.msk [vmem:[%s159 + $0x6c0] sm:$0xff] %vm3775, %v3735
        %3993 = vst.msk [vmem:[%s159 + $0x6c8] sm:$0xff] %vm3775, %v3736
        %3994 = vst.msk [vmem:[%s159 + $0x6d0] sm:$0xff] %vm3775, %v3737
        %3995 = vst.msk [vmem:[%s159 + $0x6d8] sm:$0xff] %vm3775, %v3738
        %3996 = vst.msk [vmem:[%s159 + $0x6e0] sm:$0xff] %vm3775, %v3739
        %3997 = vst.msk [vmem:[%s159 + $0x6e8] sm:$0xff] %vm3775, %v3740
        %3998 = vst.msk [vmem:[%s159 + $0x6f0] sm:$0xff] %vm3775, %v3741
        %3999 = vst.msk [vmem:[%s159 + $0x6f8] sm:$0xff] %vm3775, %v3742
        %4000 = vst.msk [vmem:[%s159 + $0x700] sm:$0xff] %vm3775, %v3743
        %4001 = vst.msk [vmem:[%s159 + $0x708] sm:$0xff] %vm3775, %v3744
        %4002 = vst.msk [vmem:[%s159 + $0x710] sm:$0xff] %vm3775, %v3745
        %4003 = vst.msk [vmem:[%s159 + $0x718] sm:$0xff] %vm3775, %v3746
        %4004 = vst.msk [vmem:[%s159 + $0x720] sm:$0xff] %vm3775, %v3747
        %4005 = vst.msk [vmem:[%s159 + $0x728] sm:$0xff] %vm3775, %v3748
        %4006 = vst.msk [vmem:[%s159 + $0x730] sm:$0xff] %vm3775, %v3749
        %4007 = vst.msk [vmem:[%s159 + $0x738] sm:$0xff] %vm3775, %v3750
        %4008 = vst.msk [vmem:[%s159 + $0x740] sm:$0xff] %vm3775, %v3751
        %4009 = vst.msk [vmem:[%s159 + $0x748] sm:$0xff] %vm3775, %v3752
        %4010 = vst.msk [vmem:[%s159 + $0x750] sm:$0xff] %vm3775, %v3753
        %4011 = vst.msk [vmem:[%s159 + $0x758] sm:$0xff] %vm3775, %v3754
        %4012 = vst.msk [vmem:[%s159 + $0x760] sm:$0xff] %vm3775, %v3755
        %4013 = vst.msk [vmem:[%s159 + $0x768] sm:$0xff] %vm3775, %v3756
        %4014 = vst.msk [vmem:[%s159 + $0x770] sm:$0xff] %vm3775, %v3757
        %4015 = vst.msk [vmem:[%s159 + $0x778] sm:$0xff] %vm3775, %v3758
        %4016 = vst.msk [vmem:[%s159 + $0x780] sm:$0xff] %vm3775, %v3759
        %4017 = vst.msk [vmem:[%s159 + $0x788] sm:$0xff] %vm3775, %v3760
        %4018 = vst.msk [vmem:[%s159 + $0x790] sm:$0xff] %vm3775, %v3761
        %4019 = vst.msk [vmem:[%s159 + $0x798] sm:$0xff] %vm3775, %v3762
        %4020 = vst.msk [vmem:[%s159 + $0x7a0] sm:$0xff] %vm3775, %v3763
        %4021 = vst.msk [vmem:[%s159 + $0x7a8] sm:$0xff] %vm3775, %v3764
        %4022 = vst.msk [vmem:[%s159 + $0x7b0] sm:$0xff] %vm3775, %v3765
        %4023 = vst.msk [vmem:[%s159 + $0x7b8] sm:$0xff] %vm3775, %v3766
        %4024 = vst.msk [vmem:[%s159 + $0x7c0] sm:$0xff] %vm3775, %v3767
        %4025 = vst.msk [vmem:[%s159 + $0x7c8] sm:$0xff] %vm3775, %v3768
        %4026 = vst.msk [vmem:[%s159 + $0x7d0] sm:$0xff] %vm3775, %v3769
        %4027 = vst.msk [vmem:[%s159 + $0x7d8] sm:$0xff] %vm3775, %v3770
        %4028 = vst.msk [vmem:[%s159 + $0x7e0] sm:$0xff] %vm3775, %v3771
        %4029 = vst.msk [vmem:[%s159 + $0x7e8] sm:$0xff] %vm3775, %v3772
        %4030 = vst.msk [vmem:[%s159 + $0x7f0] sm:$0xff] %vm3775, %v3773
        %4031 = vst.msk [vmem:[%s159 + $0x7f8] sm:$0xff] %vm3775, %v3774
        %s4032 = smul.u32 256, %s14
        %p4033 = scmp.lt.s32.totalorder %s4032, 511
        %s4034 = scalar_select %p4033, %s4032, 511
        %s4035 = smul.addr %s4034, 8
        %s4036 = scalar_lea.vmem %s2, %s4035
        // Predicated region
        $region33: #{tpu_custom_call.1} parent=27 // pred_check
          %p4037 = pneg %p79
        $region34: #{tpu_custom_call.1} parent=27 // pred_check_branch
          %4039 = sbr.rel (%p4037) target = $region36
        $region35: #{tpu_custom_call.1} parent=27 // pred_region
          %s4040 = smul.u32 256, %s14
        $region36: #{tpu_custom_call.1} parent=27 // pred_fallthru
          _
      $region28: #{tpu_custom_call.1} parent=5 // pred_fallthru
        _
      %p4041 = scmp.le.s32.totalorder 2, %s9
      // Predicated region
      $region37: #{tpu_custom_call.1} parent=5 // pred_check
        %p4042 = pneg %p4041
      $region38: #{tpu_custom_call.1} parent=5 // pred_check_branch
        %4044 = sbr.rel (%p4042) target = $region40
      $region39: #{tpu_custom_call.1} parent=5 // pred_region
        %s4045 = ssub.s32 %s9, 2
        // Predicated region
        $region41: #{tpu_custom_call.1} parent=39 // pred_check
          %p4046 = pneg %p85
        $region42: #{tpu_custom_call.1} parent=39 // pred_check_branch
          %4048 = sbr.rel (%p4046) target = $region44
        $region43: #{tpu_custom_call.1} parent=39 // pred_region
          %s4049 = smul.u32 256, %s15
          %p4050 = scmp.lt.s32.totalorder %s4049, 511
          %s4051 = scalar_select %p4050, %s4049, 511
          %s4052 = smul.addr %s4051, 8
          %s4053 = scalar_lea.vmem %s2, %s4052
        $region44: #{tpu_custom_call.1} parent=39 // pred_fallthru
          _
      $region40: #{tpu_custom_call.1} parent=5 // pred_fallthru
        _
    $region6: #{tpu_custom_call.1} parent=1 // loop_footer
      %s13 = sadd.s32 1, %s9
    $region7: #{tpu_custom_call.1} parent=1 // loop_footer_branch
      %8 = sbr.rel target = $region3
    $region8: #{tpu_custom_call.1} parent=1 // loop_exit
      _
    %4054 = vsyncpa [#allocation3], 1
    %s4055 = scalar_lea.sflag [#allocation3], 1
    %4056 = vsyncpa %s4055, 1

</llo_original>
